<compile_context>
chip_gen: v5e
topology: v5e:2x2
jax: 0.10.0
libtpu: 0.0.40
codegen_flags: <defaults>
</compile_context>

<pallas_src>
import functools

import jax
import jax.numpy as jnp
from jax.experimental import pallas as pl
from jax.experimental.pallas import tpu as pltpu

IMG = 28        # GENEO_3 hardcodes a 28x28 grid, so the image must be 28x28.
BLK = 32        # sublane-aligned row block used to stack the K feature maps
SLOT = 32       # lane slot width per image (28 data lanes + 4 pad lanes)
GRP_LANES = 128 # L1 stage works one 128-lane group (= 4 images) at a time


# ----------------------------- Pallas kernel --------------------------------
def _geneo_kernel(pat_ref, stk_ref, m_ref, out_ref, fstk_ref, *, K, Hp, Wp, TB):
    """pat_ref:  (K, P) f32 in SMEM.
    stk_ref:  (1, Wp, Hpad, TB*SLOT) padded images, column-pre-shifted per dj,
              lane-stacked into 32-lane slots per image.
    m_ref:    (IMG, K*BLK) fused GENEO_3 matrix (+ identity block for F[K-1]).
    out_ref:  (1, 1, TB) per-image scalars, lane-packed.
    fstk_ref: (K*BLK, TB*SLOT) f32 VMEM scratch (stacked feature maps)."""
    P = Hp * Wp
    inv_p = 1.0 / float(P)
    inv_k = 1.0 / float(K)
    lanes = TB * SLOT
    n_grp = lanes // GRP_LANES

    # Zero ONLY the (BLK - IMG) pad rows of every block: the matching big_m
    # columns are zero, but stale NaN/Inf * 0 would still poison the matmul.
    # Do NOT turn this into pl.when(program_id == 0): with megacore on v7x the
    # second TensorCore never executes program_id 0.
    zero_rows = jnp.zeros((BLK - IMG, lanes), jnp.float32)
    for k in range(K):
        fstk_ref[k * BLK + IMG:(k + 1) * BLK, :] = zero_rows

    # GENEO_1_optimized: F[k] = 1 - mean_p |pattern[k, p] - window_p|.
    # One 128-lane group (4 images) at a time; outer loop over the Hp*Wp
    # shifted slabs, inner loop over K accumulators.
    for g in range(n_grp):
        lo = g * GRP_LANES
        accs = [None] * K
        for di in range(Hp):
            for dj in range(Wp):
                slab = stk_ref[0, dj, di:di + IMG, lo:lo + GRP_LANES]
                p = di * Wp + dj
                for k in range(K):
                    d = jnp.abs(slab - pat_ref[k, p])
                    accs[k] = d if p == 0 else accs[k] + d
        for k in range(K):
            fstk_ref[k * BLK:k * BLK + IMG, lo:lo + GRP_LANES] = (
                1.0 - accs[k] * inv_p)

    # GENEO_3 (weighted clipped row-shifts of F[0..n_vec-1]) plus the trailing
    # "+ F[K-1]" term, for all TB images at once, as ONE MXU matmul; then /K.
    t = jnp.dot(m_ref[...], fstk_ref[...],
                preferred_element_type=jnp.float32) * inv_k      # (IMG, TB*SLOT)

    # forward tail per image: dot(softmax(10 * T.flatten()), T.flatten()).
    lane = jax.lax.broadcasted_iota(jnp.int32, (1, TB), 1)
    row = jnp.zeros((1, TB), jnp.float32)
    for b in range(TB):
        tb_img = t[:, b * SLOT:b * SLOT + IMG]                   # (IMG, IMG)
        t10 = tb_img * 10.0
        e = jnp.exp(t10 - jnp.max(t10))
        res = jnp.sum(e * tb_img) / jnp.sum(e)
        row = jnp.where(lane == b, res, row)
    out_ref[...] = row.reshape(1, 1, TB).astype(out_ref.dtype)


# ------------------------------- JAX glue ------------------------------------
def _shift_matrices(vectors, size=IMG):
    """(n_vec, size, size) matrices M_k so that M_k @ F[k] reproduces GENEO_3's
    chained indexing functions[k][0][clip(i-s_x)][clip(j-s_y)]."""
    # TODO(synk): `clip` is undefined in the reference source; assumed to be a
    # clamp of the index into [0, size-1].
    a = jnp.arange(size)
    b = jnp.arange(size)
    mats = []
    for k in range(vectors.shape[0]):
        vx = jnp.floor(vectors[k, 0]).astype(jnp.int32)
        vy = jnp.floor(vectors[k, 1]).astype(jnp.int32)
        px = vectors[k, 0] - jnp.floor(vectors[k, 0])
        py = vectors[k, 1] - jnp.floor(vectors[k, 1])
        mk = jnp.zeros((size, size), jnp.float32)
        for sx, sy, w in ((vx, vy, px * py),
                          (vx, vy + 1, px * (1.0 - py)),
                          (vx + 1, vy, (1.0 - px) * py),
                          (vx + 1, vy + 1, (1.0 - px) * (1.0 - py))):
            # chained indexing => rows only: row r reads row clip(clip(r-sy)-sx)
            idx = jnp.clip(jnp.clip(a - sy, 0, size - 1) - sx, 0, size - 1)
            onehot = (idx[:, None] == b[None, :]).astype(jnp.float32)
            mk = mk + w * onehot
        mats.append(mk)
    return jnp.stack(mats, axis=0)


def _fused_geneo3_matrix(vectors, K, size=IMG, blk=BLK):
    """(size, K*blk) matrix: the n_vec shift matrices plus an identity block for
    the final `+ F[K-1]` term, each zero-padded to blk columns so the kernel can
    stack feature maps at sublane-aligned (multiple-of-8) rows."""
    mats = _shift_matrices(vectors, size)
    n_vec = vectors.shape[0]
    pad = jnp.zeros((size, blk - size), jnp.float32)
    cols = []
    for k in range(K):
        mk = mats[k] if k < n_vec else jnp.eye(size, dtype=jnp.float32)
        cols.append(jnp.concatenate([mk, pad], axis=1))
    return jnp.concatenate(cols, axis=1)


@functools.partial(jax.jit, static_argnames=("tb",))
def geneo_forward(patterns, vectors, x, tb=8):
    """x: (B, 1, 28, 28) NCHW batch; returns (B,) per-image GENEO outputs."""
    # TODO(synk): `treshold` is stored by GENEO.__init__ and passed in forward,
    # but GENEO_1_optimized only takes (patterns, image), so it has no effect.
    K, _, Hp, Wp = patterns.shape
    P = Hp * Wp
    B = x.shape[0]
    ph, pw = Hp // 2, Wp // 2
    Hpad = IMG + 2 * ph

    assert tb >= 4 and tb % 4 == 0, "tb must be a multiple of 4 (128-lane groups)"
    S = pl.cdiv(B, tb)
    Bpad = S * tb

    pat2d = patterns.reshape(K, P).astype(jnp.float32)                  # (K, P)
    img = x[:, 0].astype(jnp.float32)
    if Bpad > B:
        img = jnp.pad(img, ((0, Bpad - B), (0, 0), (0, 0)))
    padded = jnp.pad(img, ((0, 0), (ph, ph), (pw, pw)))                 # (Bpad, Hpad, Wpad)

    # Lane-stacked, column-pre-shifted layout (wrapper-side layout plumbing):
    #   stk[s, dj, h, b*SLOT + c] = padded[s*tb + b, h, dj + c]   for c < IMG
    cols = []
    for dj in range(Wp):
        sl = padded[:, :, dj:dj + IMG]                                  # (Bpad, Hpad, IMG)
        cols.append(jnp.pad(sl, ((0, 0), (0, 0), (0, SLOT - IMG))))     # -> SLOT lanes
    stk = jnp.stack(cols, axis=1)                                       # (Bpad, Wp, Hpad, SLOT)
    stk = stk.reshape(S, tb, Wp, Hpad, SLOT)
    stk = jnp.transpose(stk, (0, 2, 3, 1, 4)).reshape(S, Wp, Hpad, tb * SLOT)

    big_m = _fused_geneo3_matrix(vectors.astype(jnp.float32), K)        # (IMG, K*BLK)

    kernel = functools.partial(_geneo_kernel, K=K, Hp=Hp, Wp=Wp, TB=tb)
    out = pl.pallas_call(
        kernel,
        grid=(S,),
        out_shape=jax.ShapeDtypeStruct((S, 1, tb), jnp.float32),
        in_specs=[
            pl.BlockSpec(memory_space=pltpu.MemorySpace.SMEM),          # patterns (scalars)
            pl.BlockSpec((1, Wp, Hpad, tb * SLOT), lambda s: (s, 0, 0, 0)),
            pl.BlockSpec((IMG, K * BLK), lambda s: (0, 0)),             # fused GENEO_3 matrix
        ],
        out_specs=pl.BlockSpec((1, 1, tb), lambda s: (s, 0, 0)),
        scratch_shapes=[pltpu.VMEM((K * BLK, tb * SLOT), jnp.float32)],
        compiler_params=pltpu.CompilerParams(
            dimension_semantics=("parallel",)),
    )(pat2d, stk, big_m)
    return out.reshape(Bpad)[:B]


# ------------------------- pure-JAX reference --------------------------------
def _extract_windows(img, Hp, Wp):
    """Reference-only: img (H, W) -> (H_out, W_out, Hp*Wp) patches."""
    pad_h, pad_w = Hp // 2, Wp // 2
    H, W = img.shape
    padded = jnp.pad(img, ((pad_h, pad_h), (pad_w, pad_w)))
    H_out = H + 2 * pad_h - Hp + 1
    W_out = W + 2 * pad_w - Wp + 1
    slabs = [padded[di:di + H_out, dj:dj + W_out]
             for di in range(Hp) for dj in range(Wp)]   # row-major patch order
    return jnp.stack(slabs, axis=-1)


def reference_forward(patterns, vectors, x):
    K, _, Hp, Wp = patterns.shape
    wins = _extract_windows(x[0, 0], Hp, Wp)                      # (28, 28, P)
    pat = patterns.reshape(K, Hp * Wp)
    F = 1.0 - jnp.mean(jnp.abs(pat[:, None, None, :] - wins[None]), axis=-1)

    size = IMG
    a = jnp.arange(size)
    out = F[K - 1]
    for k in range(vectors.shape[0]):
        vx = jnp.floor(vectors[k, 0]).astype(jnp.int32)
        vy = jnp.floor(vectors[k, 1]).astype(jnp.int32)
        px = vectors[k, 0] - jnp.floor(vectors[k, 0])
        py = vectors[k, 1] - jnp.floor(vectors[k, 1])
        for sx, sy, w in ((vx, vy, px * py),
                          (vx, vy + 1, px * (1.0 - py)),
                          (vx + 1, vy, (1.0 - px) * py),
                          (vx + 1, vy + 1, (1.0 - px) * (1.0 - py))):
            idx = jnp.clip(jnp.clip(a - sy, 0, size - 1) - sx, 0, size - 1)
            out = out + w * F[k][idx, :]
    t = (out / K).reshape(-1)
    return jnp.dot(jax.nn.softmax(t * 10.0), t)


# --------------------------------- main ---------------------------------------
if __name__ == "__main__":
    key = jax.random.PRNGKey(0)
    k1, k2, k3 = jax.random.split(key, 3)

    K, Hp, Wp = 4, 3, 3
    B, TB = 16, 8                                                     # 2 grid steps
    patterns = jax.random.uniform(k1, (K, 1, Hp, Wp), jnp.float32)    # like torch.rand
    vectors = jax.random.uniform(k2, (K - 1, 2), jnp.float32) * 27.0  # torch.rand(2)*27
    x = jax.random.uniform(k3, (B, 1, IMG, IMG), jnp.float32)         # NCHW batch

    out = jax.block_until_ready(geneo_forward(patterns, vectors, x, tb=TB))

    ref_fn = jax.jit(reference_forward)
    ref = jnp.stack([ref_fn(patterns, vectors, x[b:b + 1]) for b in range(B)])
    assert out.shape == (B,)
    # 5e-4: leaves headroom for MXU f32 pass rounding while still catching any
    # layout / batch-slot mapping bug (cross-image deltas are ~1e-2).
    assert jnp.max(jnp.abs(out - ref)) < 5e-4, (out, ref)
    print("KERNEL_OK")
</pallas_src>

<mosaic_0001>
module attributes {stable_mosaic.version = 11 : i64} {
  func.func @_geneo_kernel(%arg0: i32, %arg1: memref<4x9xf32, #tpu.memory_space<smem>>, %arg2: memref<1x3x30x256xf32, #tpu.memory_space<vmem>>, %arg3: memref<28x128xf32, #tpu.memory_space<vmem>>, %arg4: memref<1x1x8xf32, #tpu.memory_space<vmem>>, %arg5: memref<128x256xf32, #tpu.memory_space<vmem>>) attributes {dimension_semantics = [#tpu.dimension_semantics<parallel>], iteration_bounds = array<i64: 2>, scalar_prefetch = 0 : i64, scratch_operands = 1 : i64, tpu.core_type = #tpu.core_type<tc>, window_params = [{transform_indices = @transform_0, window_bounds = array<i64: 4, 9>}, {transform_indices = @transform_1, window_bounds = array<i64: 1, 3, 30, 256>}, {pipeline_mode = #tpu.pipeline_mode<synchronous>, transform_indices = @transform_2, window_bounds = array<i64: 28, 128>}, {transform_indices = @transform_3, window_bounds = array<i64: 1, 1, 8>}]} {
    %cst = arith.constant 0.000000e+00 : f32
    %0 = vector.broadcast %cst : f32 to vector<4x256xf32>
    %c28 = arith.constant 28 : index
    %c0 = arith.constant 0 : index
    %1 = vector.load %arg5[%c28, %c0] : memref<128x256xf32, #tpu.memory_space<vmem>>, vector<4x256xf32>
    tpu.vector_store %arg5[%c28, %c0], %0 {strides = array<i32>} : memref<128x256xf32, #tpu.memory_space<vmem>>, vector<4x256xf32>,
    %c60 = arith.constant 60 : index
    %c0_0 = arith.constant 0 : index
    %2 = vector.load %arg5[%c60, %c0_0] : memref<128x256xf32, #tpu.memory_space<vmem>>, vector<4x256xf32>
    tpu.vector_store %arg5[%c60, %c0_0], %0 {strides = array<i32>} : memref<128x256xf32, #tpu.memory_space<vmem>>, vector<4x256xf32>,
    %c92 = arith.constant 92 : index
    %c0_1 = arith.constant 0 : index
    %3 = vector.load %arg5[%c92, %c0_1] : memref<128x256xf32, #tpu.memory_space<vmem>>, vector<4x256xf32>
    tpu.vector_store %arg5[%c92, %c0_1], %0 {strides = array<i32>} : memref<128x256xf32, #tpu.memory_space<vmem>>, vector<4x256xf32>,
    %c124 = arith.constant 124 : index
    %c0_2 = arith.constant 0 : index
    %4 = vector.load %arg5[%c124, %c0_2] : memref<128x256xf32, #tpu.memory_space<vmem>>, vector<4x256xf32>
    tpu.vector_store %arg5[%c124, %c0_2], %0 {strides = array<i32>} : memref<128x256xf32, #tpu.memory_space<vmem>>, vector<4x256xf32>,
    %c0_3 = arith.constant 0 : index
    %c0_4 = arith.constant 0 : index
    %c0_5 = arith.constant 0 : index
    %c0_6 = arith.constant 0 : index
    %5 = vector.load %arg2[%c0_3, %c0_4, %c0_5, %c0_6] : memref<1x3x30x256xf32, #tpu.memory_space<vmem>>, vector<1x1x28x128xf32>
    %6 = vector.shape_cast %5 : vector<1x1x28x128xf32> to vector<28x128xf32>
    %c0_7 = arith.constant 0 : index
    %c0_8 = arith.constant 0 : index
    %7 = memref.load %arg1[%c0_7, %c0_8] : memref<4x9xf32, #tpu.memory_space<smem>>
    %8 = vector.broadcast %7 : f32 to vector<28x128xf32>
    %9 = arith.subf %6, %8 : vector<28x128xf32>
    %10 = math.absf %9 : vector<28x128xf32>
    %c1 = arith.constant 1 : index
    %c0_9 = arith.constant 0 : index
    %11 = memref.load %arg1[%c1, %c0_9] : memref<4x9xf32, #tpu.memory_space<smem>>
    %12 = vector.broadcast %11 : f32 to vector<28x128xf32>
    %13 = arith.subf %6, %12 : vector<28x128xf32>
    %14 = math.absf %13 : vector<28x128xf32>
    %c2 = arith.constant 2 : index
    %c0_10 = arith.constant 0 : index
    %15 = memref.load %arg1[%c2, %c0_10] : memref<4x9xf32, #tpu.memory_space<smem>>
    %16 = vector.broadcast %15 : f32 to vector<28x128xf32>
    %17 = arith.subf %6, %16 : vector<28x128xf32>
    %18 = math.absf %17 : vector<28x128xf32>
    %c3 = arith.constant 3 : index
    %c0_11 = arith.constant 0 : index
    %19 = memref.load %arg1[%c3, %c0_11] : memref<4x9xf32, #tpu.memory_space<smem>>
    %20 = vector.broadcast %19 : f32 to vector<28x128xf32>
    %21 = arith.subf %6, %20 : vector<28x128xf32>
    %22 = math.absf %21 : vector<28x128xf32>
    %c0_12 = arith.constant 0 : index
    %c1_13 = arith.constant 1 : index
    %c0_14 = arith.constant 0 : index
    %c0_15 = arith.constant 0 : index
    %23 = vector.load %arg2[%c0_12, %c1_13, %c0_14, %c0_15] : memref<1x3x30x256xf32, #tpu.memory_space<vmem>>, vector<1x1x28x128xf32>
    %24 = vector.shape_cast %23 : vector<1x1x28x128xf32> to vector<28x128xf32>
    %c0_16 = arith.constant 0 : index
    %c1_17 = arith.constant 1 : index
    %25 = memref.load %arg1[%c0_16, %c1_17] : memref<4x9xf32, #tpu.memory_space<smem>>
    %26 = vector.broadcast %25 : f32 to vector<28x128xf32>
    %27 = arith.subf %24, %26 : vector<28x128xf32>
    %28 = math.absf %27 : vector<28x128xf32>
    %29 = arith.addf %10, %28 : vector<28x128xf32>
    %c1_18 = arith.constant 1 : index
    %c1_19 = arith.constant 1 : index
    %30 = memref.load %arg1[%c1_18, %c1_19] : memref<4x9xf32, #tpu.memory_space<smem>>
    %31 = vector.broadcast %30 : f32 to vector<28x128xf32>
    %32 = arith.subf %24, %31 : vector<28x128xf32>
    %33 = math.absf %32 : vector<28x128xf32>
    %34 = arith.addf %14, %33 : vector<28x128xf32>
    %c2_20 = arith.constant 2 : index
    %c1_21 = arith.constant 1 : index
    %35 = memref.load %arg1[%c2_20, %c1_21] : memref<4x9xf32, #tpu.memory_space<smem>>
    %36 = vector.broadcast %35 : f32 to vector<28x128xf32>
    %37 = arith.subf %24, %36 : vector<28x128xf32>
    %38 = math.absf %37 : vector<28x128xf32>
    %39 = arith.addf %18, %38 : vector<28x128xf32>
    %c3_22 = arith.constant 3 : index
    %c1_23 = arith.constant 1 : index
    %40 = memref.load %arg1[%c3_22, %c1_23] : memref<4x9xf32, #tpu.memory_space<smem>>
    %41 = vector.broadcast %40 : f32 to vector<28x128xf32>
    %42 = arith.subf %24, %41 : vector<28x128xf32>
    %43 = math.absf %42 : vector<28x128xf32>
    %44 = arith.addf %22, %43 : vector<28x128xf32>
    %c0_24 = arith.constant 0 : index
    %c2_25 = arith.constant 2 : index
    %c0_26 = arith.constant 0 : index
    %c0_27 = arith.constant 0 : index
    %45 = vector.load %arg2[%c0_24, %c2_25, %c0_26, %c0_27] : memref<1x3x30x256xf32, #tpu.memory_space<vmem>>, vector<1x1x28x128xf32>
    %46 = vector.shape_cast %45 : vector<1x1x28x128xf32> to vector<28x128xf32>
    %c0_28 = arith.constant 0 : index
    %c2_29 = arith.constant 2 : index
    %47 = memref.load %arg1[%c0_28, %c2_29] : memref<4x9xf32, #tpu.memory_space<smem>>
    %48 = vector.broadcast %47 : f32 to vector<28x128xf32>
    %49 = arith.subf %46, %48 : vector<28x128xf32>
    %50 = math.absf %49 : vector<28x128xf32>
    %51 = arith.addf %29, %50 : vector<28x128xf32>
    %c1_30 = arith.constant 1 : index
    %c2_31 = arith.constant 2 : index
    %52 = memref.load %arg1[%c1_30, %c2_31] : memref<4x9xf32, #tpu.memory_space<smem>>
    %53 = vector.broadcast %52 : f32 to vector<28x128xf32>
    %54 = arith.subf %46, %53 : vector<28x128xf32>
    %55 = math.absf %54 : vector<28x128xf32>
    %56 = arith.addf %34, %55 : vector<28x128xf32>
    %c2_32 = arith.constant 2 : index
    %c2_33 = arith.constant 2 : index
    %57 = memref.load %arg1[%c2_32, %c2_33] : memref<4x9xf32, #tpu.memory_space<smem>>
    %58 = vector.broadcast %57 : f32 to vector<28x128xf32>
    %59 = arith.subf %46, %58 : vector<28x128xf32>
    %60 = math.absf %59 : vector<28x128xf32>
    %61 = arith.addf %39, %60 : vector<28x128xf32>
    %c3_34 = arith.constant 3 : index
    %c2_35 = arith.constant 2 : index
    %62 = memref.load %arg1[%c3_34, %c2_35] : memref<4x9xf32, #tpu.memory_space<smem>>
    %63 = vector.broadcast %62 : f32 to vector<28x128xf32>
    %64 = arith.subf %46, %63 : vector<28x128xf32>
    %65 = math.absf %64 : vector<28x128xf32>
    %66 = arith.addf %44, %65 : vector<28x128xf32>
    %c0_36 = arith.constant 0 : index
    %c0_37 = arith.constant 0 : index
    %c1_38 = arith.constant 1 : index
    %c0_39 = arith.constant 0 : index
    %67 = vector.load %arg2[%c0_36, %c0_37, %c1_38, %c0_39] : memref<1x3x30x256xf32, #tpu.memory_space<vmem>>, vector<1x1x28x128xf32>
    %68 = vector.shape_cast %67 : vector<1x1x28x128xf32> to vector<28x128xf32>
    %c0_40 = arith.constant 0 : index
    %c3_41 = arith.constant 3 : index
    %69 = memref.load %arg1[%c0_40, %c3_41] : memref<4x9xf32, #tpu.memory_space<smem>>
    %70 = vector.broadcast %69 : f32 to vector<28x128xf32>
    %71 = arith.subf %68, %70 : vector<28x128xf32>
    %72 = math.absf %71 : vector<28x128xf32>
    %73 = arith.addf %51, %72 : vector<28x128xf32>
    %c1_42 = arith.constant 1 : index
    %c3_43 = arith.constant 3 : index
    %74 = memref.load %arg1[%c1_42, %c3_43] : memref<4x9xf32, #tpu.memory_space<smem>>
    %75 = vector.broadcast %74 : f32 to vector<28x128xf32>
    %76 = arith.subf %68, %75 : vector<28x128xf32>
    %77 = math.absf %76 : vector<28x128xf32>
    %78 = arith.addf %56, %77 : vector<28x128xf32>
    %c2_44 = arith.constant 2 : index
    %c3_45 = arith.constant 3 : index
    %79 = memref.load %arg1[%c2_44, %c3_45] : memref<4x9xf32, #tpu.memory_space<smem>>
    %80 = vector.broadcast %79 : f32 to vector<28x128xf32>
    %81 = arith.subf %68, %80 : vector<28x128xf32>
    %82 = math.absf %81 : vector<28x128xf32>
    %83 = arith.addf %61, %82 : vector<28x128xf32>
    %c3_46 = arith.constant 3 : index
    %c3_47 = arith.constant 3 : index
    %84 = memref.load %arg1[%c3_46, %c3_47] : memref<4x9xf32, #tpu.memory_space<smem>>
    %85 = vector.broadcast %84 : f32 to vector<28x128xf32>
    %86 = arith.subf %68, %85 : vector<28x128xf32>
    %87 = math.absf %86 : vector<28x128xf32>
    %88 = arith.addf %66, %87 : vector<28x128xf32>
    %c0_48 = arith.constant 0 : index
    %c1_49 = arith.constant 1 : index
    %c1_50 = arith.constant 1 : index
    %c0_51 = arith.constant 0 : index
    %89 = vector.load %arg2[%c0_48, %c1_49, %c1_50, %c0_51] : memref<1x3x30x256xf32, #tpu.memory_space<vmem>>, vector<1x1x28x128xf32>
    %90 = vector.shape_cast %89 : vector<1x1x28x128xf32> to vector<28x128xf32>
    %c0_52 = arith.constant 0 : index
    %c4 = arith.constant 4 : index
    %91 = memref.load %arg1[%c0_52, %c4] : memref<4x9xf32, #tpu.memory_space<smem>>
    %92 = vector.broadcast %91 : f32 to vector<28x128xf32>
    %93 = arith.subf %90, %92 : vector<28x128xf32>
    %94 = math.absf %93 : vector<28x128xf32>
    %95 = arith.addf %73, %94 : vector<28x128xf32>
    %c1_53 = arith.constant 1 : index
    %c4_54 = arith.constant 4 : index
    %96 = memref.load %arg1[%c1_53, %c4_54] : memref<4x9xf32, #tpu.memory_space<smem>>
    %97 = vector.broadcast %96 : f32 to vector<28x128xf32>
    %98 = arith.subf %90, %97 : vector<28x128xf32>
    %99 = math.absf %98 : vector<28x128xf32>
    %100 = arith.addf %78, %99 : vector<28x128xf32>
    %c2_55 = arith.constant 2 : index
    %c4_56 = arith.constant 4 : index
    %101 = memref.load %arg1[%c2_55, %c4_56] : memref<4x9xf32, #tpu.memory_space<smem>>
    %102 = vector.broadcast %101 : f32 to vector<28x128xf32>
    %103 = arith.subf %90, %102 : vector<28x128xf32>
    %104 = math.absf %103 : vector<28x128xf32>
    %105 = arith.addf %83, %104 : vector<28x128xf32>
    %c3_57 = arith.constant 3 : index
    %c4_58 = arith.constant 4 : index
    %106 = memref.load %arg1[%c3_57, %c4_58] : memref<4x9xf32, #tpu.memory_space<smem>>
    %107 = vector.broadcast %106 : f32 to vector<28x128xf32>
    %108 = arith.subf %90, %107 : vector<28x128xf32>
    %109 = math.absf %108 : vector<28x128xf32>
    %110 = arith.addf %88, %109 : vector<28x128xf32>
    %c0_59 = arith.constant 0 : index
    %c2_60 = arith.constant 2 : index
    %c1_61 = arith.constant 1 : index
    %c0_62 = arith.constant 0 : index
    %111 = vector.load %arg2[%c0_59, %c2_60, %c1_61, %c0_62] : memref<1x3x30x256xf32, #tpu.memory_space<vmem>>, vector<1x1x28x128xf32>
    %112 = vector.shape_cast %111 : vector<1x1x28x128xf32> to vector<28x128xf32>
    %c0_63 = arith.constant 0 : index
    %c5 = arith.constant 5 : index
    %113 = memref.load %arg1[%c0_63, %c5] : memref<4x9xf32, #tpu.memory_space<smem>>
    %114 = vector.broadcast %113 : f32 to vector<28x128xf32>
    %115 = arith.subf %112, %114 : vector<28x128xf32>
    %116 = math.absf %115 : vector<28x128xf32>
    %117 = arith.addf %95, %116 : vector<28x128xf32>
    %c1_64 = arith.constant 1 : index
    %c5_65 = arith.constant 5 : index
    %118 = memref.load %arg1[%c1_64, %c5_65] : memref<4x9xf32, #tpu.memory_space<smem>>
    %119 = vector.broadcast %118 : f32 to vector<28x128xf32>
    %120 = arith.subf %112, %119 : vector<28x128xf32>
    %121 = math.absf %120 : vector<28x128xf32>
    %122 = arith.addf %100, %121 : vector<28x128xf32>
    %c2_66 = arith.constant 2 : index
    %c5_67 = arith.constant 5 : index
    %123 = memref.load %arg1[%c2_66, %c5_67] : memref<4x9xf32, #tpu.memory_space<smem>>
    %124 = vector.broadcast %123 : f32 to vector<28x128xf32>
    %125 = arith.subf %112, %124 : vector<28x128xf32>
    %126 = math.absf %125 : vector<28x128xf32>
    %127 = arith.addf %105, %126 : vector<28x128xf32>
    %c3_68 = arith.constant 3 : index
    %c5_69 = arith.constant 5 : index
    %128 = memref.load %arg1[%c3_68, %c5_69] : memref<4x9xf32, #tpu.memory_space<smem>>
    %129 = vector.broadcast %128 : f32 to vector<28x128xf32>
    %130 = arith.subf %112, %129 : vector<28x128xf32>
    %131 = math.absf %130 : vector<28x128xf32>
    %132 = arith.addf %110, %131 : vector<28x128xf32>
    %c0_70 = arith.constant 0 : index
    %c0_71 = arith.constant 0 : index
    %c2_72 = arith.constant 2 : index
    %c0_73 = arith.constant 0 : index
    %133 = vector.load %arg2[%c0_70, %c0_71, %c2_72, %c0_73] : memref<1x3x30x256xf32, #tpu.memory_space<vmem>>, vector<1x1x28x128xf32>
    %134 = vector.shape_cast %133 : vector<1x1x28x128xf32> to vector<28x128xf32>
    %c0_74 = arith.constant 0 : index
    %c6 = arith.constant 6 : index
    %135 = memref.load %arg1[%c0_74, %c6] : memref<4x9xf32, #tpu.memory_space<smem>>
    %136 = vector.broadcast %135 : f32 to vector<28x128xf32>
    %137 = arith.subf %134, %136 : vector<28x128xf32>
    %138 = math.absf %137 : vector<28x128xf32>
    %139 = arith.addf %117, %138 : vector<28x128xf32>
    %c1_75 = arith.constant 1 : index
    %c6_76 = arith.constant 6 : index
    %140 = memref.load %arg1[%c1_75, %c6_76] : memref<4x9xf32, #tpu.memory_space<smem>>
    %141 = vector.broadcast %140 : f32 to vector<28x128xf32>
    %142 = arith.subf %134, %141 : vector<28x128xf32>
    %143 = math.absf %142 : vector<28x128xf32>
    %144 = arith.addf %122, %143 : vector<28x128xf32>
    %c2_77 = arith.constant 2 : index
    %c6_78 = arith.constant 6 : index
    %145 = memref.load %arg1[%c2_77, %c6_78] : memref<4x9xf32, #tpu.memory_space<smem>>
    %146 = vector.broadcast %145 : f32 to vector<28x128xf32>
    %147 = arith.subf %134, %146 : vector<28x128xf32>
    %148 = math.absf %147 : vector<28x128xf32>
    %149 = arith.addf %127, %148 : vector<28x128xf32>
    %c3_79 = arith.constant 3 : index
    %c6_80 = arith.constant 6 : index
    %150 = memref.load %arg1[%c3_79, %c6_80] : memref<4x9xf32, #tpu.memory_space<smem>>
    %151 = vector.broadcast %150 : f32 to vector<28x128xf32>
    %152 = arith.subf %134, %151 : vector<28x128xf32>
    %153 = math.absf %152 : vector<28x128xf32>
    %154 = arith.addf %132, %153 : vector<28x128xf32>
    %c0_81 = arith.constant 0 : index
    %c1_82 = arith.constant 1 : index
    %c2_83 = arith.constant 2 : index
    %c0_84 = arith.constant 0 : index
    %155 = vector.load %arg2[%c0_81, %c1_82, %c2_83, %c0_84] : memref<1x3x30x256xf32, #tpu.memory_space<vmem>>, vector<1x1x28x128xf32>
    %156 = vector.shape_cast %155 : vector<1x1x28x128xf32> to vector<28x128xf32>
    %c0_85 = arith.constant 0 : index
    %c7 = arith.constant 7 : index
    %157 = memref.load %arg1[%c0_85, %c7] : memref<4x9xf32, #tpu.memory_space<smem>>
    %158 = vector.broadcast %157 : f32 to vector<28x128xf32>
    %159 = arith.subf %156, %158 : vector<28x128xf32>
    %160 = math.absf %159 : vector<28x128xf32>
    %161 = arith.addf %139, %160 : vector<28x128xf32>
    %c1_86 = arith.constant 1 : index
    %c7_87 = arith.constant 7 : index
    %162 = memref.load %arg1[%c1_86, %c7_87] : memref<4x9xf32, #tpu.memory_space<smem>>
    %163 = vector.broadcast %162 : f32 to vector<28x128xf32>
    %164 = arith.subf %156, %163 : vector<28x128xf32>
    %165 = math.absf %164 : vector<28x128xf32>
    %166 = arith.addf %144, %165 : vector<28x128xf32>
    %c2_88 = arith.constant 2 : index
    %c7_89 = arith.constant 7 : index
    %167 = memref.load %arg1[%c2_88, %c7_89] : memref<4x9xf32, #tpu.memory_space<smem>>
    %168 = vector.broadcast %167 : f32 to vector<28x128xf32>
    %169 = arith.subf %156, %168 : vector<28x128xf32>
    %170 = math.absf %169 : vector<28x128xf32>
    %171 = arith.addf %149, %170 : vector<28x128xf32>
    %c3_90 = arith.constant 3 : index
    %c7_91 = arith.constant 7 : index
    %172 = memref.load %arg1[%c3_90, %c7_91] : memref<4x9xf32, #tpu.memory_space<smem>>
    %173 = vector.broadcast %172 : f32 to vector<28x128xf32>
    %174 = arith.subf %156, %173 : vector<28x128xf32>
    %175 = math.absf %174 : vector<28x128xf32>
    %176 = arith.addf %154, %175 : vector<28x128xf32>
    %c0_92 = arith.constant 0 : index
    %c2_93 = arith.constant 2 : index
    %c2_94 = arith.constant 2 : index
    %c0_95 = arith.constant 0 : index
    %177 = vector.load %arg2[%c0_92, %c2_93, %c2_94, %c0_95] : memref<1x3x30x256xf32, #tpu.memory_space<vmem>>, vector<1x1x28x128xf32>
    %178 = vector.shape_cast %177 : vector<1x1x28x128xf32> to vector<28x128xf32>
    %c0_96 = arith.constant 0 : index
    %c8 = arith.constant 8 : index
    %179 = memref.load %arg1[%c0_96, %c8] : memref<4x9xf32, #tpu.memory_space<smem>>
    %180 = vector.broadcast %179 : f32 to vector<28x128xf32>
    %181 = arith.subf %178, %180 : vector<28x128xf32>
    %182 = math.absf %181 : vector<28x128xf32>
    %183 = arith.addf %161, %182 : vector<28x128xf32>
    %c1_97 = arith.constant 1 : index
    %c8_98 = arith.constant 8 : index
    %184 = memref.load %arg1[%c1_97, %c8_98] : memref<4x9xf32, #tpu.memory_space<smem>>
    %185 = vector.broadcast %184 : f32 to vector<28x128xf32>
    %186 = arith.subf %178, %185 : vector<28x128xf32>
    %187 = math.absf %186 : vector<28x128xf32>
    %188 = arith.addf %166, %187 : vector<28x128xf32>
    %c2_99 = arith.constant 2 : index
    %c8_100 = arith.constant 8 : index
    %189 = memref.load %arg1[%c2_99, %c8_100] : memref<4x9xf32, #tpu.memory_space<smem>>
    %190 = vector.broadcast %189 : f32 to vector<28x128xf32>
    %191 = arith.subf %178, %190 : vector<28x128xf32>
    %192 = math.absf %191 : vector<28x128xf32>
    %193 = arith.addf %171, %192 : vector<28x128xf32>
    %c3_101 = arith.constant 3 : index
    %c8_102 = arith.constant 8 : index
    %194 = memref.load %arg1[%c3_101, %c8_102] : memref<4x9xf32, #tpu.memory_space<smem>>
    %195 = vector.broadcast %194 : f32 to vector<28x128xf32>
    %196 = arith.subf %178, %195 : vector<28x128xf32>
    %197 = math.absf %196 : vector<28x128xf32>
    %198 = arith.addf %176, %197 : vector<28x128xf32>
    %cst_103 = arith.constant 0.111111112 : f32
    %199 = vector.broadcast %cst_103 : f32 to vector<28x128xf32>
    %200 = arith.mulf %183, %199 : vector<28x128xf32>
    %cst_104 = arith.constant 1.000000e+00 : f32
    %201 = vector.broadcast %cst_104 : f32 to vector<28x128xf32>
    %202 = arith.subf %201, %200 : vector<28x128xf32>
    %c0_105 = arith.constant 0 : index
    %c0_106 = arith.constant 0 : index
    %203 = vector.load %arg5[%c0_105, %c0_106] : memref<128x256xf32, #tpu.memory_space<vmem>>, vector<28x128xf32>
    tpu.vector_store %arg5[%c0_105, %c0_106], %202 {strides = array<i32>} : memref<128x256xf32, #tpu.memory_space<vmem>>, vector<28x128xf32>,
    %cst_107 = arith.constant 0.111111112 : f32
    %204 = vector.broadcast %cst_107 : f32 to vector<28x128xf32>
    %205 = arith.mulf %188, %204 : vector<28x128xf32>
    %cst_108 = arith.constant 1.000000e+00 : f32
    %206 = vector.broadcast %cst_108 : f32 to vector<28x128xf32>
    %207 = arith.subf %206, %205 : vector<28x128xf32>
    %c32 = arith.constant 32 : index
    %c0_109 = arith.constant 0 : index
    %208 = vector.load %arg5[%c32, %c0_109] : memref<128x256xf32, #tpu.memory_space<vmem>>, vector<28x128xf32>
    tpu.vector_store %arg5[%c32, %c0_109], %207 {strides = array<i32>} : memref<128x256xf32, #tpu.memory_space<vmem>>, vector<28x128xf32>,
    %cst_110 = arith.constant 0.111111112 : f32
    %209 = vector.broadcast %cst_110 : f32 to vector<28x128xf32>
    %210 = arith.mulf %193, %209 : vector<28x128xf32>
    %cst_111 = arith.constant 1.000000e+00 : f32
    %211 = vector.broadcast %cst_111 : f32 to vector<28x128xf32>
    %212 = arith.subf %211, %210 : vector<28x128xf32>
    %c64 = arith.constant 64 : index
    %c0_112 = arith.constant 0 : index
    %213 = vector.load %arg5[%c64, %c0_112] : memref<128x256xf32, #tpu.memory_space<vmem>>, vector<28x128xf32>
    tpu.vector_store %arg5[%c64, %c0_112], %212 {strides = array<i32>} : memref<128x256xf32, #tpu.memory_space<vmem>>, vector<28x128xf32>,
    %cst_113 = arith.constant 0.111111112 : f32
    %214 = vector.broadcast %cst_113 : f32 to vector<28x128xf32>
    %215 = arith.mulf %198, %214 : vector<28x128xf32>
    %cst_114 = arith.constant 1.000000e+00 : f32
    %216 = vector.broadcast %cst_114 : f32 to vector<28x128xf32>
    %217 = arith.subf %216, %215 : vector<28x128xf32>
    %c96 = arith.constant 96 : index
    %c0_115 = arith.constant 0 : index
    %218 = vector.load %arg5[%c96, %c0_115] : memref<128x256xf32, #tpu.memory_space<vmem>>, vector<28x128xf32>
    tpu.vector_store %arg5[%c96, %c0_115], %217 {strides = array<i32>} : memref<128x256xf32, #tpu.memory_space<vmem>>, vector<28x128xf32>,
    %c0_116 = arith.constant 0 : index
    %c0_117 = arith.constant 0 : index
    %c0_118 = arith.constant 0 : index
    %c128 = arith.constant 128 : index
    %219 = vector.load %arg2[%c0_116, %c0_117, %c0_118, %c128] : memref<1x3x30x256xf32, #tpu.memory_space<vmem>>, vector<1x1x28x128xf32>
    %220 = vector.shape_cast %219 : vector<1x1x28x128xf32> to vector<28x128xf32>
    %c0_119 = arith.constant 0 : index
    %c0_120 = arith.constant 0 : index
    %221 = memref.load %arg1[%c0_119, %c0_120] : memref<4x9xf32, #tpu.memory_space<smem>>
    %222 = vector.broadcast %221 : f32 to vector<28x128xf32>
    %223 = arith.subf %220, %222 : vector<28x128xf32>
    %224 = math.absf %223 : vector<28x128xf32>
    %c1_121 = arith.constant 1 : index
    %c0_122 = arith.constant 0 : index
    %225 = memref.load %arg1[%c1_121, %c0_122] : memref<4x9xf32, #tpu.memory_space<smem>>
    %226 = vector.broadcast %225 : f32 to vector<28x128xf32>
    %227 = arith.subf %220, %226 : vector<28x128xf32>
    %228 = math.absf %227 : vector<28x128xf32>
    %c2_123 = arith.constant 2 : index
    %c0_124 = arith.constant 0 : index
    %229 = memref.load %arg1[%c2_123, %c0_124] : memref<4x9xf32, #tpu.memory_space<smem>>
    %230 = vector.broadcast %229 : f32 to vector<28x128xf32>
    %231 = arith.subf %220, %230 : vector<28x128xf32>
    %232 = math.absf %231 : vector<28x128xf32>
    %c3_125 = arith.constant 3 : index
    %c0_126 = arith.constant 0 : index
    %233 = memref.load %arg1[%c3_125, %c0_126] : memref<4x9xf32, #tpu.memory_space<smem>>
    %234 = vector.broadcast %233 : f32 to vector<28x128xf32>
    %235 = arith.subf %220, %234 : vector<28x128xf32>
    %236 = math.absf %235 : vector<28x128xf32>
    %c0_127 = arith.constant 0 : index
    %c1_128 = arith.constant 1 : index
    %c0_129 = arith.constant 0 : index
    %c128_130 = arith.constant 128 : index
    %237 = vector.load %arg2[%c0_127, %c1_128, %c0_129, %c128_130] : memref<1x3x30x256xf32, #tpu.memory_space<vmem>>, vector<1x1x28x128xf32>
    %238 = vector.shape_cast %237 : vector<1x1x28x128xf32> to vector<28x128xf32>
    %c0_131 = arith.constant 0 : index
    %c1_132 = arith.constant 1 : index
    %239 = memref.load %arg1[%c0_131, %c1_132] : memref<4x9xf32, #tpu.memory_space<smem>>
    %240 = vector.broadcast %239 : f32 to vector<28x128xf32>
    %241 = arith.subf %238, %240 : vector<28x128xf32>
    %242 = math.absf %241 : vector<28x128xf32>
    %243 = arith.addf %224, %242 : vector<28x128xf32>
    %c1_133 = arith.constant 1 : index
    %c1_134 = arith.constant 1 : index
    %244 = memref.load %arg1[%c1_133, %c1_134] : memref<4x9xf32, #tpu.memory_space<smem>>
    %245 = vector.broadcast %244 : f32 to vector<28x128xf32>
    %246 = arith.subf %238, %245 : vector<28x128xf32>
    %247 = math.absf %246 : vector<28x128xf32>
    %248 = arith.addf %228, %247 : vector<28x128xf32>
    %c2_135 = arith.constant 2 : index
    %c1_136 = arith.constant 1 : index
    %249 = memref.load %arg1[%c2_135, %c1_136] : memref<4x9xf32, #tpu.memory_space<smem>>
    %250 = vector.broadcast %249 : f32 to vector<28x128xf32>
    %251 = arith.subf %238, %250 : vector<28x128xf32>
    %252 = math.absf %251 : vector<28x128xf32>
    %253 = arith.addf %232, %252 : vector<28x128xf32>
    %c3_137 = arith.constant 3 : index
    %c1_138 = arith.constant 1 : index
    %254 = memref.load %arg1[%c3_137, %c1_138] : memref<4x9xf32, #tpu.memory_space<smem>>
    %255 = vector.broadcast %254 : f32 to vector<28x128xf32>
    %256 = arith.subf %238, %255 : vector<28x128xf32>
    %257 = math.absf %256 : vector<28x128xf32>
    %258 = arith.addf %236, %257 : vector<28x128xf32>
    %c0_139 = arith.constant 0 : index
    %c2_140 = arith.constant 2 : index
    %c0_141 = arith.constant 0 : index
    %c128_142 = arith.constant 128 : index
    %259 = vector.load %arg2[%c0_139, %c2_140, %c0_141, %c128_142] : memref<1x3x30x256xf32, #tpu.memory_space<vmem>>, vector<1x1x28x128xf32>
    %260 = vector.shape_cast %259 : vector<1x1x28x128xf32> to vector<28x128xf32>
    %c0_143 = arith.constant 0 : index
    %c2_144 = arith.constant 2 : index
    %261 = memref.load %arg1[%c0_143, %c2_144] : memref<4x9xf32, #tpu.memory_space<smem>>
    %262 = vector.broadcast %261 : f32 to vector<28x128xf32>
    %263 = arith.subf %260, %262 : vector<28x128xf32>
    %264 = math.absf %263 : vector<28x128xf32>
    %265 = arith.addf %243, %264 : vector<28x128xf32>
    %c1_145 = arith.constant 1 : index
    %c2_146 = arith.constant 2 : index
    %266 = memref.load %arg1[%c1_145, %c2_146] : memref<4x9xf32, #tpu.memory_space<smem>>
    %267 = vector.broadcast %266 : f32 to vector<28x128xf32>
    %268 = arith.subf %260, %267 : vector<28x128xf32>
    %269 = math.absf %268 : vector<28x128xf32>
    %270 = arith.addf %248, %269 : vector<28x128xf32>
    %c2_147 = arith.constant 2 : index
    %c2_148 = arith.constant 2 : index
    %271 = memref.load %arg1[%c2_147, %c2_148] : memref<4x9xf32, #tpu.memory_space<smem>>
    %272 = vector.broadcast %271 : f32 to vector<28x128xf32>
    %273 = arith.subf %260, %272 : vector<28x128xf32>
    %274 = math.absf %273 : vector<28x128xf32>
    %275 = arith.addf %253, %274 : vector<28x128xf32>
    %c3_149 = arith.constant 3 : index
    %c2_150 = arith.constant 2 : index
    %276 = memref.load %arg1[%c3_149, %c2_150] : memref<4x9xf32, #tpu.memory_space<smem>>
    %277 = vector.broadcast %276 : f32 to vector<28x128xf32>
    %278 = arith.subf %260, %277 : vector<28x128xf32>
    %279 = math.absf %278 : vector<28x128xf32>
    %280 = arith.addf %258, %279 : vector<28x128xf32>
    %c0_151 = arith.constant 0 : index
    %c0_152 = arith.constant 0 : index
    %c1_153 = arith.constant 1 : index
    %c128_154 = arith.constant 128 : index
    %281 = vector.load %arg2[%c0_151, %c0_152, %c1_153, %c128_154] : memref<1x3x30x256xf32, #tpu.memory_space<vmem>>, vector<1x1x28x128xf32>
    %282 = vector.shape_cast %281 : vector<1x1x28x128xf32> to vector<28x128xf32>
    %c0_155 = arith.constant 0 : index
    %c3_156 = arith.constant 3 : index
    %283 = memref.load %arg1[%c0_155, %c3_156] : memref<4x9xf32, #tpu.memory_space<smem>>
    %284 = vector.broadcast %283 : f32 to vector<28x128xf32>
    %285 = arith.subf %282, %284 : vector<28x128xf32>
    %286 = math.absf %285 : vector<28x128xf32>
    %287 = arith.addf %265, %286 : vector<28x128xf32>
    %c1_157 = arith.constant 1 : index
    %c3_158 = arith.constant 3 : index
    %288 = memref.load %arg1[%c1_157, %c3_158] : memref<4x9xf32, #tpu.memory_space<smem>>
    %289 = vector.broadcast %288 : f32 to vector<28x128xf32>
    %290 = arith.subf %282, %289 : vector<28x128xf32>
    %291 = math.absf %290 : vector<28x128xf32>
    %292 = arith.addf %270, %291 : vector<28x128xf32>
    %c2_159 = arith.constant 2 : index
    %c3_160 = arith.constant 3 : index
    %293 = memref.load %arg1[%c2_159, %c3_160] : memref<4x9xf32, #tpu.memory_space<smem>>
    %294 = vector.broadcast %293 : f32 to vector<28x128xf32>
    %295 = arith.subf %282, %294 : vector<28x128xf32>
    %296 = math.absf %295 : vector<28x128xf32>
    %297 = arith.addf %275, %296 : vector<28x128xf32>
    %c3_161 = arith.constant 3 : index
    %c3_162 = arith.constant 3 : index
    %298 = memref.load %arg1[%c3_161, %c3_162] : memref<4x9xf32, #tpu.memory_space<smem>>
    %299 = vector.broadcast %298 : f32 to vector<28x128xf32>
    %300 = arith.subf %282, %299 : vector<28x128xf32>
    %301 = math.absf %300 : vector<28x128xf32>
    %302 = arith.addf %280, %301 : vector<28x128xf32>
    %c0_163 = arith.constant 0 : index
    %c1_164 = arith.constant 1 : index
    %c1_165 = arith.constant 1 : index
    %c128_166 = arith.constant 128 : index
    %303 = vector.load %arg2[%c0_163, %c1_164, %c1_165, %c128_166] : memref<1x3x30x256xf32, #tpu.memory_space<vmem>>, vector<1x1x28x128xf32>
    %304 = vector.shape_cast %303 : vector<1x1x28x128xf32> to vector<28x128xf32>
    %c0_167 = arith.constant 0 : index
    %c4_168 = arith.constant 4 : index
    %305 = memref.load %arg1[%c0_167, %c4_168] : memref<4x9xf32, #tpu.memory_space<smem>>
    %306 = vector.broadcast %305 : f32 to vector<28x128xf32>
    %307 = arith.subf %304, %306 : vector<28x128xf32>
    %308 = math.absf %307 : vector<28x128xf32>
    %309 = arith.addf %287, %308 : vector<28x128xf32>
    %c1_169 = arith.constant 1 : index
    %c4_170 = arith.constant 4 : index
    %310 = memref.load %arg1[%c1_169, %c4_170] : memref<4x9xf32, #tpu.memory_space<smem>>
    %311 = vector.broadcast %310 : f32 to vector<28x128xf32>
    %312 = arith.subf %304, %311 : vector<28x128xf32>
    %313 = math.absf %312 : vector<28x128xf32>
    %314 = arith.addf %292, %313 : vector<28x128xf32>
    %c2_171 = arith.constant 2 : index
    %c4_172 = arith.constant 4 : index
    %315 = memref.load %arg1[%c2_171, %c4_172] : memref<4x9xf32, #tpu.memory_space<smem>>
    %316 = vector.broadcast %315 : f32 to vector<28x128xf32>
    %317 = arith.subf %304, %316 : vector<28x128xf32>
    %318 = math.absf %317 : vector<28x128xf32>
    %319 = arith.addf %297, %318 : vector<28x128xf32>
    %c3_173 = arith.constant 3 : index
    %c4_174 = arith.constant 4 : index
    %320 = memref.load %arg1[%c3_173, %c4_174] : memref<4x9xf32, #tpu.memory_space<smem>>
    %321 = vector.broadcast %320 : f32 to vector<28x128xf32>
    %322 = arith.subf %304, %321 : vector<28x128xf32>
    %323 = math.absf %322 : vector<28x128xf32>
    %324 = arith.addf %302, %323 : vector<28x128xf32>
    %c0_175 = arith.constant 0 : index
    %c2_176 = arith.constant 2 : index
    %c1_177 = arith.constant 1 : index
    %c128_178 = arith.constant 128 : index
    %325 = vector.load %arg2[%c0_175, %c2_176, %c1_177, %c128_178] : memref<1x3x30x256xf32, #tpu.memory_space<vmem>>, vector<1x1x28x128xf32>
    %326 = vector.shape_cast %325 : vector<1x1x28x128xf32> to vector<28x128xf32>
    %c0_179 = arith.constant 0 : index
    %c5_180 = arith.constant 5 : index
    %327 = memref.load %arg1[%c0_179, %c5_180] : memref<4x9xf32, #tpu.memory_space<smem>>
    %328 = vector.broadcast %327 : f32 to vector<28x128xf32>
    %329 = arith.subf %326, %328 : vector<28x128xf32>
    %330 = math.absf %329 : vector<28x128xf32>
    %331 = arith.addf %309, %330 : vector<28x128xf32>
    %c1_181 = arith.constant 1 : index
    %c5_182 = arith.constant 5 : index
    %332 = memref.load %arg1[%c1_181, %c5_182] : memref<4x9xf32, #tpu.memory_space<smem>>
    %333 = vector.broadcast %332 : f32 to vector<28x128xf32>
    %334 = arith.subf %326, %333 : vector<28x128xf32>
    %335 = math.absf %334 : vector<28x128xf32>
    %336 = arith.addf %314, %335 : vector<28x128xf32>
    %c2_183 = arith.constant 2 : index
    %c5_184 = arith.constant 5 : index
    %337 = memref.load %arg1[%c2_183, %c5_184] : memref<4x9xf32, #tpu.memory_space<smem>>
    %338 = vector.broadcast %337 : f32 to vector<28x128xf32>
    %339 = arith.subf %326, %338 : vector<28x128xf32>
    %340 = math.absf %339 : vector<28x128xf32>
    %341 = arith.addf %319, %340 : vector<28x128xf32>
    %c3_185 = arith.constant 3 : index
    %c5_186 = arith.constant 5 : index
    %342 = memref.load %arg1[%c3_185, %c5_186] : memref<4x9xf32, #tpu.memory_space<smem>>
    %343 = vector.broadcast %342 : f32 to vector<28x128xf32>
    %344 = arith.subf %326, %343 : vector<28x128xf32>
    %345 = math.absf %344 : vector<28x128xf32>
    %346 = arith.addf %324, %345 : vector<28x128xf32>
    %c0_187 = arith.constant 0 : index
    %c0_188 = arith.constant 0 : index
    %c2_189 = arith.constant 2 : index
    %c128_190 = arith.constant 128 : index
    %347 = vector.load %arg2[%c0_187, %c0_188, %c2_189, %c128_190] : memref<1x3x30x256xf32, #tpu.memory_space<vmem>>, vector<1x1x28x128xf32>
    %348 = vector.shape_cast %347 : vector<1x1x28x128xf32> to vector<28x128xf32>
    %c0_191 = arith.constant 0 : index
    %c6_192 = arith.constant 6 : index
    %349 = memref.load %arg1[%c0_191, %c6_192] : memref<4x9xf32, #tpu.memory_space<smem>>
    %350 = vector.broadcast %349 : f32 to vector<28x128xf32>
    %351 = arith.subf %348, %350 : vector<28x128xf32>
    %352 = math.absf %351 : vector<28x128xf32>
    %353 = arith.addf %331, %352 : vector<28x128xf32>
    %c1_193 = arith.constant 1 : index
    %c6_194 = arith.constant 6 : index
    %354 = memref.load %arg1[%c1_193, %c6_194] : memref<4x9xf32, #tpu.memory_space<smem>>
    %355 = vector.broadcast %354 : f32 to vector<28x128xf32>
    %356 = arith.subf %348, %355 : vector<28x128xf32>
    %357 = math.absf %356 : vector<28x128xf32>
    %358 = arith.addf %336, %357 : vector<28x128xf32>
    %c2_195 = arith.constant 2 : index
    %c6_196 = arith.constant 6 : index
    %359 = memref.load %arg1[%c2_195, %c6_196] : memref<4x9xf32, #tpu.memory_space<smem>>
    %360 = vector.broadcast %359 : f32 to vector<28x128xf32>
    %361 = arith.subf %348, %360 : vector<28x128xf32>
    %362 = math.absf %361 : vector<28x128xf32>
    %363 = arith.addf %341, %362 : vector<28x128xf32>
    %c3_197 = arith.constant 3 : index
    %c6_198 = arith.constant 6 : index
    %364 = memref.load %arg1[%c3_197, %c6_198] : memref<4x9xf32, #tpu.memory_space<smem>>
    %365 = vector.broadcast %364 : f32 to vector<28x128xf32>
    %366 = arith.subf %348, %365 : vector<28x128xf32>
    %367 = math.absf %366 : vector<28x128xf32>
    %368 = arith.addf %346, %367 : vector<28x128xf32>
    %c0_199 = arith.constant 0 : index
    %c1_200 = arith.constant 1 : index
    %c2_201 = arith.constant 2 : index
    %c128_202 = arith.constant 128 : index
    %369 = vector.load %arg2[%c0_199, %c1_200, %c2_201, %c128_202] : memref<1x3x30x256xf32, #tpu.memory_space<vmem>>, vector<1x1x28x128xf32>
    %370 = vector.shape_cast %369 : vector<1x1x28x128xf32> to vector<28x128xf32>
    %c0_203 = arith.constant 0 : index
    %c7_204 = arith.constant 7 : index
    %371 = memref.load %arg1[%c0_203, %c7_204] : memref<4x9xf32, #tpu.memory_space<smem>>
    %372 = vector.broadcast %371 : f32 to vector<28x128xf32>
    %373 = arith.subf %370, %372 : vector<28x128xf32>
    %374 = math.absf %373 : vector<28x128xf32>
    %375 = arith.addf %353, %374 : vector<28x128xf32>
    %c1_205 = arith.constant 1 : index
    %c7_206 = arith.constant 7 : index
    %376 = memref.load %arg1[%c1_205, %c7_206] : memref<4x9xf32, #tpu.memory_space<smem>>
    %377 = vector.broadcast %376 : f32 to vector<28x128xf32>
    %378 = arith.subf %370, %377 : vector<28x128xf32>
    %379 = math.absf %378 : vector<28x128xf32>
    %380 = arith.addf %358, %379 : vector<28x128xf32>
    %c2_207 = arith.constant 2 : index
    %c7_208 = arith.constant 7 : index
    %381 = memref.load %arg1[%c2_207, %c7_208] : memref<4x9xf32, #tpu.memory_space<smem>>
    %382 = vector.broadcast %381 : f32 to vector<28x128xf32>
    %383 = arith.subf %370, %382 : vector<28x128xf32>
    %384 = math.absf %383 : vector<28x128xf32>
    %385 = arith.addf %363, %384 : vector<28x128xf32>
    %c3_209 = arith.constant 3 : index
    %c7_210 = arith.constant 7 : index
    %386 = memref.load %arg1[%c3_209, %c7_210] : memref<4x9xf32, #tpu.memory_space<smem>>
    %387 = vector.broadcast %386 : f32 to vector<28x128xf32>
    %388 = arith.subf %370, %387 : vector<28x128xf32>
    %389 = math.absf %388 : vector<28x128xf32>
    %390 = arith.addf %368, %389 : vector<28x128xf32>
    %c0_211 = arith.constant 0 : index
    %c2_212 = arith.constant 2 : index
    %c2_213 = arith.constant 2 : index
    %c128_214 = arith.constant 128 : index
    %391 = vector.load %arg2[%c0_211, %c2_212, %c2_213, %c128_214] : memref<1x3x30x256xf32, #tpu.memory_space<vmem>>, vector<1x1x28x128xf32>
    %392 = vector.shape_cast %391 : vector<1x1x28x128xf32> to vector<28x128xf32>
    %c0_215 = arith.constant 0 : index
    %c8_216 = arith.constant 8 : index
    %393 = memref.load %arg1[%c0_215, %c8_216] : memref<4x9xf32, #tpu.memory_space<smem>>
    %394 = vector.broadcast %393 : f32 to vector<28x128xf32>
    %395 = arith.subf %392, %394 : vector<28x128xf32>
    %396 = math.absf %395 : vector<28x128xf32>
    %397 = arith.addf %375, %396 : vector<28x128xf32>
    %c1_217 = arith.constant 1 : index
    %c8_218 = arith.constant 8 : index
    %398 = memref.load %arg1[%c1_217, %c8_218] : memref<4x9xf32, #tpu.memory_space<smem>>
    %399 = vector.broadcast %398 : f32 to vector<28x128xf32>
    %400 = arith.subf %392, %399 : vector<28x128xf32>
    %401 = math.absf %400 : vector<28x128xf32>
    %402 = arith.addf %380, %401 : vector<28x128xf32>
    %c2_219 = arith.constant 2 : index
    %c8_220 = arith.constant 8 : index
    %403 = memref.load %arg1[%c2_219, %c8_220] : memref<4x9xf32, #tpu.memory_space<smem>>
    %404 = vector.broadcast %403 : f32 to vector<28x128xf32>
    %405 = arith.subf %392, %404 : vector<28x128xf32>
    %406 = math.absf %405 : vector<28x128xf32>
    %407 = arith.addf %385, %406 : vector<28x128xf32>
    %c3_221 = arith.constant 3 : index
    %c8_222 = arith.constant 8 : index
    %408 = memref.load %arg1[%c3_221, %c8_222] : memref<4x9xf32, #tpu.memory_space<smem>>
    %409 = vector.broadcast %408 : f32 to vector<28x128xf32>
    %410 = arith.subf %392, %409 : vector<28x128xf32>
    %411 = math.absf %410 : vector<28x128xf32>
    %412 = arith.addf %390, %411 : vector<28x128xf32>
    %cst_223 = arith.constant 0.111111112 : f32
    %413 = vector.broadcast %cst_223 : f32 to vector<28x128xf32>
    %414 = arith.mulf %397, %413 : vector<28x128xf32>
    %cst_224 = arith.constant 1.000000e+00 : f32
    %415 = vector.broadcast %cst_224 : f32 to vector<28x128xf32>
    %416 = arith.subf %415, %414 : vector<28x128xf32>
    %c0_225 = arith.constant 0 : index
    %c128_226 = arith.constant 128 : index
    %417 = vector.load %arg5[%c0_225, %c128_226] : memref<128x256xf32, #tpu.memory_space<vmem>>, vector<28x128xf32>
    tpu.vector_store %arg5[%c0_225, %c128_226], %416 {strides = array<i32>} : memref<128x256xf32, #tpu.memory_space<vmem>>, vector<28x128xf32>,
    %cst_227 = arith.constant 0.111111112 : f32
    %418 = vector.broadcast %cst_227 : f32 to vector<28x128xf32>
    %419 = arith.mulf %402, %418 : vector<28x128xf32>
    %cst_228 = arith.constant 1.000000e+00 : f32
    %420 = vector.broadcast %cst_228 : f32 to vector<28x128xf32>
    %421 = arith.subf %420, %419 : vector<28x128xf32>
    %c32_229 = arith.constant 32 : index
    %c128_230 = arith.constant 128 : index
    %422 = vector.load %arg5[%c32_229, %c128_230] : memref<128x256xf32, #tpu.memory_space<vmem>>, vector<28x128xf32>
    tpu.vector_store %arg5[%c32_229, %c128_230], %421 {strides = array<i32>} : memref<128x256xf32, #tpu.memory_space<vmem>>, vector<28x128xf32>,
    %cst_231 = arith.constant 0.111111112 : f32
    %423 = vector.broadcast %cst_231 : f32 to vector<28x128xf32>
    %424 = arith.mulf %407, %423 : vector<28x128xf32>
    %cst_232 = arith.constant 1.000000e+00 : f32
    %425 = vector.broadcast %cst_232 : f32 to vector<28x128xf32>
    %426 = arith.subf %425, %424 : vector<28x128xf32>
    %c64_233 = arith.constant 64 : index
    %c128_234 = arith.constant 128 : index
    %427 = vector.load %arg5[%c64_233, %c128_234] : memref<128x256xf32, #tpu.memory_space<vmem>>, vector<28x128xf32>
    tpu.vector_store %arg5[%c64_233, %c128_234], %426 {strides = array<i32>} : memref<128x256xf32, #tpu.memory_space<vmem>>, vector<28x128xf32>,
    %cst_235 = arith.constant 0.111111112 : f32
    %428 = vector.broadcast %cst_235 : f32 to vector<28x128xf32>
    %429 = arith.mulf %412, %428 : vector<28x128xf32>
    %cst_236 = arith.constant 1.000000e+00 : f32
    %430 = vector.broadcast %cst_236 : f32 to vector<28x128xf32>
    %431 = arith.subf %430, %429 : vector<28x128xf32>
    %c96_237 = arith.constant 96 : index
    %c128_238 = arith.constant 128 : index
    %432 = vector.load %arg5[%c96_237, %c128_238] : memref<128x256xf32, #tpu.memory_space<vmem>>, vector<28x128xf32>
    tpu.vector_store %arg5[%c96_237, %c128_238], %431 {strides = array<i32>} : memref<128x256xf32, #tpu.memory_space<vmem>>, vector<28x128xf32>,
    %c0_239 = arith.constant 0 : index
    %c0_240 = arith.constant 0 : index
    %433 = vector.load %arg3[%c0_239, %c0_240] : memref<28x128xf32, #tpu.memory_space<vmem>>, vector<28x128xf32>
    %c0_241 = arith.constant 0 : index
    %c0_242 = arith.constant 0 : index
    %434 = vector.load %arg5[%c0_241, %c0_242] : memref<128x256xf32, #tpu.memory_space<vmem>>, vector<128x256xf32>
    %cst_243 = arith.constant dense<0.000000e+00> : vector<28x256xf32>
    %435 = tpu.matmul %433, %434, %cst_243 {dimension_numbers = #tpu.dot_dimension_numbers<[1], [0], [0], [1], [0, 0, 1, 1], [], []>} : vector<28x128xf32>, vector<128x256xf32>, vector<28x256xf32> -> vector<28x256xf32>
    %cst_244 = arith.constant 2.500000e-01 : f32
    %436 = vector.broadcast %cst_244 : f32 to vector<28x256xf32>
    %437 = arith.mulf %435, %436 : vector<28x256xf32>
    %438 = tpu.iota {dimensions = array<i32: 1>} : vector<1x8xi32>
    %cst_245 = arith.constant 0.000000e+00 : f32
    %439 = vector.broadcast %cst_245 : f32 to vector<1x8xf32>
    %440 = vector.extract_strided_slice %437 {offsets = [0, 0], sizes = [28, 28], strides = [1, 1]} : vector<28x256xf32> to vector<28x28xf32>
    %cst_246 = arith.constant 1.000000e+01 : f32
    %441 = vector.broadcast %cst_246 : f32 to vector<28x28xf32>
    %442 = arith.mulf %440, %441 : vector<28x28xf32>
    %443 = vector.shape_cast %442 : vector<28x28xf32> to vector<1x28x28xf32>
    %cst_247 = arith.constant dense<0xFF800000> : vector<1xf32>
    %444 = vector.multi_reduction <maximumf>, %443, %cst_247 [1, 2] : vector<1x28x28xf32> to vector<1xf32>
    %445 = vector.shape_cast %444 : vector<1xf32> to vector<1x1x1xf32>
    %446 = vector.extract %445[0, 0, 0] : f32 from vector<1x1x1xf32>
    %447 = vector.broadcast %446 : f32 to vector<28x28xf32>
    %448 = arith.subf %442, %447 : vector<28x28xf32>
    %449 = math.exp %448 : vector<28x28xf32>
    %450 = arith.mulf %449, %440 : vector<28x28xf32>
    %451 = vector.shape_cast %450 : vector<28x28xf32> to vector<1x28x28xf32>
    %cst_248 = arith.constant dense<0.000000e+00> : vector<1xf32>
    %452 = vector.multi_reduction <add>, %451, %cst_248 [1, 2] : vector<1x28x28xf32> to vector<1xf32>
    %453 = vector.shape_cast %452 : vector<1xf32> to vector<1x1x1xf32>
    %454 = vector.extract %453[0, 0, 0] : f32 from vector<1x1x1xf32>
    %455 = vector.shape_cast %449 : vector<28x28xf32> to vector<1x28x28xf32>
    %cst_249 = arith.constant dense<0.000000e+00> : vector<1xf32>
    %456 = vector.multi_reduction <add>, %455, %cst_249 [1, 2] : vector<1x28x28xf32> to vector<1xf32>
    %457 = vector.shape_cast %456 : vector<1xf32> to vector<1x1x1xf32>
    %458 = vector.extract %457[0, 0, 0] : f32 from vector<1x1x1xf32>
    %459 = arith.divf %454, %458 : f32
    %c0_i32 = arith.constant 0 : i32
    %460 = vector.broadcast %c0_i32 : i32 to vector<1x8xi32>
    %461 = arith.cmpi eq, %438, %460 : vector<1x8xi32>
    %462 = vector.broadcast %459 : f32 to vector<1x8xf32>
    %463 = arith.select %461, %462, %439 : vector<1x8xi1>, vector<1x8xf32>
    %464 = vector.extract_strided_slice %437 {offsets = [0, 32], sizes = [28, 28], strides = [1, 1]} : vector<28x256xf32> to vector<28x28xf32>
    %cst_250 = arith.constant 1.000000e+01 : f32
    %465 = vector.broadcast %cst_250 : f32 to vector<28x28xf32>
    %466 = arith.mulf %464, %465 : vector<28x28xf32>
    %467 = vector.shape_cast %466 : vector<28x28xf32> to vector<1x28x28xf32>
    %cst_251 = arith.constant dense<0xFF800000> : vector<1xf32>
    %468 = vector.multi_reduction <maximumf>, %467, %cst_251 [1, 2] : vector<1x28x28xf32> to vector<1xf32>
    %469 = vector.shape_cast %468 : vector<1xf32> to vector<1x1x1xf32>
    %470 = vector.extract %469[0, 0, 0] : f32 from vector<1x1x1xf32>
    %471 = vector.broadcast %470 : f32 to vector<28x28xf32>
    %472 = arith.subf %466, %471 : vector<28x28xf32>
    %473 = math.exp %472 : vector<28x28xf32>
    %474 = arith.mulf %473, %464 : vector<28x28xf32>
    %475 = vector.shape_cast %474 : vector<28x28xf32> to vector<1x28x28xf32>
    %cst_252 = arith.constant dense<0.000000e+00> : vector<1xf32>
    %476 = vector.multi_reduction <add>, %475, %cst_252 [1, 2] : vector<1x28x28xf32> to vector<1xf32>
    %477 = vector.shape_cast %476 : vector<1xf32> to vector<1x1x1xf32>
    %478 = vector.extract %477[0, 0, 0] : f32 from vector<1x1x1xf32>
    %479 = vector.shape_cast %473 : vector<28x28xf32> to vector<1x28x28xf32>
    %cst_253 = arith.constant dense<0.000000e+00> : vector<1xf32>
    %480 = vector.multi_reduction <add>, %479, %cst_253 [1, 2] : vector<1x28x28xf32> to vector<1xf32>
    %481 = vector.shape_cast %480 : vector<1xf32> to vector<1x1x1xf32>
    %482 = vector.extract %481[0, 0, 0] : f32 from vector<1x1x1xf32>
    %483 = arith.divf %478, %482 : f32
    %c1_i32 = arith.constant 1 : i32
    %484 = vector.broadcast %c1_i32 : i32 to vector<1x8xi32>
    %485 = arith.cmpi eq, %438, %484 : vector<1x8xi32>
    %486 = vector.broadcast %483 : f32 to vector<1x8xf32>
    %487 = arith.select %485, %486, %463 : vector<1x8xi1>, vector<1x8xf32>
    %488 = vector.extract_strided_slice %437 {offsets = [0, 64], sizes = [28, 28], strides = [1, 1]} : vector<28x256xf32> to vector<28x28xf32>
    %cst_254 = arith.constant 1.000000e+01 : f32
    %489 = vector.broadcast %cst_254 : f32 to vector<28x28xf32>
    %490 = arith.mulf %488, %489 : vector<28x28xf32>
    %491 = vector.shape_cast %490 : vector<28x28xf32> to vector<1x28x28xf32>
    %cst_255 = arith.constant dense<0xFF800000> : vector<1xf32>
    %492 = vector.multi_reduction <maximumf>, %491, %cst_255 [1, 2] : vector<1x28x28xf32> to vector<1xf32>
    %493 = vector.shape_cast %492 : vector<1xf32> to vector<1x1x1xf32>
    %494 = vector.extract %493[0, 0, 0] : f32 from vector<1x1x1xf32>
    %495 = vector.broadcast %494 : f32 to vector<28x28xf32>
    %496 = arith.subf %490, %495 : vector<28x28xf32>
    %497 = math.exp %496 : vector<28x28xf32>
    %498 = arith.mulf %497, %488 : vector<28x28xf32>
    %499 = vector.shape_cast %498 : vector<28x28xf32> to vector<1x28x28xf32>
    %cst_256 = arith.constant dense<0.000000e+00> : vector<1xf32>
    %500 = vector.multi_reduction <add>, %499, %cst_256 [1, 2] : vector<1x28x28xf32> to vector<1xf32>
    %501 = vector.shape_cast %500 : vector<1xf32> to vector<1x1x1xf32>
    %502 = vector.extract %501[0, 0, 0] : f32 from vector<1x1x1xf32>
    %503 = vector.shape_cast %497 : vector<28x28xf32> to vector<1x28x28xf32>
    %cst_257 = arith.constant dense<0.000000e+00> : vector<1xf32>
    %504 = vector.multi_reduction <add>, %503, %cst_257 [1, 2] : vector<1x28x28xf32> to vector<1xf32>
    %505 = vector.shape_cast %504 : vector<1xf32> to vector<1x1x1xf32>
    %506 = vector.extract %505[0, 0, 0] : f32 from vector<1x1x1xf32>
    %507 = arith.divf %502, %506 : f32
    %c2_i32 = arith.constant 2 : i32
    %508 = vector.broadcast %c2_i32 : i32 to vector<1x8xi32>
    %509 = arith.cmpi eq, %438, %508 : vector<1x8xi32>
    %510 = vector.broadcast %507 : f32 to vector<1x8xf32>
    %511 = arith.select %509, %510, %487 : vector<1x8xi1>, vector<1x8xf32>
    %512 = vector.extract_strided_slice %437 {offsets = [0, 96], sizes = [28, 28], strides = [1, 1]} : vector<28x256xf32> to vector<28x28xf32>
    %cst_258 = arith.constant 1.000000e+01 : f32
    %513 = vector.broadcast %cst_258 : f32 to vector<28x28xf32>
    %514 = arith.mulf %512, %513 : vector<28x28xf32>
    %515 = vector.shape_cast %514 : vector<28x28xf32> to vector<1x28x28xf32>
    %cst_259 = arith.constant dense<0xFF800000> : vector<1xf32>
    %516 = vector.multi_reduction <maximumf>, %515, %cst_259 [1, 2] : vector<1x28x28xf32> to vector<1xf32>
    %517 = vector.shape_cast %516 : vector<1xf32> to vector<1x1x1xf32>
    %518 = vector.extract %517[0, 0, 0] : f32 from vector<1x1x1xf32>
    %519 = vector.broadcast %518 : f32 to vector<28x28xf32>
    %520 = arith.subf %514, %519 : vector<28x28xf32>
    %521 = math.exp %520 : vector<28x28xf32>
    %522 = arith.mulf %521, %512 : vector<28x28xf32>
    %523 = vector.shape_cast %522 : vector<28x28xf32> to vector<1x28x28xf32>
    %cst_260 = arith.constant dense<0.000000e+00> : vector<1xf32>
    %524 = vector.multi_reduction <add>, %523, %cst_260 [1, 2] : vector<1x28x28xf32> to vector<1xf32>
    %525 = vector.shape_cast %524 : vector<1xf32> to vector<1x1x1xf32>
    %526 = vector.extract %525[0, 0, 0] : f32 from vector<1x1x1xf32>
    %527 = vector.shape_cast %521 : vector<28x28xf32> to vector<1x28x28xf32>
    %cst_261 = arith.constant dense<0.000000e+00> : vector<1xf32>
    %528 = vector.multi_reduction <add>, %527, %cst_261 [1, 2] : vector<1x28x28xf32> to vector<1xf32>
    %529 = vector.shape_cast %528 : vector<1xf32> to vector<1x1x1xf32>
    %530 = vector.extract %529[0, 0, 0] : f32 from vector<1x1x1xf32>
    %531 = arith.divf %526, %530 : f32
    %c3_i32 = arith.constant 3 : i32
    %532 = vector.broadcast %c3_i32 : i32 to vector<1x8xi32>
    %533 = arith.cmpi eq, %438, %532 : vector<1x8xi32>
    %534 = vector.broadcast %531 : f32 to vector<1x8xf32>
    %535 = arith.select %533, %534, %511 : vector<1x8xi1>, vector<1x8xf32>
    %536 = vector.extract_strided_slice %437 {offsets = [0, 128], sizes = [28, 28], strides = [1, 1]} : vector<28x256xf32> to vector<28x28xf32>
    %cst_262 = arith.constant 1.000000e+01 : f32
    %537 = vector.broadcast %cst_262 : f32 to vector<28x28xf32>
    %538 = arith.mulf %536, %537 : vector<28x28xf32>
    %539 = vector.shape_cast %538 : vector<28x28xf32> to vector<1x28x28xf32>
    %cst_263 = arith.constant dense<0xFF800000> : vector<1xf32>
    %540 = vector.multi_reduction <maximumf>, %539, %cst_263 [1, 2] : vector<1x28x28xf32> to vector<1xf32>
    %541 = vector.shape_cast %540 : vector<1xf32> to vector<1x1x1xf32>
    %542 = vector.extract %541[0, 0, 0] : f32 from vector<1x1x1xf32>
    %543 = vector.broadcast %542 : f32 to vector<28x28xf32>
    %544 = arith.subf %538, %543 : vector<28x28xf32>
    %545 = math.exp %544 : vector<28x28xf32>
    %546 = arith.mulf %545, %536 : vector<28x28xf32>
    %547 = vector.shape_cast %546 : vector<28x28xf32> to vector<1x28x28xf32>
    %cst_264 = arith.constant dense<0.000000e+00> : vector<1xf32>
    %548 = vector.multi_reduction <add>, %547, %cst_264 [1, 2] : vector<1x28x28xf32> to vector<1xf32>
    %549 = vector.shape_cast %548 : vector<1xf32> to vector<1x1x1xf32>
    %550 = vector.extract %549[0, 0, 0] : f32 from vector<1x1x1xf32>
    %551 = vector.shape_cast %545 : vector<28x28xf32> to vector<1x28x28xf32>
    %cst_265 = arith.constant dense<0.000000e+00> : vector<1xf32>
    %552 = vector.multi_reduction <add>, %551, %cst_265 [1, 2] : vector<1x28x28xf32> to vector<1xf32>
    %553 = vector.shape_cast %552 : vector<1xf32> to vector<1x1x1xf32>
    %554 = vector.extract %553[0, 0, 0] : f32 from vector<1x1x1xf32>
    %555 = arith.divf %550, %554 : f32
    %c4_i32 = arith.constant 4 : i32
    %556 = vector.broadcast %c4_i32 : i32 to vector<1x8xi32>
    %557 = arith.cmpi eq, %438, %556 : vector<1x8xi32>
    %558 = vector.broadcast %555 : f32 to vector<1x8xf32>
    %559 = arith.select %557, %558, %535 : vector<1x8xi1>, vector<1x8xf32>
    %560 = vector.extract_strided_slice %437 {offsets = [0, 160], sizes = [28, 28], strides = [1, 1]} : vector<28x256xf32> to vector<28x28xf32>
    %cst_266 = arith.constant 1.000000e+01 : f32
    %561 = vector.broadcast %cst_266 : f32 to vector<28x28xf32>
    %562 = arith.mulf %560, %561 : vector<28x28xf32>
    %563 = vector.shape_cast %562 : vector<28x28xf32> to vector<1x28x28xf32>
    %cst_267 = arith.constant dense<0xFF800000> : vector<1xf32>
    %564 = vector.multi_reduction <maximumf>, %563, %cst_267 [1, 2] : vector<1x28x28xf32> to vector<1xf32>
    %565 = vector.shape_cast %564 : vector<1xf32> to vector<1x1x1xf32>
    %566 = vector.extract %565[0, 0, 0] : f32 from vector<1x1x1xf32>
    %567 = vector.broadcast %566 : f32 to vector<28x28xf32>
    %568 = arith.subf %562, %567 : vector<28x28xf32>
    %569 = math.exp %568 : vector<28x28xf32>
    %570 = arith.mulf %569, %560 : vector<28x28xf32>
    %571 = vector.shape_cast %570 : vector<28x28xf32> to vector<1x28x28xf32>
    %cst_268 = arith.constant dense<0.000000e+00> : vector<1xf32>
    %572 = vector.multi_reduction <add>, %571, %cst_268 [1, 2] : vector<1x28x28xf32> to vector<1xf32>
    %573 = vector.shape_cast %572 : vector<1xf32> to vector<1x1x1xf32>
    %574 = vector.extract %573[0, 0, 0] : f32 from vector<1x1x1xf32>
    %575 = vector.shape_cast %569 : vector<28x28xf32> to vector<1x28x28xf32>
    %cst_269 = arith.constant dense<0.000000e+00> : vector<1xf32>
    %576 = vector.multi_reduction <add>, %575, %cst_269 [1, 2] : vector<1x28x28xf32> to vector<1xf32>
    %577 = vector.shape_cast %576 : vector<1xf32> to vector<1x1x1xf32>
    %578 = vector.extract %577[0, 0, 0] : f32 from vector<1x1x1xf32>
    %579 = arith.divf %574, %578 : f32
    %c5_i32 = arith.constant 5 : i32
    %580 = vector.broadcast %c5_i32 : i32 to vector<1x8xi32>
    %581 = arith.cmpi eq, %438, %580 : vector<1x8xi32>
    %582 = vector.broadcast %579 : f32 to vector<1x8xf32>
    %583 = arith.select %581, %582, %559 : vector<1x8xi1>, vector<1x8xf32>
    %584 = vector.extract_strided_slice %437 {offsets = [0, 192], sizes = [28, 28], strides = [1, 1]} : vector<28x256xf32> to vector<28x28xf32>
    %cst_270 = arith.constant 1.000000e+01 : f32
    %585 = vector.broadcast %cst_270 : f32 to vector<28x28xf32>
    %586 = arith.mulf %584, %585 : vector<28x28xf32>
    %587 = vector.shape_cast %586 : vector<28x28xf32> to vector<1x28x28xf32>
    %cst_271 = arith.constant dense<0xFF800000> : vector<1xf32>
    %588 = vector.multi_reduction <maximumf>, %587, %cst_271 [1, 2] : vector<1x28x28xf32> to vector<1xf32>
    %589 = vector.shape_cast %588 : vector<1xf32> to vector<1x1x1xf32>
    %590 = vector.extract %589[0, 0, 0] : f32 from vector<1x1x1xf32>
    %591 = vector.broadcast %590 : f32 to vector<28x28xf32>
    %592 = arith.subf %586, %591 : vector<28x28xf32>
    %593 = math.exp %592 : vector<28x28xf32>
    %594 = arith.mulf %593, %584 : vector<28x28xf32>
    %595 = vector.shape_cast %594 : vector<28x28xf32> to vector<1x28x28xf32>
    %cst_272 = arith.constant dense<0.000000e+00> : vector<1xf32>
    %596 = vector.multi_reduction <add>, %595, %cst_272 [1, 2] : vector<1x28x28xf32> to vector<1xf32>
    %597 = vector.shape_cast %596 : vector<1xf32> to vector<1x1x1xf32>
    %598 = vector.extract %597[0, 0, 0] : f32 from vector<1x1x1xf32>
    %599 = vector.shape_cast %593 : vector<28x28xf32> to vector<1x28x28xf32>
    %cst_273 = arith.constant dense<0.000000e+00> : vector<1xf32>
    %600 = vector.multi_reduction <add>, %599, %cst_273 [1, 2] : vector<1x28x28xf32> to vector<1xf32>
    %601 = vector.shape_cast %600 : vector<1xf32> to vector<1x1x1xf32>
    %602 = vector.extract %601[0, 0, 0] : f32 from vector<1x1x1xf32>
    %603 = arith.divf %598, %602 : f32
    %c6_i32 = arith.constant 6 : i32
    %604 = vector.broadcast %c6_i32 : i32 to vector<1x8xi32>
    %605 = arith.cmpi eq, %438, %604 : vector<1x8xi32>
    %606 = vector.broadcast %603 : f32 to vector<1x8xf32>
    %607 = arith.select %605, %606, %583 : vector<1x8xi1>, vector<1x8xf32>
    %608 = vector.extract_strided_slice %437 {offsets = [0, 224], sizes = [28, 28], strides = [1, 1]} : vector<28x256xf32> to vector<28x28xf32>
    %cst_274 = arith.constant 1.000000e+01 : f32
    %609 = vector.broadcast %cst_274 : f32 to vector<28x28xf32>
    %610 = arith.mulf %608, %609 : vector<28x28xf32>
    %611 = vector.shape_cast %610 : vector<28x28xf32> to vector<1x28x28xf32>
    %cst_275 = arith.constant dense<0xFF800000> : vector<1xf32>
    %612 = vector.multi_reduction <maximumf>, %611, %cst_275 [1, 2] : vector<1x28x28xf32> to vector<1xf32>
    %613 = vector.shape_cast %612 : vector<1xf32> to vector<1x1x1xf32>
    %614 = vector.extract %613[0, 0, 0] : f32 from vector<1x1x1xf32>
    %615 = vector.broadcast %614 : f32 to vector<28x28xf32>
    %616 = arith.subf %610, %615 : vector<28x28xf32>
    %617 = math.exp %616 : vector<28x28xf32>
    %618 = arith.mulf %617, %608 : vector<28x28xf32>
    %619 = vector.shape_cast %618 : vector<28x28xf32> to vector<1x28x28xf32>
    %cst_276 = arith.constant dense<0.000000e+00> : vector<1xf32>
    %620 = vector.multi_reduction <add>, %619, %cst_276 [1, 2] : vector<1x28x28xf32> to vector<1xf32>
    %621 = vector.shape_cast %620 : vector<1xf32> to vector<1x1x1xf32>
    %622 = vector.extract %621[0, 0, 0] : f32 from vector<1x1x1xf32>
    %623 = vector.shape_cast %617 : vector<28x28xf32> to vector<1x28x28xf32>
    %cst_277 = arith.constant dense<0.000000e+00> : vector<1xf32>
    %624 = vector.multi_reduction <add>, %623, %cst_277 [1, 2] : vector<1x28x28xf32> to vector<1xf32>
    %625 = vector.shape_cast %624 : vector<1xf32> to vector<1x1x1xf32>
    %626 = vector.extract %625[0, 0, 0] : f32 from vector<1x1x1xf32>
    %627 = arith.divf %622, %626 : f32
    %c7_i32 = arith.constant 7 : i32
    %628 = vector.broadcast %c7_i32 : i32 to vector<1x8xi32>
    %629 = arith.cmpi eq, %438, %628 : vector<1x8xi32>
    %630 = vector.broadcast %627 : f32 to vector<1x8xf32>
    %631 = arith.select %629, %630, %607 : vector<1x8xi1>, vector<1x8xf32>
    %632 = vector.shape_cast %631 : vector<1x8xf32> to vector<1x1x8xf32>
    %c0_278 = arith.constant 0 : index
    %c0_279 = arith.constant 0 : index
    %c0_280 = arith.constant 0 : index
    %633 = vector.load %arg4[%c0_278, %c0_279, %c0_280] : memref<1x1x8xf32, #tpu.memory_space<vmem>>, vector<1x1x8xf32>
    tpu.vector_store %arg4[%c0_278, %c0_279, %c0_280], %632 {strides = array<i32>} : memref<1x1x8xf32, #tpu.memory_space<vmem>>, vector<1x1x8xf32>,
    return
  }
  func.func @transform_0(%arg0: i32) -> (i32, i32) {
    %c0_i32 = arith.constant 0 : i32
    %c0_i32_0 = arith.constant 0 : i32
    %c0_i32_1 = arith.constant 0 : i32
    return %c0_i32, %c0_i32_0 : i32, i32
  }
  func.func @transform_1(%arg0: i32) -> (i32, i32, i32, i32) {
    %c0_i32 = arith.constant 0 : i32
    %c0_i32_0 = arith.constant 0 : i32
    %c0_i32_1 = arith.constant 0 : i32
    %c0_i32_2 = arith.constant 0 : i32
    return %arg0, %c0_i32, %c0_i32_0, %c0_i32_1 : i32, i32, i32, i32
  }
  func.func @transform_2(%arg0: i32) -> (i32, i32) {
    %c0_i32 = arith.constant 0 : i32
    %c0_i32_0 = arith.constant 0 : i32
    %c0_i32_1 = arith.constant 0 : i32
    return %c0_i32, %c0_i32_0 : i32, i32
  }
  func.func @transform_3(%arg0: i32) -> (i32, i32, i32) {
    %c0_i32 = arith.constant 0 : i32
    %c0_i32_0 = arith.constant 0 : i32
    %c0_i32_1 = arith.constant 0 : i32
    return %arg0, %c0_i32, %c0_i32_0 : i32, i32, i32
  }
}

</mosaic_0001>

<llo_original>
// kernel: geneo_forward.1
$region0: #{geneo_forward.1}
  #allocation0 [shape = 'u32[]', space=smem, size = 0x4, offset = 0x4, fixed_abs, tag = 'smem constant byte address 0x4 - core index']
  #allocation1 [shape = 'u32[72,128]{1,0:T(1,128)}', space=vmem, size = 0x9000, scoped, tag = 'internal scratch']
  #allocation2 [shape = 'f32[128,256]{1,0:T(8,128)}', space=vmem, size = 0x20000, scoped, tag = 'scratch operand']
  %s0 = inlined_call_operand.vmem [shape: f32[4,9], index: 0, kind: input, shape index: {}]
  %s1 = inlined_call_operand.vmem [shape: f32[2,3,30,256], index: 1, kind: input, shape index: {}]
  %s2 = inlined_call_operand.vmem [shape: f32[28,128], index: 2, kind: input, shape index: {}]
  %s3 = inlined_call_operand.vmem [shape: f32[2,1,8], index: 3, kind: output, shape index: {}]
  %s4 = sld [smem:[#allocation0]]
  $region49: #{geneo_forward.1} parent=0
    _
  %s6 = ssub.s32 1, %s4
  %s7 = scalar_select 0, %s6, %s4
  $region1: #{geneo_forward.1} parent=0
    #allocation3 [shape = 'u8[2048]{0}', space=smem, size = 0x800, scoped, tag = 'input window, operand 0, single buffered']
    #allocation4 [shape = 's32[2]{0}', space=sflag, size = 0x8, scoped, tag = 'scoped memory for geneo_forward.1']
    %8 = vsyncpa [#allocation4], 0
    loop: start=0, step=1, limit=4
    $region2: #{geneo_forward.1} parent=1 // loop_pre_header
      _
    $region3: #{geneo_forward.1} parent=1 // loop_header
      %s10 = sphi 0, %s14
      %p11 = scmp.ge.s32.totalorder %s10, 4
      %s18 = sphi 0, %s18
      %s20 = sphi 0, %s18
      %s21 = sphi 0, %s20
      %s35 = sphi 0, %s21
      %s41 = sphi 0, %s43
      %s44 = sphi 0, %s41
      %s45 = sphi 0, %s44
      %s61 = sphi 0, %s45
      %s65 = sphi 0, %s65
      %s67 = sphi 0, %s65
      %s68 = sphi 0, %s67
      %s82 = sphi 0, %s68
      %s88 = sphi 0, %s90
      %s91 = sphi 0, %s88
      %s92 = sphi 0, %s91
      %s108 = sphi 0, %s92
    $region4: #{geneo_forward.1} parent=1 // loop_header_branch
      %13 = sbr.rel (%p11) target = $region8
    $region5: #{geneo_forward.1} parent=1 // loop_body
      %s15 = ssub.s32 %s10, 1
      %s16 = ssub.s32 %s10, 2
      %s17 = sadd.s32 %s10, 1
      %s19 = sadd.s32 %s18, 1
      %p22 = scmp.eq.s32.totalorder %s10, 1
      %p23 = scmp.ne.s32.totalorder %s18, %s20
      %p24 = scmp.eq.s32.totalorder %s10, 0
      %p25 = por %p23, %p24
      %p26 = scmp.ne.s32.totalorder %s18, %s20
      %p27 = scmp.eq.s32.totalorder %s15, 1
      %p28 = por %p26, %p27
      %p29 = scmp.ne.s32.totalorder %s20, %s21
      %p30 = scmp.eq.s32.totalorder %s15, 0
      %p31 = por %p29, %p30
      %p32 = scmp.ne.s32.totalorder %s20, %s21
      %p33 = scmp.eq.s32.totalorder %s16, 1
      %p34 = por %p32, %p33
      %p36 = scmp.ne.s32.totalorder %s21, %s35
      %p37 = scmp.eq.s32.totalorder %s16, 0
      %p38 = por %p36, %p37
      %s39 = ssub.s32 %s10, %s17
      %p40 = scmp.eq.s32.totalorder %s39, 0
      %s42 = sadd.s32 %s41, 1
      %s43 = scalar_select %p40, %s41, %s42
      %p46 = pneg %p40
      %p47 = scmp.eq.s32.totalorder %s10, 1
      %p48 = por %p46, %p47
      %p49 = scmp.ne.s32.totalorder %s41, %s44
      %p50 = scmp.eq.s32.totalorder %s10, 0
      %p51 = por %p49, %p50
      %p52 = scmp.ne.s32.totalorder %s41, %s44
      %p53 = scmp.eq.s32.totalorder %s15, 1
      %p54 = por %p52, %p53
      %p55 = scmp.ne.s32.totalorder %s44, %s45
      %p56 = scmp.eq.s32.totalorder %s15, 0
      %p57 = por %p55, %p56
      %p58 = scmp.ne.s32.totalorder %s44, %s45
      %p59 = scmp.eq.s32.totalorder %s16, 1
      %p60 = por %p58, %p59
      %p62 = scmp.ne.s32.totalorder %s45, %s61
      %p63 = scmp.eq.s32.totalorder %s16, 0
      %p64 = por %p62, %p63
      %s66 = sadd.s32 %s65, 1
      %p69 = scmp.eq.s32.totalorder %s10, 1
      %p70 = scmp.ne.s32.totalorder %s65, %s67
      %p71 = scmp.eq.s32.totalorder %s10, 0
      %p72 = por %p70, %p71
      %p73 = scmp.ne.s32.totalorder %s65, %s67
      %p74 = scmp.eq.s32.totalorder %s15, 1
      %p75 = por %p73, %p74
      %p76 = scmp.ne.s32.totalorder %s67, %s68
      %p77 = scmp.eq.s32.totalorder %s15, 0
      %p78 = por %p76, %p77
      %p79 = scmp.ne.s32.totalorder %s67, %s68
      %p80 = scmp.eq.s32.totalorder %s16, 1
      %p81 = por %p79, %p80
      %p83 = scmp.ne.s32.totalorder %s68, %s82
      %p84 = scmp.eq.s32.totalorder %s16, 0
      %p85 = por %p83, %p84
      %s86 = ssub.s32 %s10, %s17
      %p87 = scmp.eq.s32.totalorder %s86, 0
      %s89 = sadd.s32 %s88, 1
      %s90 = scalar_select %p87, %s88, %s89
      %p93 = pneg %p87
      %p94 = scmp.eq.s32.totalorder %s10, 1
      %p95 = por %p93, %p94
      %p96 = scmp.ne.s32.totalorder %s88, %s91
      %p97 = scmp.eq.s32.totalorder %s10, 0
      %p98 = por %p96, %p97
      %p99 = scmp.ne.s32.totalorder %s88, %s91
      %p100 = scmp.eq.s32.totalorder %s15, 1
      %p101 = por %p99, %p100
      %p102 = scmp.ne.s32.totalorder %s91, %s92
      %p103 = scmp.eq.s32.totalorder %s15, 0
      %p104 = por %p102, %p103
      %p105 = scmp.ne.s32.totalorder %s91, %s92
      %p106 = scmp.eq.s32.totalorder %s16, 1
      %p107 = por %p105, %p106
      %p109 = scmp.ne.s32.totalorder %s92, %s108
      %p110 = scmp.eq.s32.totalorder %s16, 0
      %p111 = por %p109, %p110
      %p112 = scmp.le.s32.totalorder 1, %s10
      %p113 = scmp.lt.s32.totalorder %s10, 3
      %p114 = pnand %p112, %p113
      %p115 = pneg %p114
      // Predicated region
      $region9: #{geneo_forward.1} parent=5 // pred_check
        _
      $region10: #{geneo_forward.1} parent=5 // pred_check_branch
        %117 = sbr.rel (%p114) target = $region12
      $region11: #{geneo_forward.1} parent=5 // pred_region
        %s118 = ssub.s32 %s10, 1
        // Predicated region
        $region13: #{geneo_forward.1} parent=11 // pred_check
          %p119 = pneg %p31
        $region14: #{geneo_forward.1} parent=11 // pred_check_branch
          %121 = sbr.rel (%p119) target = $region16
        $region15: #{geneo_forward.1} parent=11 // pred_region
          %123 = vsyncadd [#allocation4], 0
          %s125 = sshll.u32 %s0, 4
          %s126 = int_to_ptr.vmem [resolvable:$true] %s125
          %128 = dma.vmem_to_smem %s126, 64, [#allocation3], [#allocation4]
        $region16: #{geneo_forward.1} parent=11 // pred_fallthru
          _
        // Predicated region
        $region17: #{geneo_forward.1} parent=11 // pred_check
          %p129 = pneg %p78
        $region18: #{geneo_forward.1} parent=11 // pred_check_branch
          %131 = sbr.rel (%p129) target = $region20
        $region19: #{geneo_forward.1} parent=11 // pred_region
          _
        $region20: #{geneo_forward.1} parent=11 // pred_fallthru
          _
      $region12: #{geneo_forward.1} parent=5 // pred_fallthru
        _
      %p132 = scmp.lt.s32.totalorder %s10, 2
      // Predicated region
      $region21: #{geneo_forward.1} parent=5 // pred_check
        %p133 = pneg %p132
      $region22: #{geneo_forward.1} parent=5 // pred_check_branch
        %135 = sbr.rel (%p133) target = $region24
      $region23: #{geneo_forward.1} parent=5 // pred_region
        // Predicated region
        $region25: #{geneo_forward.1} parent=23 // pred_check
          %p136 = pneg %p51
        $region26: #{geneo_forward.1} parent=23 // pred_check_branch
          %138 = sbr.rel (%p136) target = $region28
        $region27: #{geneo_forward.1} parent=23 // pred_region
          %p139 = scmp.lt.s32.totalorder %s10, 1
          %s140 = scalar_select %p139, %s10, 1
          %s141 = smul.addr %s140, 24
          %s142 = smul.addr %s141, 8
          %s143 = scalar_lea.vmem %s1, %s142
        $region28: #{geneo_forward.1} parent=23 // pred_fallthru
          _
      $region24: #{geneo_forward.1} parent=5 // pred_fallthru
        _
      %p144 = scmp.le.s32.totalorder 1, %s10
      %p145 = scmp.lt.s32.totalorder %s10, 3
      %p146 = pnand %p144, %p145
      %p147 = pneg %p146
      // Predicated region
      $region29: #{geneo_forward.1} parent=5 // pred_check
        _
      $region30: #{geneo_forward.1} parent=5 // pred_check_branch
        %149 = sbr.rel (%p146) target = $region32
      $region31: #{geneo_forward.1} parent=5 // pred_region
        %s150 = ssub.s32 %s10, 1
        // Predicated region
        $region33: #{geneo_forward.1} parent=31 // pred_check
          %p151 = pneg %p31
        $region34: #{geneo_forward.1} parent=31 // pred_check_branch
          %153 = sbr.rel (%p151) target = $region36
        $region35: #{geneo_forward.1} parent=31 // pred_region
          %155 = dma.done [#allocation4], 64
        $region36: #{geneo_forward.1} parent=31 // pred_fallthru
          _
        %156 = sfence
        %p157 = pneg %p31
        %p158 = pneg %p28
        %p159 = scmp.lt.s32.totalorder %s15, 1
        %s160 = scalar_select %p159, %s15, 1
        %s161 = smul.addr %s160, 24
        %s162 = smul.addr %s161, 8
        %s163 = scalar_lea.vmem %s1, %s162
        %p164 = pneg %p57
        %p165 = pneg %p54
        %p166 = pneg %p78
        %p167 = pneg %p75
        %p168 = pneg %p104
        %p169 = pneg %p101
        %p170 = scmp.lt.s32.totalorder %s15, 1
        %s171 = scalar_select %p170, %s15, 1
        %s172 = scalar_lea.vmem %s3, %s171
        %p173 = scmp.lt.s32.totalorder %s15, 1
        %s174 = scalar_select %p173, %s15, 1
        %s175 = smul.addr %s174, 24
        %s176 = smul.addr %s175, 8
        %s177 = scalar_lea.vmem %s1, %s176
        %p178 = scmp.lt.s32.totalorder %s15, 1
        %s179 = scalar_select %p178, %s15, 1
        %s180 = scalar_lea.vmem %s3, %s179
        %181 = vst [vmem:[#allocation2 + $0x30] sm:$0xf0] 0.0
        %182 = vst [vmem:[#allocation2 + $0x38] sm:$0xf0] 0.0
        %183 = vst [vmem:[#allocation2 + $0x70] sm:$0xf0] 0.0
        %184 = vst [vmem:[#allocation2 + $0x78] sm:$0xf0] 0.0
        %185 = vst [vmem:[#allocation2 + $0xb0] sm:$0xf0] 0.0
        %186 = vst [vmem:[#allocation2 + $0xb8] sm:$0xf0] 0.0
        %187 = vst [vmem:[#allocation2 + $0xf0] sm:$0xf0] 0.0
        %188 = vst [vmem:[#allocation2 + $0xf8] sm:$0xf0] 0.0
        %v189 = vld [vmem:[%s177] sm:$0xff]
        %v190 = vld [vmem:[%s177 + $0x10] sm:$0xff]
        %v191 = vld [vmem:[%s177 + $0x20] sm:$0xff]
        %v192 = vld [vmem:[%s177 + $0x30] sm:$0xf]
        %s193 = sld [smem:[#allocation3]]
        %v194 = vstv %s193
        %v195 = vsub.f32 %v189, %v194
        %v196 = vsub.f32 %v190, %v194
        %v197 = vsub.f32 %v191, %v194
        %v198 = vsub.f32 %v192, %v194
        %v199 = vand.u32 2147483647, %v195
        %v200 = vand.u32 2147483647, %v196
        %v201 = vand.u32 2147483647, %v197
        %v202 = vand.u32 2147483647, %v198
        %s203 = sld [smem:[#allocation3 + $0x80]]
        %v204 = vstv %s203
        %v205 = vsub.f32 %v189, %v204
        %v206 = vsub.f32 %v190, %v204
        %v207 = vsub.f32 %v191, %v204
        %v208 = vsub.f32 %v192, %v204
        %v209 = vand.u32 2147483647, %v205
        %v210 = vand.u32 2147483647, %v206
        %v211 = vand.u32 2147483647, %v207
        %v212 = vand.u32 2147483647, %v208
        %s213 = sld [smem:[#allocation3 + $0x100]]
        %v214 = vstv %s213
        %v215 = vsub.f32 %v189, %v214
        %v216 = vsub.f32 %v190, %v214
        %v217 = vsub.f32 %v191, %v214
        %v218 = vsub.f32 %v192, %v214
        %v219 = vand.u32 2147483647, %v215
        %v220 = vand.u32 2147483647, %v216
        %v221 = vand.u32 2147483647, %v217
        %v222 = vand.u32 2147483647, %v218
        %s223 = sld [smem:[#allocation3 + $0x180]]
        %v224 = vstv %s223
        %v225 = vsub.f32 %v189, %v224
        %v226 = vsub.f32 %v190, %v224
        %v227 = vsub.f32 %v191, %v224
        %v228 = vsub.f32 %v192, %v224
        %v229 = vand.u32 2147483647, %v225
        %v230 = vand.u32 2147483647, %v226
        %v231 = vand.u32 2147483647, %v227
        %v232 = vand.u32 2147483647, %v228
        %s233 = scalar_lea.vmem %s177, 64
        %v234 = vld [vmem:[%s233] sm:$0xff]
        %v235 = vld [vmem:[%s233 + $0x10] sm:$0xff]
        %v236 = vld [vmem:[%s233 + $0x20] sm:$0xff]
        %v237 = vld [vmem:[%s233 + $0x30] sm:$0xf]
        %s238 = sld [smem:[#allocation3 + $0x1]]
        %v239 = vstv %s238
        %v240 = vsub.f32 %v234, %v239
        %v241 = vsub.f32 %v235, %v239
        %v242 = vsub.f32 %v236, %v239
        %v243 = vsub.f32 %v237, %v239
        %v244 = vand.u32 2147483647, %v240
        %v245 = vand.u32 2147483647, %v241
        %v246 = vand.u32 2147483647, %v242
        %v247 = vand.u32 2147483647, %v243
        %v248 = vadd.f32 %v199, %v244
        %v249 = vadd.f32 %v200, %v245
        %v250 = vadd.f32 %v201, %v246
        %v251 = vadd.f32 %v202, %v247
        %s252 = sld [smem:[#allocation3 + $0x81]]
        %v253 = vstv %s252
        %v254 = vsub.f32 %v234, %v253
        %v255 = vsub.f32 %v235, %v253
        %v256 = vsub.f32 %v236, %v253
        %v257 = vsub.f32 %v237, %v253
        %v258 = vand.u32 2147483647, %v254
        %v259 = vand.u32 2147483647, %v255
        %v260 = vand.u32 2147483647, %v256
        %v261 = vand.u32 2147483647, %v257
        %v262 = vadd.f32 %v209, %v258
        %v263 = vadd.f32 %v210, %v259
        %v264 = vadd.f32 %v211, %v260
        %v265 = vadd.f32 %v212, %v261
        %s266 = sld [smem:[#allocation3 + $0x101]]
        %v267 = vstv %s266
        %v268 = vsub.f32 %v234, %v267
        %v269 = vsub.f32 %v235, %v267
        %v270 = vsub.f32 %v236, %v267
        %v271 = vsub.f32 %v237, %v267
        %v272 = vand.u32 2147483647, %v268
        %v273 = vand.u32 2147483647, %v269
        %v274 = vand.u32 2147483647, %v270
        %v275 = vand.u32 2147483647, %v271
        %v276 = vadd.f32 %v219, %v272
        %v277 = vadd.f32 %v220, %v273
        %v278 = vadd.f32 %v221, %v274
        %v279 = vadd.f32 %v222, %v275
        %s280 = sld [smem:[#allocation3 + $0x181]]
        %v281 = vstv %s280
        %v282 = vsub.f32 %v234, %v281
        %v283 = vsub.f32 %v235, %v281
        %v284 = vsub.f32 %v236, %v281
        %v285 = vsub.f32 %v237, %v281
        %v286 = vand.u32 2147483647, %v282
        %v287 = vand.u32 2147483647, %v283
        %v288 = vand.u32 2147483647, %v284
        %v289 = vand.u32 2147483647, %v285
        %v290 = vadd.f32 %v229, %v286
        %v291 = vadd.f32 %v230, %v287
        %v292 = vadd.f32 %v231, %v288
        %v293 = vadd.f32 %v232, %v289
        %s294 = scalar_lea.vmem %s177, 128
        %v295 = vld [vmem:[%s294] sm:$0xff]
        %v296 = vld [vmem:[%s294 + $0x10] sm:$0xff]
        %v297 = vld [vmem:[%s294 + $0x20] sm:$0xff]
        %v298 = vld [vmem:[%s294 + $0x30] sm:$0xf]
        %s299 = sld [smem:[#allocation3 + $0x2]]
        %v300 = vstv %s299
        %v301 = vsub.f32 %v295, %v300
        %v302 = vsub.f32 %v296, %v300
        %v303 = vsub.f32 %v297, %v300
        %v304 = vsub.f32 %v298, %v300
        %v305 = vand.u32 2147483647, %v301
        %v306 = vand.u32 2147483647, %v302
        %v307 = vand.u32 2147483647, %v303
        %v308 = vand.u32 2147483647, %v304
        %v309 = vadd.f32 %v248, %v305
        %v310 = vadd.f32 %v249, %v306
        %v311 = vadd.f32 %v250, %v307
        %v312 = vadd.f32 %v251, %v308
        %s313 = sld [smem:[#allocation3 + $0x82]]
        %v314 = vstv %s313
        %v315 = vsub.f32 %v295, %v314
        %v316 = vsub.f32 %v296, %v314
        %v317 = vsub.f32 %v297, %v314
        %v318 = vsub.f32 %v298, %v314
        %v319 = vand.u32 2147483647, %v315
        %v320 = vand.u32 2147483647, %v316
        %v321 = vand.u32 2147483647, %v317
        %v322 = vand.u32 2147483647, %v318
        %v323 = vadd.f32 %v262, %v319
        %v324 = vadd.f32 %v263, %v320
        %v325 = vadd.f32 %v264, %v321
        %v326 = vadd.f32 %v265, %v322
        %s327 = sld [smem:[#allocation3 + $0x102]]
        %v328 = vstv %s327
        %v329 = vsub.f32 %v295, %v328
        %v330 = vsub.f32 %v296, %v328
        %v331 = vsub.f32 %v297, %v328
        %v332 = vsub.f32 %v298, %v328
        %v333 = vand.u32 2147483647, %v329
        %v334 = vand.u32 2147483647, %v330
        %v335 = vand.u32 2147483647, %v331
        %v336 = vand.u32 2147483647, %v332
        %v337 = vadd.f32 %v276, %v333
        %v338 = vadd.f32 %v277, %v334
        %v339 = vadd.f32 %v278, %v335
        %v340 = vadd.f32 %v279, %v336
        %s341 = sld [smem:[#allocation3 + $0x182]]
        %v342 = vstv %s341
        %v343 = vsub.f32 %v295, %v342
        %v344 = vsub.f32 %v296, %v342
        %v345 = vsub.f32 %v297, %v342
        %v346 = vsub.f32 %v298, %v342
        %v347 = vand.u32 2147483647, %v343
        %v348 = vand.u32 2147483647, %v344
        %v349 = vand.u32 2147483647, %v345
        %v350 = vand.u32 2147483647, %v346
        %v351 = vadd.f32 %v290, %v347
        %v352 = vadd.f32 %v291, %v348
        %v353 = vadd.f32 %v292, %v349
        %v354 = vadd.f32 %v293, %v350
        %v355 = vld [vmem:[%s177] sm:$0xfe]
        %v356 = vld [vmem:[%s177 + $0x30] sm:$0x1f]
        %s357 = sld [smem:[#allocation3 + $0x3]]
        %v358 = vstv %s357
        %v359 = vsub.f32 %v355, %v358
        %v360 = vsub.f32 %v190, %v358
        %v361 = vsub.f32 %v191, %v358
        %v362 = vsub.f32 %v356, %v358
        %v363 = vand.u32 2147483647, %v359
        %v364 = vand.u32 2147483647, %v360
        %v365 = vand.u32 2147483647, %v361
        %v366 = vand.u32 2147483647, %v362
        %vm371 = vcmask 1046528
        %v372 = vrot.slane %v363, 1
        %v373 = vrot.slane %v364, 1
        %v374 = vsel %vm371, %v372, %v373
        %v375 = vrot.slane %v365, 1
        %v376 = vsel %vm371, %v373, %v375
        %v377 = vrot.slane %v366, 1
        %v378 = vsel %vm371, %v375, %v377
        %v383 = vadd.f32 %v309, %v374
        %v384 = vadd.f32 %v310, %v376
        %v385 = vadd.f32 %v311, %v378
        %v386 = vadd.f32 %v312, %v377
        %s387 = sld [smem:[#allocation3 + $0x83]]
        %v388 = vstv %s387
        %v389 = vsub.f32 %v355, %v388
        %v390 = vsub.f32 %v190, %v388
        %v391 = vsub.f32 %v191, %v388
        %v392 = vsub.f32 %v356, %v388
        %v393 = vand.u32 2147483647, %v389
        %v394 = vand.u32 2147483647, %v390
        %v395 = vand.u32 2147483647, %v391
        %v396 = vand.u32 2147483647, %v392
        %v401 = vrot.slane %v393, 1
        %v402 = vrot.slane %v394, 1
        %v403 = vsel %vm371, %v401, %v402
        %v404 = vrot.slane %v395, 1
        %v405 = vsel %vm371, %v402, %v404
        %v406 = vrot.slane %v396, 1
        %v407 = vsel %vm371, %v404, %v406
        %v412 = vadd.f32 %v323, %v403
        %v413 = vadd.f32 %v324, %v405
        %v414 = vadd.f32 %v325, %v407
        %v415 = vadd.f32 %v326, %v406
        %s416 = sld [smem:[#allocation3 + $0x103]]
        %v417 = vstv %s416
        %v418 = vsub.f32 %v355, %v417
        %v419 = vsub.f32 %v190, %v417
        %v420 = vsub.f32 %v191, %v417
        %v421 = vsub.f32 %v356, %v417
        %v422 = vand.u32 2147483647, %v418
        %v423 = vand.u32 2147483647, %v419
        %v424 = vand.u32 2147483647, %v420
        %v425 = vand.u32 2147483647, %v421
        %v430 = vrot.slane %v422, 1
        %v431 = vrot.slane %v423, 1
        %v432 = vsel %vm371, %v430, %v431
        %v433 = vrot.slane %v424, 1
        %v434 = vsel %vm371, %v431, %v433
        %v435 = vrot.slane %v425, 1
        %v436 = vsel %vm371, %v433, %v435
        %v441 = vadd.f32 %v337, %v432
        %v442 = vadd.f32 %v338, %v434
        %v443 = vadd.f32 %v339, %v436
        %v444 = vadd.f32 %v340, %v435
        %s445 = sld [smem:[#allocation3 + $0x183]]
        %v446 = vstv %s445
        %v447 = vsub.f32 %v355, %v446
        %v448 = vsub.f32 %v190, %v446
        %v449 = vsub.f32 %v191, %v446
        %v450 = vsub.f32 %v356, %v446
        %v451 = vand.u32 2147483647, %v447
        %v452 = vand.u32 2147483647, %v448
        %v453 = vand.u32 2147483647, %v449
        %v454 = vand.u32 2147483647, %v450
        %v459 = vrot.slane %v451, 1
        %v460 = vrot.slane %v452, 1
        %v461 = vsel %vm371, %v459, %v460
        %v462 = vrot.slane %v453, 1
        %v463 = vsel %vm371, %v460, %v462
        %v464 = vrot.slane %v454, 1
        %v465 = vsel %vm371, %v462, %v464
        %v470 = vadd.f32 %v351, %v461
        %v471 = vadd.f32 %v352, %v463
        %v472 = vadd.f32 %v353, %v465
        %v473 = vadd.f32 %v354, %v464
        %v474 = vld [vmem:[%s233] sm:$0xfe]
        %v475 = vld [vmem:[%s233 + $0x30] sm:$0x1f]
        %s476 = sld [smem:[#allocation3 + $0x4]]
        %v477 = vstv %s476
        %v478 = vsub.f32 %v474, %v477
        %v479 = vsub.f32 %v235, %v477
        %v480 = vsub.f32 %v236, %v477
        %v481 = vsub.f32 %v475, %v477
        %v482 = vand.u32 2147483647, %v478
        %v483 = vand.u32 2147483647, %v479
        %v484 = vand.u32 2147483647, %v480
        %v485 = vand.u32 2147483647, %v481
        %v490 = vrot.slane %v482, 1
        %v491 = vrot.slane %v483, 1
        %v492 = vsel %vm371, %v490, %v491
        %v493 = vrot.slane %v484, 1
        %v494 = vsel %vm371, %v491, %v493
        %v495 = vrot.slane %v485, 1
        %v496 = vsel %vm371, %v493, %v495
        %v501 = vadd.f32 %v383, %v492
        %v502 = vadd.f32 %v384, %v494
        %v503 = vadd.f32 %v385, %v496
        %v504 = vadd.f32 %v386, %v495
        %s505 = sld [smem:[#allocation3 + $0x84]]
        %v506 = vstv %s505
        %v507 = vsub.f32 %v474, %v506
        %v508 = vsub.f32 %v235, %v506
        %v509 = vsub.f32 %v236, %v506
        %v510 = vsub.f32 %v475, %v506
        %v511 = vand.u32 2147483647, %v507
        %v512 = vand.u32 2147483647, %v508
        %v513 = vand.u32 2147483647, %v509
        %v514 = vand.u32 2147483647, %v510
        %v519 = vrot.slane %v511, 1
        %v520 = vrot.slane %v512, 1
        %v521 = vsel %vm371, %v519, %v520
        %v522 = vrot.slane %v513, 1
        %v523 = vsel %vm371, %v520, %v522
        %v524 = vrot.slane %v514, 1
        %v525 = vsel %vm371, %v522, %v524
        %v530 = vadd.f32 %v412, %v521
        %v531 = vadd.f32 %v413, %v523
        %v532 = vadd.f32 %v414, %v525
        %v533 = vadd.f32 %v415, %v524
        %s534 = sld [smem:[#allocation3 + $0x104]]
        %v535 = vstv %s534
        %v536 = vsub.f32 %v474, %v535
        %v537 = vsub.f32 %v235, %v535
        %v538 = vsub.f32 %v236, %v535
        %v539 = vsub.f32 %v475, %v535
        %v540 = vand.u32 2147483647, %v536
        %v541 = vand.u32 2147483647, %v537
        %v542 = vand.u32 2147483647, %v538
        %v543 = vand.u32 2147483647, %v539
        %v548 = vrot.slane %v540, 1
        %v549 = vrot.slane %v541, 1
        %v550 = vsel %vm371, %v548, %v549
        %v551 = vrot.slane %v542, 1
        %v552 = vsel %vm371, %v549, %v551
        %v553 = vrot.slane %v543, 1
        %v554 = vsel %vm371, %v551, %v553
        %v559 = vadd.f32 %v441, %v550
        %v560 = vadd.f32 %v442, %v552
        %v561 = vadd.f32 %v443, %v554
        %v562 = vadd.f32 %v444, %v553
        %s563 = sld [smem:[#allocation3 + $0x184]]
        %v564 = vstv %s563
        %v565 = vsub.f32 %v474, %v564
        %v566 = vsub.f32 %v235, %v564
        %v567 = vsub.f32 %v236, %v564
        %v568 = vsub.f32 %v475, %v564
        %v569 = vand.u32 2147483647, %v565
        %v570 = vand.u32 2147483647, %v566
        %v571 = vand.u32 2147483647, %v567
        %v572 = vand.u32 2147483647, %v568
        %v577 = vrot.slane %v569, 1
        %v578 = vrot.slane %v570, 1
        %v579 = vsel %vm371, %v577, %v578
        %v580 = vrot.slane %v571, 1
        %v581 = vsel %vm371, %v578, %v580
        %v582 = vrot.slane %v572, 1
        %v583 = vsel %vm371, %v580, %v582
        %v588 = vadd.f32 %v470, %v579
        %v589 = vadd.f32 %v471, %v581
        %v590 = vadd.f32 %v472, %v583
        %v591 = vadd.f32 %v473, %v582
        %v592 = vld [vmem:[%s294] sm:$0xfe]
        %v593 = vld [vmem:[%s294 + $0x30] sm:$0x1f]
        %s594 = sld [smem:[#allocation3 + $0x5]]
        %v595 = vstv %s594
        %v596 = vsub.f32 %v592, %v595
        %v597 = vsub.f32 %v296, %v595
        %v598 = vsub.f32 %v297, %v595
        %v599 = vsub.f32 %v593, %v595
        %v600 = vand.u32 2147483647, %v596
        %v601 = vand.u32 2147483647, %v597
        %v602 = vand.u32 2147483647, %v598
        %v603 = vand.u32 2147483647, %v599
        %v608 = vrot.slane %v600, 1
        %v609 = vrot.slane %v601, 1
        %v610 = vsel %vm371, %v608, %v609
        %v611 = vrot.slane %v602, 1
        %v612 = vsel %vm371, %v609, %v611
        %v613 = vrot.slane %v603, 1
        %v614 = vsel %vm371, %v611, %v613
        %v619 = vadd.f32 %v501, %v610
        %v620 = vadd.f32 %v502, %v612
        %v621 = vadd.f32 %v503, %v614
        %v622 = vadd.f32 %v504, %v613
        %s623 = sld [smem:[#allocation3 + $0x85]]
        %v624 = vstv %s623
        %v625 = vsub.f32 %v592, %v624
        %v626 = vsub.f32 %v296, %v624
        %v627 = vsub.f32 %v297, %v624
        %v628 = vsub.f32 %v593, %v624
        %v629 = vand.u32 2147483647, %v625
        %v630 = vand.u32 2147483647, %v626
        %v631 = vand.u32 2147483647, %v627
        %v632 = vand.u32 2147483647, %v628
        %v637 = vrot.slane %v629, 1
        %v638 = vrot.slane %v630, 1
        %v639 = vsel %vm371, %v637, %v638
        %v640 = vrot.slane %v631, 1
        %v641 = vsel %vm371, %v638, %v640
        %v642 = vrot.slane %v632, 1
        %v643 = vsel %vm371, %v640, %v642
        %v648 = vadd.f32 %v530, %v639
        %v649 = vadd.f32 %v531, %v641
        %v650 = vadd.f32 %v532, %v643
        %v651 = vadd.f32 %v533, %v642
        %s652 = sld [smem:[#allocation3 + $0x105]]
        %v653 = vstv %s652
        %v654 = vsub.f32 %v592, %v653
        %v655 = vsub.f32 %v296, %v653
        %v656 = vsub.f32 %v297, %v653
        %v657 = vsub.f32 %v593, %v653
        %v658 = vand.u32 2147483647, %v654
        %v659 = vand.u32 2147483647, %v655
        %v660 = vand.u32 2147483647, %v656
        %v661 = vand.u32 2147483647, %v657
        %v666 = vrot.slane %v658, 1
        %v667 = vrot.slane %v659, 1
        %v668 = vsel %vm371, %v666, %v667
        %v669 = vrot.slane %v660, 1
        %v670 = vsel %vm371, %v667, %v669
        %v671 = vrot.slane %v661, 1
        %v672 = vsel %vm371, %v669, %v671
        %v677 = vadd.f32 %v559, %v668
        %v678 = vadd.f32 %v560, %v670
        %v679 = vadd.f32 %v561, %v672
        %v680 = vadd.f32 %v562, %v671
        %s681 = sld [smem:[#allocation3 + $0x185]]
        %v682 = vstv %s681
        %v683 = vsub.f32 %v592, %v682
        %v684 = vsub.f32 %v296, %v682
        %v685 = vsub.f32 %v297, %v682
        %v686 = vsub.f32 %v593, %v682
        %v687 = vand.u32 2147483647, %v683
        %v688 = vand.u32 2147483647, %v684
        %v689 = vand.u32 2147483647, %v685
        %v690 = vand.u32 2147483647, %v686
        %v695 = vrot.slane %v687, 1
        %v696 = vrot.slane %v688, 1
        %v697 = vsel %vm371, %v695, %v696
        %v698 = vrot.slane %v689, 1
        %v699 = vsel %vm371, %v696, %v698
        %v700 = vrot.slane %v690, 1
        %v701 = vsel %vm371, %v698, %v700
        %v706 = vadd.f32 %v588, %v697
        %v707 = vadd.f32 %v589, %v699
        %v708 = vadd.f32 %v590, %v701
        %v709 = vadd.f32 %v591, %v700
        %v710 = vld [vmem:[%s177] sm:$0xfc]
        %v711 = vld [vmem:[%s177 + $0x30] sm:$0x3f]
        %s712 = sld [smem:[#allocation3 + $0x6]]
        %v713 = vstv %s712
        %v714 = vsub.f32 %v710, %v713
        %v715 = vsub.f32 %v190, %v713
        %v716 = vsub.f32 %v191, %v713
        %v717 = vsub.f32 %v711, %v713
        %v718 = vand.u32 2147483647, %v714
        %v719 = vand.u32 2147483647, %v715
        %v720 = vand.u32 2147483647, %v716
        %v721 = vand.u32 2147483647, %v717
        %vm726 = vcmask 1045504
        %v727 = vrot.slane %v718, 2
        %v728 = vrot.slane %v719, 2
        %v729 = vsel %vm726, %v727, %v728
        %v730 = vrot.slane %v720, 2
        %v731 = vsel %vm726, %v728, %v730
        %v732 = vrot.slane %v721, 2
        %v733 = vsel %vm726, %v730, %v732
        %v738 = vadd.f32 %v619, %v729
        %v739 = vadd.f32 %v620, %v731
        %v740 = vadd.f32 %v621, %v733
        %v741 = vadd.f32 %v622, %v732
        %s742 = sld [smem:[#allocation3 + $0x86]]
        %v743 = vstv %s742
        %v744 = vsub.f32 %v710, %v743
        %v745 = vsub.f32 %v190, %v743
        %v746 = vsub.f32 %v191, %v743
        %v747 = vsub.f32 %v711, %v743
        %v748 = vand.u32 2147483647, %v744
        %v749 = vand.u32 2147483647, %v745
        %v750 = vand.u32 2147483647, %v746
        %v751 = vand.u32 2147483647, %v747
        %v756 = vrot.slane %v748, 2
        %v757 = vrot.slane %v749, 2
        %v758 = vsel %vm726, %v756, %v757
        %v759 = vrot.slane %v750, 2
        %v760 = vsel %vm726, %v757, %v759
        %v761 = vrot.slane %v751, 2
        %v762 = vsel %vm726, %v759, %v761
        %v767 = vadd.f32 %v648, %v758
        %v768 = vadd.f32 %v649, %v760
        %v769 = vadd.f32 %v650, %v762
        %v770 = vadd.f32 %v651, %v761
        %s771 = sld [smem:[#allocation3 + $0x106]]
        %v772 = vstv %s771
        %v773 = vsub.f32 %v710, %v772
        %v774 = vsub.f32 %v190, %v772
        %v775 = vsub.f32 %v191, %v772
        %v776 = vsub.f32 %v711, %v772
        %v777 = vand.u32 2147483647, %v773
        %v778 = vand.u32 2147483647, %v774
        %v779 = vand.u32 2147483647, %v775
        %v780 = vand.u32 2147483647, %v776
        %v785 = vrot.slane %v777, 2
        %v786 = vrot.slane %v778, 2
        %v787 = vsel %vm726, %v785, %v786
        %v788 = vrot.slane %v779, 2
        %v789 = vsel %vm726, %v786, %v788
        %v790 = vrot.slane %v780, 2
        %v791 = vsel %vm726, %v788, %v790
        %v796 = vadd.f32 %v677, %v787
        %v797 = vadd.f32 %v678, %v789
        %v798 = vadd.f32 %v679, %v791
        %v799 = vadd.f32 %v680, %v790
        %s800 = sld [smem:[#allocation3 + $0x186]]
        %v801 = vstv %s800
        %v802 = vsub.f32 %v710, %v801
        %v803 = vsub.f32 %v190, %v801
        %v804 = vsub.f32 %v191, %v801
        %v805 = vsub.f32 %v711, %v801
        %v806 = vand.u32 2147483647, %v802
        %v807 = vand.u32 2147483647, %v803
        %v808 = vand.u32 2147483647, %v804
        %v809 = vand.u32 2147483647, %v805
        %v814 = vrot.slane %v806, 2
        %v815 = vrot.slane %v807, 2
        %v816 = vsel %vm726, %v814, %v815
        %v817 = vrot.slane %v808, 2
        %v818 = vsel %vm726, %v815, %v817
        %v819 = vrot.slane %v809, 2
        %v820 = vsel %vm726, %v817, %v819
        %v825 = vadd.f32 %v706, %v816
        %v826 = vadd.f32 %v707, %v818
        %v827 = vadd.f32 %v708, %v820
        %v828 = vadd.f32 %v709, %v819
        %v829 = vld [vmem:[%s233] sm:$0xfc]
        %v830 = vld [vmem:[%s233 + $0x30] sm:$0x3f]
        %s831 = sld [smem:[#allocation3 + $0x7]]
        %v832 = vstv %s831
        %v833 = vsub.f32 %v829, %v832
        %v834 = vsub.f32 %v235, %v832
        %v835 = vsub.f32 %v236, %v832
        %v836 = vsub.f32 %v830, %v832
        %v837 = vand.u32 2147483647, %v833
        %v838 = vand.u32 2147483647, %v834
        %v839 = vand.u32 2147483647, %v835
        %v840 = vand.u32 2147483647, %v836
        %v845 = vrot.slane %v837, 2
        %v846 = vrot.slane %v838, 2
        %v847 = vsel %vm726, %v845, %v846
        %v848 = vrot.slane %v839, 2
        %v849 = vsel %vm726, %v846, %v848
        %v850 = vrot.slane %v840, 2
        %v851 = vsel %vm726, %v848, %v850
        %v856 = vadd.f32 %v738, %v847
        %v857 = vadd.f32 %v739, %v849
        %v858 = vadd.f32 %v740, %v851
        %v859 = vadd.f32 %v741, %v850
        %s860 = sld [smem:[#allocation3 + $0x87]]
        %v861 = vstv %s860
        %v862 = vsub.f32 %v829, %v861
        %v863 = vsub.f32 %v235, %v861
        %v864 = vsub.f32 %v236, %v861
        %v865 = vsub.f32 %v830, %v861
        %v866 = vand.u32 2147483647, %v862
        %v867 = vand.u32 2147483647, %v863
        %v868 = vand.u32 2147483647, %v864
        %v869 = vand.u32 2147483647, %v865
        %v874 = vrot.slane %v866, 2
        %v875 = vrot.slane %v867, 2
        %v876 = vsel %vm726, %v874, %v875
        %v877 = vrot.slane %v868, 2
        %v878 = vsel %vm726, %v875, %v877
        %v879 = vrot.slane %v869, 2
        %v880 = vsel %vm726, %v877, %v879
        %v885 = vadd.f32 %v767, %v876
        %v886 = vadd.f32 %v768, %v878
        %v887 = vadd.f32 %v769, %v880
        %v888 = vadd.f32 %v770, %v879
        %s889 = sld [smem:[#allocation3 + $0x107]]
        %v890 = vstv %s889
        %v891 = vsub.f32 %v829, %v890
        %v892 = vsub.f32 %v235, %v890
        %v893 = vsub.f32 %v236, %v890
        %v894 = vsub.f32 %v830, %v890
        %v895 = vand.u32 2147483647, %v891
        %v896 = vand.u32 2147483647, %v892
        %v897 = vand.u32 2147483647, %v893
        %v898 = vand.u32 2147483647, %v894
        %v903 = vrot.slane %v895, 2
        %v904 = vrot.slane %v896, 2
        %v905 = vsel %vm726, %v903, %v904
        %v906 = vrot.slane %v897, 2
        %v907 = vsel %vm726, %v904, %v906
        %v908 = vrot.slane %v898, 2
        %v909 = vsel %vm726, %v906, %v908
        %v914 = vadd.f32 %v796, %v905
        %v915 = vadd.f32 %v797, %v907
        %v916 = vadd.f32 %v798, %v909
        %v917 = vadd.f32 %v799, %v908
        %s918 = sld [smem:[#allocation3 + $0x187]]
        %v919 = vstv %s918
        %v920 = vsub.f32 %v829, %v919
        %v921 = vsub.f32 %v235, %v919
        %v922 = vsub.f32 %v236, %v919
        %v923 = vsub.f32 %v830, %v919
        %v924 = vand.u32 2147483647, %v920
        %v925 = vand.u32 2147483647, %v921
        %v926 = vand.u32 2147483647, %v922
        %v927 = vand.u32 2147483647, %v923
        %v932 = vrot.slane %v924, 2
        %v933 = vrot.slane %v925, 2
        %v934 = vsel %vm726, %v932, %v933
        %v935 = vrot.slane %v926, 2
        %v936 = vsel %vm726, %v933, %v935
        %v937 = vrot.slane %v927, 2
        %v938 = vsel %vm726, %v935, %v937
        %v943 = vadd.f32 %v825, %v934
        %v944 = vadd.f32 %v826, %v936
        %v945 = vadd.f32 %v827, %v938
        %v946 = vadd.f32 %v828, %v937
        %v947 = vld [vmem:[%s294] sm:$0xfc]
        %v948 = vld [vmem:[%s294 + $0x30] sm:$0x3f]
        %s949 = sld [smem:[#allocation3 + $0x8]]
        %v950 = vstv %s949
        %v951 = vsub.f32 %v947, %v950
        %v952 = vsub.f32 %v296, %v950
        %v953 = vsub.f32 %v297, %v950
        %v954 = vsub.f32 %v948, %v950
        %v955 = vand.u32 2147483647, %v951
        %v956 = vand.u32 2147483647, %v952
        %v957 = vand.u32 2147483647, %v953
        %v958 = vand.u32 2147483647, %v954
        %v963 = vrot.slane %v955, 2
        %v964 = vrot.slane %v956, 2
        %v965 = vsel %vm726, %v963, %v964
        %v966 = vrot.slane %v957, 2
        %v967 = vsel %vm726, %v964, %v966
        %v968 = vrot.slane %v958, 2
        %v969 = vsel %vm726, %v966, %v968
        %v974 = vadd.f32 %v856, %v965
        %v975 = vadd.f32 %v857, %v967
        %v976 = vadd.f32 %v858, %v969
        %v977 = vadd.f32 %v859, %v968
        %s978 = sld [smem:[#allocation3 + $0x88]]
        %v979 = vstv %s978
        %v980 = vsub.f32 %v947, %v979
        %v981 = vsub.f32 %v296, %v979
        %v982 = vsub.f32 %v297, %v979
        %v983 = vsub.f32 %v948, %v979
        %v984 = vand.u32 2147483647, %v980
        %v985 = vand.u32 2147483647, %v981
        %v986 = vand.u32 2147483647, %v982
        %v987 = vand.u32 2147483647, %v983
        %v992 = vrot.slane %v984, 2
        %v993 = vrot.slane %v985, 2
        %v994 = vsel %vm726, %v992, %v993
        %v995 = vrot.slane %v986, 2
        %v996 = vsel %vm726, %v993, %v995
        %v997 = vrot.slane %v987, 2
        %v998 = vsel %vm726, %v995, %v997
        %v1003 = vadd.f32 %v885, %v994
        %v1004 = vadd.f32 %v886, %v996
        %v1005 = vadd.f32 %v887, %v998
        %v1006 = vadd.f32 %v888, %v997
        %s1007 = sld [smem:[#allocation3 + $0x108]]
        %v1008 = vstv %s1007
        %v1009 = vsub.f32 %v947, %v1008
        %v1010 = vsub.f32 %v296, %v1008
        %v1011 = vsub.f32 %v297, %v1008
        %v1012 = vsub.f32 %v948, %v1008
        %v1013 = vand.u32 2147483647, %v1009
        %v1014 = vand.u32 2147483647, %v1010
        %v1015 = vand.u32 2147483647, %v1011
        %v1016 = vand.u32 2147483647, %v1012
        %v1021 = vrot.slane %v1013, 2
        %v1022 = vrot.slane %v1014, 2
        %v1023 = vsel %vm726, %v1021, %v1022
        %v1024 = vrot.slane %v1015, 2
        %v1025 = vsel %vm726, %v1022, %v1024
        %v1026 = vrot.slane %v1016, 2
        %v1027 = vsel %vm726, %v1024, %v1026
        %v1032 = vadd.f32 %v914, %v1023
        %v1033 = vadd.f32 %v915, %v1025
        %v1034 = vadd.f32 %v916, %v1027
        %v1035 = vadd.f32 %v917, %v1026
        %s1036 = sld [smem:[#allocation3 + $0x188]]
        %v1037 = vstv %s1036
        %v1038 = vsub.f32 %v947, %v1037
        %v1039 = vsub.f32 %v296, %v1037
        %v1040 = vsub.f32 %v297, %v1037
        %v1041 = vsub.f32 %v948, %v1037
        %v1042 = vand.u32 2147483647, %v1038
        %v1043 = vand.u32 2147483647, %v1039
        %v1044 = vand.u32 2147483647, %v1040
        %v1045 = vand.u32 2147483647, %v1041
        %v1050 = vrot.slane %v1042, 2
        %v1051 = vrot.slane %v1043, 2
        %v1052 = vsel %vm726, %v1050, %v1051
        %v1053 = vrot.slane %v1044, 2
        %v1054 = vsel %vm726, %v1051, %v1053
        %v1055 = vrot.slane %v1045, 2
        %v1056 = vsel %vm726, %v1053, %v1055
        %v1061 = vadd.f32 %v943, %v1052
        %v1062 = vadd.f32 %v944, %v1054
        %v1063 = vadd.f32 %v945, %v1056
        %v1064 = vadd.f32 %v946, %v1055
        %v1065 = vmul.f32 %v974, 0.11111111
        %v1066 = vmul.f32 %v975, 0.11111111
        %v1067 = vmul.f32 %v976, 0.11111111
        %v1068 = vmul.f32 %v977, 0.11111111
        %v1069 = vsub.f32 1.0, %v1065
        %v1070 = vsub.f32 1.0, %v1066
        %v1071 = vsub.f32 1.0, %v1067
        %v1072 = vsub.f32 1.0, %v1068
        %1073 = vst [vmem:[#allocation2] sm:$0xff] %v1069
        %1074 = vst [vmem:[#allocation2 + $0x10] sm:$0xff] %v1070
        %1075 = vst [vmem:[#allocation2 + $0x20] sm:$0xff] %v1071
        %1076 = vst [vmem:[#allocation2 + $0x30] sm:$0xf] %v1072
        %v1077 = vmul.f32 %v1003, 0.11111111
        %v1078 = vmul.f32 %v1004, 0.11111111
        %v1079 = vmul.f32 %v1005, 0.11111111
        %v1080 = vmul.f32 %v1006, 0.11111111
        %v1081 = vsub.f32 1.0, %v1077
        %v1082 = vsub.f32 1.0, %v1078
        %v1083 = vsub.f32 1.0, %v1079
        %v1084 = vsub.f32 1.0, %v1080
        %1085 = vst [vmem:[#allocation2 + $0x40] sm:$0xff] %v1081
        %1086 = vst [vmem:[#allocation2 + $0x50] sm:$0xff] %v1082
        %1087 = vst [vmem:[#allocation2 + $0x60] sm:$0xff] %v1083
        %1088 = vst [vmem:[#allocation2 + $0x70] sm:$0xf] %v1084
        %v1089 = vmul.f32 %v1032, 0.11111111
        %v1090 = vmul.f32 %v1033, 0.11111111
        %v1091 = vmul.f32 %v1034, 0.11111111
        %v1092 = vmul.f32 %v1035, 0.11111111
        %v1093 = vsub.f32 1.0, %v1089
        %v1094 = vsub.f32 1.0, %v1090
        %v1095 = vsub.f32 1.0, %v1091
        %v1096 = vsub.f32 1.0, %v1092
        %1097 = vst [vmem:[#allocation2 + $0x80] sm:$0xff] %v1093
        %1098 = vst [vmem:[#allocation2 + $0x90] sm:$0xff] %v1094
        %1099 = vst [vmem:[#allocation2 + $0xa0] sm:$0xff] %v1095
        %1100 = vst [vmem:[#allocation2 + $0xb0] sm:$0xf] %v1096
        %v1101 = vmul.f32 %v1061, 0.11111111
        %v1102 = vmul.f32 %v1062, 0.11111111
        %v1103 = vmul.f32 %v1063, 0.11111111
        %v1104 = vmul.f32 %v1064, 0.11111111
        %v1105 = vsub.f32 1.0, %v1101
        %v1106 = vsub.f32 1.0, %v1102
        %v1107 = vsub.f32 1.0, %v1103
        %v1108 = vsub.f32 1.0, %v1104
        %1109 = vst [vmem:[#allocation2 + $0xc0] sm:$0xff] %v1105
        %1110 = vst [vmem:[#allocation2 + $0xd0] sm:$0xff] %v1106
        %1111 = vst [vmem:[#allocation2 + $0xe0] sm:$0xff] %v1107
        %1112 = vst [vmem:[#allocation2 + $0xf0] sm:$0xf] %v1108
        %v1113 = vld [vmem:[%s177 + $0x8] sm:$0xff]
        %v1114 = vld [vmem:[%s177 + $0x18] sm:$0xff]
        %v1115 = vld [vmem:[%s177 + $0x28] sm:$0xff]
        %v1116 = vld [vmem:[%s177 + $0x38] sm:$0xf]
        %s1117 = sld [smem:[#allocation3]]
        %v1118 = vstv %s1117
        %v1119 = vsub.f32 %v1113, %v1118
        %v1120 = vsub.f32 %v1114, %v1118
        %v1121 = vsub.f32 %v1115, %v1118
        %v1122 = vsub.f32 %v1116, %v1118
        %v1123 = vand.u32 2147483647, %v1119
        %v1124 = vand.u32 2147483647, %v1120
        %v1125 = vand.u32 2147483647, %v1121
        %v1126 = vand.u32 2147483647, %v1122
        %s1127 = sld [smem:[#allocation3 + $0x80]]
        %v1128 = vstv %s1127
        %v1129 = vsub.f32 %v1113, %v1128
        %v1130 = vsub.f32 %v1114, %v1128
        %v1131 = vsub.f32 %v1115, %v1128
        %v1132 = vsub.f32 %v1116, %v1128
        %v1133 = vand.u32 2147483647, %v1129
        %v1134 = vand.u32 2147483647, %v1130
        %v1135 = vand.u32 2147483647, %v1131
        %v1136 = vand.u32 2147483647, %v1132
        %s1137 = sld [smem:[#allocation3 + $0x100]]
        %v1138 = vstv %s1137
        %v1139 = vsub.f32 %v1113, %v1138
        %v1140 = vsub.f32 %v1114, %v1138
        %v1141 = vsub.f32 %v1115, %v1138
        %v1142 = vsub.f32 %v1116, %v1138
        %v1143 = vand.u32 2147483647, %v1139
        %v1144 = vand.u32 2147483647, %v1140
        %v1145 = vand.u32 2147483647, %v1141
        %v1146 = vand.u32 2147483647, %v1142
        %s1147 = sld [smem:[#allocation3 + $0x180]]
        %v1148 = vstv %s1147
        %v1149 = vsub.f32 %v1113, %v1148
        %v1150 = vsub.f32 %v1114, %v1148
        %v1151 = vsub.f32 %v1115, %v1148
        %v1152 = vsub.f32 %v1116, %v1148
        %v1153 = vand.u32 2147483647, %v1149
        %v1154 = vand.u32 2147483647, %v1150
        %v1155 = vand.u32 2147483647, %v1151
        %v1156 = vand.u32 2147483647, %v1152
        %v1157 = vld [vmem:[%s233 + $0x8] sm:$0xff]
        %v1158 = vld [vmem:[%s233 + $0x18] sm:$0xff]
        %v1159 = vld [vmem:[%s233 + $0x28] sm:$0xff]
        %v1160 = vld [vmem:[%s233 + $0x38] sm:$0xf]
        %s1161 = sld [smem:[#allocation3 + $0x1]]
        %v1162 = vstv %s1161
        %v1163 = vsub.f32 %v1157, %v1162
        %v1164 = vsub.f32 %v1158, %v1162
        %v1165 = vsub.f32 %v1159, %v1162
        %v1166 = vsub.f32 %v1160, %v1162
        %v1167 = vand.u32 2147483647, %v1163
        %v1168 = vand.u32 2147483647, %v1164
        %v1169 = vand.u32 2147483647, %v1165
        %v1170 = vand.u32 2147483647, %v1166
        %v1171 = vadd.f32 %v1123, %v1167
        %v1172 = vadd.f32 %v1124, %v1168
        %v1173 = vadd.f32 %v1125, %v1169
        %v1174 = vadd.f32 %v1126, %v1170
        %s1175 = sld [smem:[#allocation3 + $0x81]]
        %v1176 = vstv %s1175
        %v1177 = vsub.f32 %v1157, %v1176
        %v1178 = vsub.f32 %v1158, %v1176
        %v1179 = vsub.f32 %v1159, %v1176
        %v1180 = vsub.f32 %v1160, %v1176
        %v1181 = vand.u32 2147483647, %v1177
        %v1182 = vand.u32 2147483647, %v1178
        %v1183 = vand.u32 2147483647, %v1179
        %v1184 = vand.u32 2147483647, %v1180
        %v1185 = vadd.f32 %v1133, %v1181
        %v1186 = vadd.f32 %v1134, %v1182
        %v1187 = vadd.f32 %v1135, %v1183
        %v1188 = vadd.f32 %v1136, %v1184
        %s1189 = sld [smem:[#allocation3 + $0x101]]
        %v1190 = vstv %s1189
        %v1191 = vsub.f32 %v1157, %v1190
        %v1192 = vsub.f32 %v1158, %v1190
        %v1193 = vsub.f32 %v1159, %v1190
        %v1194 = vsub.f32 %v1160, %v1190
        %v1195 = vand.u32 2147483647, %v1191
        %v1196 = vand.u32 2147483647, %v1192
        %v1197 = vand.u32 2147483647, %v1193
        %v1198 = vand.u32 2147483647, %v1194
        %v1199 = vadd.f32 %v1143, %v1195
        %v1200 = vadd.f32 %v1144, %v1196
        %v1201 = vadd.f32 %v1145, %v1197
        %v1202 = vadd.f32 %v1146, %v1198
        %s1203 = sld [smem:[#allocation3 + $0x181]]
        %v1204 = vstv %s1203
        %v1205 = vsub.f32 %v1157, %v1204
        %v1206 = vsub.f32 %v1158, %v1204
        %v1207 = vsub.f32 %v1159, %v1204
        %v1208 = vsub.f32 %v1160, %v1204
        %v1209 = vand.u32 2147483647, %v1205
        %v1210 = vand.u32 2147483647, %v1206
        %v1211 = vand.u32 2147483647, %v1207
        %v1212 = vand.u32 2147483647, %v1208
        %v1213 = vadd.f32 %v1153, %v1209
        %v1214 = vadd.f32 %v1154, %v1210
        %v1215 = vadd.f32 %v1155, %v1211
        %v1216 = vadd.f32 %v1156, %v1212
        %v1217 = vld [vmem:[%s294 + $0x8] sm:$0xff]
        %v1218 = vld [vmem:[%s294 + $0x18] sm:$0xff]
        %v1219 = vld [vmem:[%s294 + $0x28] sm:$0xff]
        %v1220 = vld [vmem:[%s294 + $0x38] sm:$0xf]
        %s1221 = sld [smem:[#allocation3 + $0x2]]
        %v1222 = vstv %s1221
        %v1223 = vsub.f32 %v1217, %v1222
        %v1224 = vsub.f32 %v1218, %v1222
        %v1225 = vsub.f32 %v1219, %v1222
        %v1226 = vsub.f32 %v1220, %v1222
        %v1227 = vand.u32 2147483647, %v1223
        %v1228 = vand.u32 2147483647, %v1224
        %v1229 = vand.u32 2147483647, %v1225
        %v1230 = vand.u32 2147483647, %v1226
        %v1231 = vadd.f32 %v1171, %v1227
        %v1232 = vadd.f32 %v1172, %v1228
        %v1233 = vadd.f32 %v1173, %v1229
        %v1234 = vadd.f32 %v1174, %v1230
        %s1235 = sld [smem:[#allocation3 + $0x82]]
        %v1236 = vstv %s1235
        %v1237 = vsub.f32 %v1217, %v1236
        %v1238 = vsub.f32 %v1218, %v1236
        %v1239 = vsub.f32 %v1219, %v1236
        %v1240 = vsub.f32 %v1220, %v1236
        %v1241 = vand.u32 2147483647, %v1237
        %v1242 = vand.u32 2147483647, %v1238
        %v1243 = vand.u32 2147483647, %v1239
        %v1244 = vand.u32 2147483647, %v1240
        %v1245 = vadd.f32 %v1185, %v1241
        %v1246 = vadd.f32 %v1186, %v1242
        %v1247 = vadd.f32 %v1187, %v1243
        %v1248 = vadd.f32 %v1188, %v1244
        %s1249 = sld [smem:[#allocation3 + $0x102]]
        %v1250 = vstv %s1249
        %v1251 = vsub.f32 %v1217, %v1250
        %v1252 = vsub.f32 %v1218, %v1250
        %v1253 = vsub.f32 %v1219, %v1250
        %v1254 = vsub.f32 %v1220, %v1250
        %v1255 = vand.u32 2147483647, %v1251
        %v1256 = vand.u32 2147483647, %v1252
        %v1257 = vand.u32 2147483647, %v1253
        %v1258 = vand.u32 2147483647, %v1254
        %v1259 = vadd.f32 %v1199, %v1255
        %v1260 = vadd.f32 %v1200, %v1256
        %v1261 = vadd.f32 %v1201, %v1257
        %v1262 = vadd.f32 %v1202, %v1258
        %s1263 = sld [smem:[#allocation3 + $0x182]]
        %v1264 = vstv %s1263
        %v1265 = vsub.f32 %v1217, %v1264
        %v1266 = vsub.f32 %v1218, %v1264
        %v1267 = vsub.f32 %v1219, %v1264
        %v1268 = vsub.f32 %v1220, %v1264
        %v1269 = vand.u32 2147483647, %v1265
        %v1270 = vand.u32 2147483647, %v1266
        %v1271 = vand.u32 2147483647, %v1267
        %v1272 = vand.u32 2147483647, %v1268
        %v1273 = vadd.f32 %v1213, %v1269
        %v1274 = vadd.f32 %v1214, %v1270
        %v1275 = vadd.f32 %v1215, %v1271
        %v1276 = vadd.f32 %v1216, %v1272
        %v1277 = vld [vmem:[%s177 + $0x8] sm:$0xfe]
        %v1278 = vld [vmem:[%s177 + $0x38] sm:$0x1f]
        %s1279 = sld [smem:[#allocation3 + $0x3]]
        %v1280 = vstv %s1279
        %v1281 = vsub.f32 %v1277, %v1280
        %v1282 = vsub.f32 %v1114, %v1280
        %v1283 = vsub.f32 %v1115, %v1280
        %v1284 = vsub.f32 %v1278, %v1280
        %v1285 = vand.u32 2147483647, %v1281
        %v1286 = vand.u32 2147483647, %v1282
        %v1287 = vand.u32 2147483647, %v1283
        %v1288 = vand.u32 2147483647, %v1284
        %v1293 = vrot.slane %v1285, 1
        %v1294 = vrot.slane %v1286, 1
        %v1295 = vsel %vm371, %v1293, %v1294
        %v1296 = vrot.slane %v1287, 1
        %v1297 = vsel %vm371, %v1294, %v1296
        %v1298 = vrot.slane %v1288, 1
        %v1299 = vsel %vm371, %v1296, %v1298
        %v1304 = vadd.f32 %v1231, %v1295
        %v1305 = vadd.f32 %v1232, %v1297
        %v1306 = vadd.f32 %v1233, %v1299
        %v1307 = vadd.f32 %v1234, %v1298
        %s1308 = sld [smem:[#allocation3 + $0x83]]
        %v1309 = vstv %s1308
        %v1310 = vsub.f32 %v1277, %v1309
        %v1311 = vsub.f32 %v1114, %v1309
        %v1312 = vsub.f32 %v1115, %v1309
        %v1313 = vsub.f32 %v1278, %v1309
        %v1314 = vand.u32 2147483647, %v1310
        %v1315 = vand.u32 2147483647, %v1311
        %v1316 = vand.u32 2147483647, %v1312
        %v1317 = vand.u32 2147483647, %v1313
        %v1322 = vrot.slane %v1314, 1
        %v1323 = vrot.slane %v1315, 1
        %v1324 = vsel %vm371, %v1322, %v1323
        %v1325 = vrot.slane %v1316, 1
        %v1326 = vsel %vm371, %v1323, %v1325
        %v1327 = vrot.slane %v1317, 1
        %v1328 = vsel %vm371, %v1325, %v1327
        %v1333 = vadd.f32 %v1245, %v1324
        %v1334 = vadd.f32 %v1246, %v1326
        %v1335 = vadd.f32 %v1247, %v1328
        %v1336 = vadd.f32 %v1248, %v1327
        %s1337 = sld [smem:[#allocation3 + $0x103]]
        %v1338 = vstv %s1337
        %v1339 = vsub.f32 %v1277, %v1338
        %v1340 = vsub.f32 %v1114, %v1338
        %v1341 = vsub.f32 %v1115, %v1338
        %v1342 = vsub.f32 %v1278, %v1338
        %v1343 = vand.u32 2147483647, %v1339
        %v1344 = vand.u32 2147483647, %v1340
        %v1345 = vand.u32 2147483647, %v1341
        %v1346 = vand.u32 2147483647, %v1342
        %v1351 = vrot.slane %v1343, 1
        %v1352 = vrot.slane %v1344, 1
        %v1353 = vsel %vm371, %v1351, %v1352
        %v1354 = vrot.slane %v1345, 1
        %v1355 = vsel %vm371, %v1352, %v1354
        %v1356 = vrot.slane %v1346, 1
        %v1357 = vsel %vm371, %v1354, %v1356
        %v1362 = vadd.f32 %v1259, %v1353
        %v1363 = vadd.f32 %v1260, %v1355
        %v1364 = vadd.f32 %v1261, %v1357
        %v1365 = vadd.f32 %v1262, %v1356
        %s1366 = sld [smem:[#allocation3 + $0x183]]
        %v1367 = vstv %s1366
        %v1368 = vsub.f32 %v1277, %v1367
        %v1369 = vsub.f32 %v1114, %v1367
        %v1370 = vsub.f32 %v1115, %v1367
        %v1371 = vsub.f32 %v1278, %v1367
        %v1372 = vand.u32 2147483647, %v1368
        %v1373 = vand.u32 2147483647, %v1369
        %v1374 = vand.u32 2147483647, %v1370
        %v1375 = vand.u32 2147483647, %v1371
        %v1380 = vrot.slane %v1372, 1
        %v1381 = vrot.slane %v1373, 1
        %v1382 = vsel %vm371, %v1380, %v1381
        %v1383 = vrot.slane %v1374, 1
        %v1384 = vsel %vm371, %v1381, %v1383
        %v1385 = vrot.slane %v1375, 1
        %v1386 = vsel %vm371, %v1383, %v1385
        %v1391 = vadd.f32 %v1273, %v1382
        %v1392 = vadd.f32 %v1274, %v1384
        %v1393 = vadd.f32 %v1275, %v1386
        %v1394 = vadd.f32 %v1276, %v1385
        %v1395 = vld [vmem:[%s233 + $0x8] sm:$0xfe]
        %v1396 = vld [vmem:[%s233 + $0x38] sm:$0x1f]
        %s1397 = sld [smem:[#allocation3 + $0x4]]
        %v1398 = vstv %s1397
        %v1399 = vsub.f32 %v1395, %v1398
        %v1400 = vsub.f32 %v1158, %v1398
        %v1401 = vsub.f32 %v1159, %v1398
        %v1402 = vsub.f32 %v1396, %v1398
        %v1403 = vand.u32 2147483647, %v1399
        %v1404 = vand.u32 2147483647, %v1400
        %v1405 = vand.u32 2147483647, %v1401
        %v1406 = vand.u32 2147483647, %v1402
        %v1411 = vrot.slane %v1403, 1
        %v1412 = vrot.slane %v1404, 1
        %v1413 = vsel %vm371, %v1411, %v1412
        %v1414 = vrot.slane %v1405, 1
        %v1415 = vsel %vm371, %v1412, %v1414
        %v1416 = vrot.slane %v1406, 1
        %v1417 = vsel %vm371, %v1414, %v1416
        %v1422 = vadd.f32 %v1304, %v1413
        %v1423 = vadd.f32 %v1305, %v1415
        %v1424 = vadd.f32 %v1306, %v1417
        %v1425 = vadd.f32 %v1307, %v1416
        %s1426 = sld [smem:[#allocation3 + $0x84]]
        %v1427 = vstv %s1426
        %v1428 = vsub.f32 %v1395, %v1427
        %v1429 = vsub.f32 %v1158, %v1427
        %v1430 = vsub.f32 %v1159, %v1427
        %v1431 = vsub.f32 %v1396, %v1427
        %v1432 = vand.u32 2147483647, %v1428
        %v1433 = vand.u32 2147483647, %v1429
        %v1434 = vand.u32 2147483647, %v1430
        %v1435 = vand.u32 2147483647, %v1431
        %v1440 = vrot.slane %v1432, 1
        %v1441 = vrot.slane %v1433, 1
        %v1442 = vsel %vm371, %v1440, %v1441
        %v1443 = vrot.slane %v1434, 1
        %v1444 = vsel %vm371, %v1441, %v1443
        %v1445 = vrot.slane %v1435, 1
        %v1446 = vsel %vm371, %v1443, %v1445
        %v1451 = vadd.f32 %v1333, %v1442
        %v1452 = vadd.f32 %v1334, %v1444
        %v1453 = vadd.f32 %v1335, %v1446
        %v1454 = vadd.f32 %v1336, %v1445
        %s1455 = sld [smem:[#allocation3 + $0x104]]
        %v1456 = vstv %s1455
        %v1457 = vsub.f32 %v1395, %v1456
        %v1458 = vsub.f32 %v1158, %v1456
        %v1459 = vsub.f32 %v1159, %v1456
        %v1460 = vsub.f32 %v1396, %v1456
        %v1461 = vand.u32 2147483647, %v1457
        %v1462 = vand.u32 2147483647, %v1458
        %v1463 = vand.u32 2147483647, %v1459
        %v1464 = vand.u32 2147483647, %v1460
        %v1469 = vrot.slane %v1461, 1
        %v1470 = vrot.slane %v1462, 1
        %v1471 = vsel %vm371, %v1469, %v1470
        %v1472 = vrot.slane %v1463, 1
        %v1473 = vsel %vm371, %v1470, %v1472
        %v1474 = vrot.slane %v1464, 1
        %v1475 = vsel %vm371, %v1472, %v1474
        %v1480 = vadd.f32 %v1362, %v1471
        %v1481 = vadd.f32 %v1363, %v1473
        %v1482 = vadd.f32 %v1364, %v1475
        %v1483 = vadd.f32 %v1365, %v1474
        %s1484 = sld [smem:[#allocation3 + $0x184]]
        %v1485 = vstv %s1484
        %v1486 = vsub.f32 %v1395, %v1485
        %v1487 = vsub.f32 %v1158, %v1485
        %v1488 = vsub.f32 %v1159, %v1485
        %v1489 = vsub.f32 %v1396, %v1485
        %v1490 = vand.u32 2147483647, %v1486
        %v1491 = vand.u32 2147483647, %v1487
        %v1492 = vand.u32 2147483647, %v1488
        %v1493 = vand.u32 2147483647, %v1489
        %v1498 = vrot.slane %v1490, 1
        %v1499 = vrot.slane %v1491, 1
        %v1500 = vsel %vm371, %v1498, %v1499
        %v1501 = vrot.slane %v1492, 1
        %v1502 = vsel %vm371, %v1499, %v1501
        %v1503 = vrot.slane %v1493, 1
        %v1504 = vsel %vm371, %v1501, %v1503
        %v1509 = vadd.f32 %v1391, %v1500
        %v1510 = vadd.f32 %v1392, %v1502
        %v1511 = vadd.f32 %v1393, %v1504
        %v1512 = vadd.f32 %v1394, %v1503
        %v1513 = vld [vmem:[%s294 + $0x8] sm:$0xfe]
        %v1514 = vld [vmem:[%s294 + $0x38] sm:$0x1f]
        %s1515 = sld [smem:[#allocation3 + $0x5]]
        %v1516 = vstv %s1515
        %v1517 = vsub.f32 %v1513, %v1516
        %v1518 = vsub.f32 %v1218, %v1516
        %v1519 = vsub.f32 %v1219, %v1516
        %v1520 = vsub.f32 %v1514, %v1516
        %v1521 = vand.u32 2147483647, %v1517
        %v1522 = vand.u32 2147483647, %v1518
        %v1523 = vand.u32 2147483647, %v1519
        %v1524 = vand.u32 2147483647, %v1520
        %v1529 = vrot.slane %v1521, 1
        %v1530 = vrot.slane %v1522, 1
        %v1531 = vsel %vm371, %v1529, %v1530
        %v1532 = vrot.slane %v1523, 1
        %v1533 = vsel %vm371, %v1530, %v1532
        %v1534 = vrot.slane %v1524, 1
        %v1535 = vsel %vm371, %v1532, %v1534
        %v1540 = vadd.f32 %v1422, %v1531
        %v1541 = vadd.f32 %v1423, %v1533
        %v1542 = vadd.f32 %v1424, %v1535
        %v1543 = vadd.f32 %v1425, %v1534
        %s1544 = sld [smem:[#allocation3 + $0x85]]
        %v1545 = vstv %s1544
        %v1546 = vsub.f32 %v1513, %v1545
        %v1547 = vsub.f32 %v1218, %v1545
        %v1548 = vsub.f32 %v1219, %v1545
        %v1549 = vsub.f32 %v1514, %v1545
        %v1550 = vand.u32 2147483647, %v1546
        %v1551 = vand.u32 2147483647, %v1547
        %v1552 = vand.u32 2147483647, %v1548
        %v1553 = vand.u32 2147483647, %v1549
        %v1558 = vrot.slane %v1550, 1
        %v1559 = vrot.slane %v1551, 1
        %v1560 = vsel %vm371, %v1558, %v1559
        %v1561 = vrot.slane %v1552, 1
        %v1562 = vsel %vm371, %v1559, %v1561
        %v1563 = vrot.slane %v1553, 1
        %v1564 = vsel %vm371, %v1561, %v1563
        %v1569 = vadd.f32 %v1451, %v1560
        %v1570 = vadd.f32 %v1452, %v1562
        %v1571 = vadd.f32 %v1453, %v1564
        %v1572 = vadd.f32 %v1454, %v1563
        %s1573 = sld [smem:[#allocation3 + $0x105]]
        %v1574 = vstv %s1573
        %v1575 = vsub.f32 %v1513, %v1574
        %v1576 = vsub.f32 %v1218, %v1574
        %v1577 = vsub.f32 %v1219, %v1574
        %v1578 = vsub.f32 %v1514, %v1574
        %v1579 = vand.u32 2147483647, %v1575
        %v1580 = vand.u32 2147483647, %v1576
        %v1581 = vand.u32 2147483647, %v1577
        %v1582 = vand.u32 2147483647, %v1578
        %v1587 = vrot.slane %v1579, 1
        %v1588 = vrot.slane %v1580, 1
        %v1589 = vsel %vm371, %v1587, %v1588
        %v1590 = vrot.slane %v1581, 1
        %v1591 = vsel %vm371, %v1588, %v1590
        %v1592 = vrot.slane %v1582, 1
        %v1593 = vsel %vm371, %v1590, %v1592
        %v1598 = vadd.f32 %v1480, %v1589
        %v1599 = vadd.f32 %v1481, %v1591
        %v1600 = vadd.f32 %v1482, %v1593
        %v1601 = vadd.f32 %v1483, %v1592
        %s1602 = sld [smem:[#allocation3 + $0x185]]
        %v1603 = vstv %s1602
        %v1604 = vsub.f32 %v1513, %v1603
        %v1605 = vsub.f32 %v1218, %v1603
        %v1606 = vsub.f32 %v1219, %v1603
        %v1607 = vsub.f32 %v1514, %v1603
        %v1608 = vand.u32 2147483647, %v1604
        %v1609 = vand.u32 2147483647, %v1605
        %v1610 = vand.u32 2147483647, %v1606
        %v1611 = vand.u32 2147483647, %v1607
        %v1616 = vrot.slane %v1608, 1
        %v1617 = vrot.slane %v1609, 1
        %v1618 = vsel %vm371, %v1616, %v1617
        %v1619 = vrot.slane %v1610, 1
        %v1620 = vsel %vm371, %v1617, %v1619
        %v1621 = vrot.slane %v1611, 1
        %v1622 = vsel %vm371, %v1619, %v1621
        %v1627 = vadd.f32 %v1509, %v1618
        %v1628 = vadd.f32 %v1510, %v1620
        %v1629 = vadd.f32 %v1511, %v1622
        %v1630 = vadd.f32 %v1512, %v1621
        %v1631 = vld [vmem:[%s177 + $0x8] sm:$0xfc]
        %v1632 = vld [vmem:[%s177 + $0x38] sm:$0x3f]
        %s1633 = sld [smem:[#allocation3 + $0x6]]
        %v1634 = vstv %s1633
        %v1635 = vsub.f32 %v1631, %v1634
        %v1636 = vsub.f32 %v1114, %v1634
        %v1637 = vsub.f32 %v1115, %v1634
        %v1638 = vsub.f32 %v1632, %v1634
        %v1639 = vand.u32 2147483647, %v1635
        %v1640 = vand.u32 2147483647, %v1636
        %v1641 = vand.u32 2147483647, %v1637
        %v1642 = vand.u32 2147483647, %v1638
        %v1647 = vrot.slane %v1639, 2
        %v1648 = vrot.slane %v1640, 2
        %v1649 = vsel %vm726, %v1647, %v1648
        %v1650 = vrot.slane %v1641, 2
        %v1651 = vsel %vm726, %v1648, %v1650
        %v1652 = vrot.slane %v1642, 2
        %v1653 = vsel %vm726, %v1650, %v1652
        %v1658 = vadd.f32 %v1540, %v1649
        %v1659 = vadd.f32 %v1541, %v1651
        %v1660 = vadd.f32 %v1542, %v1653
        %v1661 = vadd.f32 %v1543, %v1652
        %s1662 = sld [smem:[#allocation3 + $0x86]]
        %v1663 = vstv %s1662
        %v1664 = vsub.f32 %v1631, %v1663
        %v1665 = vsub.f32 %v1114, %v1663
        %v1666 = vsub.f32 %v1115, %v1663
        %v1667 = vsub.f32 %v1632, %v1663
        %v1668 = vand.u32 2147483647, %v1664
        %v1669 = vand.u32 2147483647, %v1665
        %v1670 = vand.u32 2147483647, %v1666
        %v1671 = vand.u32 2147483647, %v1667
        %v1676 = vrot.slane %v1668, 2
        %v1677 = vrot.slane %v1669, 2
        %v1678 = vsel %vm726, %v1676, %v1677
        %v1679 = vrot.slane %v1670, 2
        %v1680 = vsel %vm726, %v1677, %v1679
        %v1681 = vrot.slane %v1671, 2
        %v1682 = vsel %vm726, %v1679, %v1681
        %v1687 = vadd.f32 %v1569, %v1678
        %v1688 = vadd.f32 %v1570, %v1680
        %v1689 = vadd.f32 %v1571, %v1682
        %v1690 = vadd.f32 %v1572, %v1681
        %s1691 = sld [smem:[#allocation3 + $0x106]]
        %v1692 = vstv %s1691
        %v1693 = vsub.f32 %v1631, %v1692
        %v1694 = vsub.f32 %v1114, %v1692
        %v1695 = vsub.f32 %v1115, %v1692
        %v1696 = vsub.f32 %v1632, %v1692
        %v1697 = vand.u32 2147483647, %v1693
        %v1698 = vand.u32 2147483647, %v1694
        %v1699 = vand.u32 2147483647, %v1695
        %v1700 = vand.u32 2147483647, %v1696
        %v1705 = vrot.slane %v1697, 2
        %v1706 = vrot.slane %v1698, 2
        %v1707 = vsel %vm726, %v1705, %v1706
        %v1708 = vrot.slane %v1699, 2
        %v1709 = vsel %vm726, %v1706, %v1708
        %v1710 = vrot.slane %v1700, 2
        %v1711 = vsel %vm726, %v1708, %v1710
        %v1716 = vadd.f32 %v1598, %v1707
        %v1717 = vadd.f32 %v1599, %v1709
        %v1718 = vadd.f32 %v1600, %v1711
        %v1719 = vadd.f32 %v1601, %v1710
        %s1720 = sld [smem:[#allocation3 + $0x186]]
        %v1721 = vstv %s1720
        %v1722 = vsub.f32 %v1631, %v1721
        %v1723 = vsub.f32 %v1114, %v1721
        %v1724 = vsub.f32 %v1115, %v1721
        %v1725 = vsub.f32 %v1632, %v1721
        %v1726 = vand.u32 2147483647, %v1722
        %v1727 = vand.u32 2147483647, %v1723
        %v1728 = vand.u32 2147483647, %v1724
        %v1729 = vand.u32 2147483647, %v1725
        %v1734 = vrot.slane %v1726, 2
        %v1735 = vrot.slane %v1727, 2
        %v1736 = vsel %vm726, %v1734, %v1735
        %v1737 = vrot.slane %v1728, 2
        %v1738 = vsel %vm726, %v1735, %v1737
        %v1739 = vrot.slane %v1729, 2
        %v1740 = vsel %vm726, %v1737, %v1739
        %v1745 = vadd.f32 %v1627, %v1736
        %v1746 = vadd.f32 %v1628, %v1738
        %v1747 = vadd.f32 %v1629, %v1740
        %v1748 = vadd.f32 %v1630, %v1739
        %v1749 = vld [vmem:[%s233 + $0x8] sm:$0xfc]
        %v1750 = vld [vmem:[%s233 + $0x38] sm:$0x3f]
        %s1751 = sld [smem:[#allocation3 + $0x7]]
        %v1752 = vstv %s1751
        %v1753 = vsub.f32 %v1749, %v1752
        %v1754 = vsub.f32 %v1158, %v1752
        %v1755 = vsub.f32 %v1159, %v1752
        %v1756 = vsub.f32 %v1750, %v1752
        %v1757 = vand.u32 2147483647, %v1753
        %v1758 = vand.u32 2147483647, %v1754
        %v1759 = vand.u32 2147483647, %v1755
        %v1760 = vand.u32 2147483647, %v1756
        %v1765 = vrot.slane %v1757, 2
        %v1766 = vrot.slane %v1758, 2
        %v1767 = vsel %vm726, %v1765, %v1766
        %v1768 = vrot.slane %v1759, 2
        %v1769 = vsel %vm726, %v1766, %v1768
        %v1770 = vrot.slane %v1760, 2
        %v1771 = vsel %vm726, %v1768, %v1770
        %v1776 = vadd.f32 %v1658, %v1767
        %v1777 = vadd.f32 %v1659, %v1769
        %v1778 = vadd.f32 %v1660, %v1771
        %v1779 = vadd.f32 %v1661, %v1770
        %s1780 = sld [smem:[#allocation3 + $0x87]]
        %v1781 = vstv %s1780
        %v1782 = vsub.f32 %v1749, %v1781
        %v1783 = vsub.f32 %v1158, %v1781
        %v1784 = vsub.f32 %v1159, %v1781
        %v1785 = vsub.f32 %v1750, %v1781
        %v1786 = vand.u32 2147483647, %v1782
        %v1787 = vand.u32 2147483647, %v1783
        %v1788 = vand.u32 2147483647, %v1784
        %v1789 = vand.u32 2147483647, %v1785
        %v1794 = vrot.slane %v1786, 2
        %v1795 = vrot.slane %v1787, 2
        %v1796 = vsel %vm726, %v1794, %v1795
        %v1797 = vrot.slane %v1788, 2
        %v1798 = vsel %vm726, %v1795, %v1797
        %v1799 = vrot.slane %v1789, 2
        %v1800 = vsel %vm726, %v1797, %v1799
        %v1805 = vadd.f32 %v1687, %v1796
        %v1806 = vadd.f32 %v1688, %v1798
        %v1807 = vadd.f32 %v1689, %v1800
        %v1808 = vadd.f32 %v1690, %v1799
        %s1809 = sld [smem:[#allocation3 + $0x107]]
        %v1810 = vstv %s1809
        %v1811 = vsub.f32 %v1749, %v1810
        %v1812 = vsub.f32 %v1158, %v1810
        %v1813 = vsub.f32 %v1159, %v1810
        %v1814 = vsub.f32 %v1750, %v1810
        %v1815 = vand.u32 2147483647, %v1811
        %v1816 = vand.u32 2147483647, %v1812
        %v1817 = vand.u32 2147483647, %v1813
        %v1818 = vand.u32 2147483647, %v1814
        %v1823 = vrot.slane %v1815, 2
        %v1824 = vrot.slane %v1816, 2
        %v1825 = vsel %vm726, %v1823, %v1824
        %v1826 = vrot.slane %v1817, 2
        %v1827 = vsel %vm726, %v1824, %v1826
        %v1828 = vrot.slane %v1818, 2
        %v1829 = vsel %vm726, %v1826, %v1828
        %v1834 = vadd.f32 %v1716, %v1825
        %v1835 = vadd.f32 %v1717, %v1827
        %v1836 = vadd.f32 %v1718, %v1829
        %v1837 = vadd.f32 %v1719, %v1828
        %s1838 = sld [smem:[#allocation3 + $0x187]]
        %v1839 = vstv %s1838
        %v1840 = vsub.f32 %v1749, %v1839
        %v1841 = vsub.f32 %v1158, %v1839
        %v1842 = vsub.f32 %v1159, %v1839
        %v1843 = vsub.f32 %v1750, %v1839
        %v1844 = vand.u32 2147483647, %v1840
        %v1845 = vand.u32 2147483647, %v1841
        %v1846 = vand.u32 2147483647, %v1842
        %v1847 = vand.u32 2147483647, %v1843
        %v1852 = vrot.slane %v1844, 2
        %v1853 = vrot.slane %v1845, 2
        %v1854 = vsel %vm726, %v1852, %v1853
        %v1855 = vrot.slane %v1846, 2
        %v1856 = vsel %vm726, %v1853, %v1855
        %v1857 = vrot.slane %v1847, 2
        %v1858 = vsel %vm726, %v1855, %v1857
        %v1863 = vadd.f32 %v1745, %v1854
        %v1864 = vadd.f32 %v1746, %v1856
        %v1865 = vadd.f32 %v1747, %v1858
        %v1866 = vadd.f32 %v1748, %v1857
        %v1867 = vld [vmem:[%s294 + $0x8] sm:$0xfc]
        %v1868 = vld [vmem:[%s294 + $0x38] sm:$0x3f]
        %s1869 = sld [smem:[#allocation3 + $0x8]]
        %v1870 = vstv %s1869
        %v1871 = vsub.f32 %v1867, %v1870
        %v1872 = vsub.f32 %v1218, %v1870
        %v1873 = vsub.f32 %v1219, %v1870
        %v1874 = vsub.f32 %v1868, %v1870
        %v1875 = vand.u32 2147483647, %v1871
        %v1876 = vand.u32 2147483647, %v1872
        %v1877 = vand.u32 2147483647, %v1873
        %v1878 = vand.u32 2147483647, %v1874
        %v1883 = vrot.slane %v1875, 2
        %v1884 = vrot.slane %v1876, 2
        %v1885 = vsel %vm726, %v1883, %v1884
        %v1886 = vrot.slane %v1877, 2
        %v1887 = vsel %vm726, %v1884, %v1886
        %v1888 = vrot.slane %v1878, 2
        %v1889 = vsel %vm726, %v1886, %v1888
        %v1894 = vadd.f32 %v1776, %v1885
        %v1895 = vadd.f32 %v1777, %v1887
        %v1896 = vadd.f32 %v1778, %v1889
        %v1897 = vadd.f32 %v1779, %v1888
        %s1898 = sld [smem:[#allocation3 + $0x88]]
        %v1899 = vstv %s1898
        %v1900 = vsub.f32 %v1867, %v1899
        %v1901 = vsub.f32 %v1218, %v1899
        %v1902 = vsub.f32 %v1219, %v1899
        %v1903 = vsub.f32 %v1868, %v1899
        %v1904 = vand.u32 2147483647, %v1900
        %v1905 = vand.u32 2147483647, %v1901
        %v1906 = vand.u32 2147483647, %v1902
        %v1907 = vand.u32 2147483647, %v1903
        %v1912 = vrot.slane %v1904, 2
        %v1913 = vrot.slane %v1905, 2
        %v1914 = vsel %vm726, %v1912, %v1913
        %v1915 = vrot.slane %v1906, 2
        %v1916 = vsel %vm726, %v1913, %v1915
        %v1917 = vrot.slane %v1907, 2
        %v1918 = vsel %vm726, %v1915, %v1917
        %v1923 = vadd.f32 %v1805, %v1914
        %v1924 = vadd.f32 %v1806, %v1916
        %v1925 = vadd.f32 %v1807, %v1918
        %v1926 = vadd.f32 %v1808, %v1917
        %s1927 = sld [smem:[#allocation3 + $0x108]]
        %v1928 = vstv %s1927
        %v1929 = vsub.f32 %v1867, %v1928
        %v1930 = vsub.f32 %v1218, %v1928
        %v1931 = vsub.f32 %v1219, %v1928
        %v1932 = vsub.f32 %v1868, %v1928
        %v1933 = vand.u32 2147483647, %v1929
        %v1934 = vand.u32 2147483647, %v1930
        %v1935 = vand.u32 2147483647, %v1931
        %v1936 = vand.u32 2147483647, %v1932
        %v1941 = vrot.slane %v1933, 2
        %v1942 = vrot.slane %v1934, 2
        %v1943 = vsel %vm726, %v1941, %v1942
        %v1944 = vrot.slane %v1935, 2
        %v1945 = vsel %vm726, %v1942, %v1944
        %v1946 = vrot.slane %v1936, 2
        %v1947 = vsel %vm726, %v1944, %v1946
        %v1952 = vadd.f32 %v1834, %v1943
        %v1953 = vadd.f32 %v1835, %v1945
        %v1954 = vadd.f32 %v1836, %v1947
        %v1955 = vadd.f32 %v1837, %v1946
        %s1956 = sld [smem:[#allocation3 + $0x188]]
        %v1957 = vstv %s1956
        %v1958 = vsub.f32 %v1867, %v1957
        %v1959 = vsub.f32 %v1218, %v1957
        %v1960 = vsub.f32 %v1219, %v1957
        %v1961 = vsub.f32 %v1868, %v1957
        %v1962 = vand.u32 2147483647, %v1958
        %v1963 = vand.u32 2147483647, %v1959
        %v1964 = vand.u32 2147483647, %v1960
        %v1965 = vand.u32 2147483647, %v1961
        %v1970 = vrot.slane %v1962, 2
        %v1971 = vrot.slane %v1963, 2
        %v1972 = vsel %vm726, %v1970, %v1971
        %v1973 = vrot.slane %v1964, 2
        %v1974 = vsel %vm726, %v1971, %v1973
        %v1975 = vrot.slane %v1965, 2
        %v1976 = vsel %vm726, %v1973, %v1975
        %v1981 = vadd.f32 %v1863, %v1972
        %v1982 = vadd.f32 %v1864, %v1974
        %v1983 = vadd.f32 %v1865, %v1976
        %v1984 = vadd.f32 %v1866, %v1975
        %v1985 = vmul.f32 %v1894, 0.11111111
        %v1986 = vmul.f32 %v1895, 0.11111111
        %v1987 = vmul.f32 %v1896, 0.11111111
        %v1988 = vmul.f32 %v1897, 0.11111111
        %v1989 = vsub.f32 1.0, %v1985
        %v1990 = vsub.f32 1.0, %v1986
        %v1991 = vsub.f32 1.0, %v1987
        %v1992 = vsub.f32 1.0, %v1988
        %1993 = vst [vmem:[#allocation2 + $0x8] sm:$0xff] %v1989
        %1994 = vst [vmem:[#allocation2 + $0x18] sm:$0xff] %v1990
        %1995 = vst [vmem:[#allocation2 + $0x28] sm:$0xff] %v1991
        %1996 = vst [vmem:[#allocation2 + $0x38] sm:$0xf] %v1992
        %v1997 = vmul.f32 %v1923, 0.11111111
        %v1998 = vmul.f32 %v1924, 0.11111111
        %v1999 = vmul.f32 %v1925, 0.11111111
        %v2000 = vmul.f32 %v1926, 0.11111111
        %v2001 = vsub.f32 1.0, %v1997
        %v2002 = vsub.f32 1.0, %v1998
        %v2003 = vsub.f32 1.0, %v1999
        %v2004 = vsub.f32 1.0, %v2000
        %2005 = vst [vmem:[#allocation2 + $0x48] sm:$0xff] %v2001
        %2006 = vst [vmem:[#allocation2 + $0x58] sm:$0xff] %v2002
        %2007 = vst [vmem:[#allocation2 + $0x68] sm:$0xff] %v2003
        %2008 = vst [vmem:[#allocation2 + $0x78] sm:$0xf] %v2004
        %v2009 = vmul.f32 %v1952, 0.11111111
        %v2010 = vmul.f32 %v1953, 0.11111111
        %v2011 = vmul.f32 %v1954, 0.11111111
        %v2012 = vmul.f32 %v1955, 0.11111111
        %v2013 = vsub.f32 1.0, %v2009
        %v2014 = vsub.f32 1.0, %v2010
        %v2015 = vsub.f32 1.0, %v2011
        %v2016 = vsub.f32 1.0, %v2012
        %2017 = vst [vmem:[#allocation2 + $0x88] sm:$0xff] %v2013
        %2018 = vst [vmem:[#allocation2 + $0x98] sm:$0xff] %v2014
        %2019 = vst [vmem:[#allocation2 + $0xa8] sm:$0xff] %v2015
        %2020 = vst [vmem:[#allocation2 + $0xb8] sm:$0xf] %v2016
        %v2021 = vmul.f32 %v1981, 0.11111111
        %v2022 = vmul.f32 %v1982, 0.11111111
        %v2023 = vmul.f32 %v1983, 0.11111111
        %v2024 = vmul.f32 %v1984, 0.11111111
        %v2025 = vsub.f32 1.0, %v2021
        %v2026 = vsub.f32 1.0, %v2022
        %v2027 = vsub.f32 1.0, %v2023
        %v2028 = vsub.f32 1.0, %v2024
        %2029 = vst [vmem:[#allocation2 + $0xc8] sm:$0xff] %v2025
        %2030 = vst [vmem:[#allocation2 + $0xd8] sm:$0xff] %v2026
        %2031 = vst [vmem:[#allocation2 + $0xe8] sm:$0xff] %v2027
        %2032 = vst [vmem:[#allocation2 + $0xf8] sm:$0xf] %v2028
        %v2033 = vld [vmem:[%s2] sm:$0xff]
        %v2034 = vld [vmem:[%s2 + $0x8] sm:$0xff]
        %v2035 = vld [vmem:[%s2 + $0x10] sm:$0xff]
        %v2036 = vld [vmem:[%s2 + $0x18] sm:$0xf]
        %v2037 = vld [vmem:[#allocation2] sm:$0xff]
        %v2038 = vld [vmem:[#allocation2 + $0x8] sm:$0xff]
        %v2039 = vld [vmem:[#allocation2 + $0x10] sm:$0xff]
        %v2040 = vld [vmem:[#allocation2 + $0x18] sm:$0xff]
        %v2041 = vld [vmem:[#allocation2 + $0x20] sm:$0xff]
        %v2042 = vld [vmem:[#allocation2 + $0x28] sm:$0xff]
        %v2043 = vld [vmem:[#allocation2 + $0x30] sm:$0xff]
        %v2044 = vld [vmem:[#allocation2 + $0x38] sm:$0xff]
        %v2045 = vld [vmem:[#allocation2 + $0x40] sm:$0xff]
        %v2046 = vld [vmem:[#allocation2 + $0x48] sm:$0xff]
        %v2047 = vld [vmem:[#allocation2 + $0x50] sm:$0xff]
        %v2048 = vld [vmem:[#allocation2 + $0x58] sm:$0xff]
        %v2049 = vld [vmem:[#allocation2 + $0x60] sm:$0xff]
        %v2050 = vld [vmem:[#allocation2 + $0x68] sm:$0xff]
        %v2051 = vld [vmem:[#allocation2 + $0x70] sm:$0xff]
        %v2052 = vld [vmem:[#allocation2 + $0x78] sm:$0xff]
        %v2053 = vld [vmem:[#allocation2 + $0x80] sm:$0xff]
        %v2054 = vld [vmem:[#allocation2 + $0x88] sm:$0xff]
        %v2055 = vld [vmem:[#allocation2 + $0x90] sm:$0xff]
        %v2056 = vld [vmem:[#allocation2 + $0x98] sm:$0xff]
        %v2057 = vld [vmem:[#allocation2 + $0xa0] sm:$0xff]
        %v2058 = vld [vmem:[#allocation2 + $0xa8] sm:$0xff]
        %v2059 = vld [vmem:[#allocation2 + $0xb0] sm:$0xff]
        %v2060 = vld [vmem:[#allocation2 + $0xb8] sm:$0xff]
        %v2061 = vld [vmem:[#allocation2 + $0xc0] sm:$0xff]
        %v2062 = vld [vmem:[#allocation2 + $0xc8] sm:$0xff]
        %v2063 = vld [vmem:[#allocation2 + $0xd0] sm:$0xff]
        %v2064 = vld [vmem:[#allocation2 + $0xd8] sm:$0xff]
        %v2065 = vld [vmem:[#allocation2 + $0xe0] sm:$0xff]
        %v2066 = vld [vmem:[#allocation2 + $0xe8] sm:$0xff]
        %v2067 = vld [vmem:[#allocation2 + $0xf0] sm:$0xff]
        %v2068 = vld [vmem:[#allocation2 + $0xf8] sm:$0xff]
        %2069 = vmatpush.msra.mxu0 %v2067
        %2070 = vmatpush.msra.mxu0 %v2065
        %2071 = vmatpush.msra.mxu0 %v2063
        %2072 = vmatpush.msra.mxu0 %v2061
        %2073 = vmatpush.msra.mxu0 %v2059
        %2074 = vmatpush.msra.mxu0 %v2057
        %2075 = vmatpush.msra.mxu0 %v2055
        %2076 = vmatpush.msra.mxu0 %v2053
        %2077 = vmatpush.msra.mxu0 %v2051
        %2078 = vmatpush.msra.mxu0 %v2049
        %2079 = vmatpush.msra.mxu0 %v2047
        %2080 = vmatpush.msra.mxu0 %v2045
        %2081 = vmatpush.msra.mxu0 %v2043
        %2082 = vmatpush.msra.mxu0 %v2041
        %2083 = vmatpush.msra.mxu0 %v2039
        %2084 = vmatpush.msra.mxu0 %v2037
        %2085 = vmatmul.f32.gmra.mxu0 %v2033
        %v2086 = vpop.f32.mrf.mxu0
        %v2087 = vadd.f32 0.0, %v2086
        %2088 = vmatmul.f32.gmra.mxu0 %v2034
        %v2089 = vpop.f32.mrf.mxu0
        %v2090 = vadd.f32 0.0, %v2089
        %2091 = vmatmul.f32.gmra.mxu0 %v2035
        %v2092 = vpop.f32.mrf.mxu0
        %v2093 = vadd.f32 0.0, %v2092
        %2094 = vmatmul.f32.gmra.mxu0 %v2036
        %v2095 = vpop.f32.mrf.mxu0
        %v2096 = vadd.f32 0.0, %v2095
        %2097 = vdwg.mxu0
        %2098 = vmatpush.msra.mxu0 %v2068
        %2099 = vmatpush.msra.mxu0 %v2066
        %2100 = vmatpush.msra.mxu0 %v2064
        %2101 = vmatpush.msra.mxu0 %v2062
        %2102 = vmatpush.msra.mxu0 %v2060
        %2103 = vmatpush.msra.mxu0 %v2058
        %2104 = vmatpush.msra.mxu0 %v2056
        %2105 = vmatpush.msra.mxu0 %v2054
        %2106 = vmatpush.msra.mxu0 %v2052
        %2107 = vmatpush.msra.mxu0 %v2050
        %2108 = vmatpush.msra.mxu0 %v2048
        %2109 = vmatpush.msra.mxu0 %v2046
        %2110 = vmatpush.msra.mxu0 %v2044
        %2111 = vmatpush.msra.mxu0 %v2042
        %2112 = vmatpush.msra.mxu0 %v2040
        %2113 = vmatpush.msra.mxu0 %v2038
        %2114 = vmatmul.f32.gmra.mxu0 %v2033
        %v2115 = vpop.f32.mrf.mxu0
        %v2116 = vadd.f32 0.0, %v2115
        %2117 = vmatmul.f32.gmra.mxu0 %v2034
        %v2118 = vpop.f32.mrf.mxu0
        %v2119 = vadd.f32 0.0, %v2118
        %2120 = vmatmul.f32.gmra.mxu0 %v2035
        %v2121 = vpop.f32.mrf.mxu0
        %v2122 = vadd.f32 0.0, %v2121
        %2123 = vmatmul.f32.gmra.mxu0 %v2036
        %v2124 = vpop.f32.mrf.mxu0
        %v2125 = vadd.f32 0.0, %v2124
        %2126 = vdwg.mxu0
        %v2127 = vmul.f32 %v2087, 0.25
        %v2128 = vmul.f32 %v2116, 0.25
        %v2129 = vmul.f32 %v2090, 0.25
        %v2130 = vmul.f32 %v2119, 0.25
        %v2131 = vmul.f32 %v2093, 0.25
        %v2132 = vmul.f32 %v2122, 0.25
        %v2133 = vmul.f32 %v2096, 0.25
        %v2134 = vmul.f32 %v2125, 0.25
        %v2135 = vlaneseq
        %v2136 = vand.u32 %v2135, 127
        %v2137 = vmul.f32 %v2127, 10.0
        %v2138 = vmul.f32 %v2129, 10.0
        %v2139 = vmul.f32 %v2131, 10.0
        %v2140 = vmul.f32 %v2133, 10.0
        %vm2141 = vcmask 228352
        %v2142 = vsel %vm2141, %v2137, -inf
        %v2143 = vsel %vm2141, %v2138, -inf
        %v2144 = vsel %vm2141, %v2139, -inf
        %vm2145 = vcmask 224256
        %v2146 = vsel %vm2145, %v2140, -inf
        %v2147 = vmax.f32 %v2142, %v2143
        %v2148 = vmax.f32 %v2144, %v2146
        %v2149 = vmax.f32 %v2147, %v2148
        %2150 = vmax.xlane.f32.xlu0 %v2149
        %v2151 = vpop.xlane.xlu0 %2150
        %v2152 = vrot.slane %v2151, 4
        %v2153 = vmax.f32 %v2151, %v2152
        %v2154 = vrot.slane %v2153, 2
        %v2155 = vmax.f32 %v2153, %v2154
        %v2156 = vrot.slane %v2155, 1
        %v2157 = vmax.f32 %v2155, %v2156
        %s2158 = vtos %v2157
        %v2159 = vstv %s2158
        %v2160 = vsub.f32 %v2137, %v2159
        %v2161 = vsub.f32 %v2138, %v2159
        %v2162 = vsub.f32 %v2139, %v2159
        %v2163 = vsub.f32 %v2140, %v2159
        %v2164 = vmul.f32 %v2160, 1.442695
        %v2165 = vpow.pop %v2164
        %v2166 = vmul.f32 %v2161, 1.442695
        %v2167 = vpow.pop %v2166
        %v2168 = vmul.f32 %v2162, 1.442695
        %v2169 = vpow.pop %v2168
        %v2170 = vmul.f32 %v2163, 1.442695
        %v2171 = vpow.pop %v2170
        %v2172 = vmul.f32 %v2165, %v2127
        %v2173 = vmul.f32 %v2167, %v2129
        %v2174 = vmul.f32 %v2169, %v2131
        %v2175 = vmul.f32 %v2171, %v2133
        %v2176 = vsel %vm2141, %v2172, 0.0
        %v2177 = vsel %vm2141, %v2173, 0.0
        %v2178 = vadd.f32 %v2176, %v2177
        %v2179 = vsel %vm2141, %v2174, 0.0
        %v2180 = vadd.f32 %v2178, %v2179
        %v2181 = vsel %vm2145, %v2175, 0.0
        %v2182 = vadd.f32 %v2180, %v2181
        %2183 = vadd.xlane.f32.xlu0 %v2182
        %v2184 = vpop.xlane.xlu0 %2183
        %v2185 = vrot.slane %v2184, 4
        %v2186 = vadd.f32 %v2184, %v2185
        %v2187 = vrot.slane %v2186, 2
        %v2188 = vadd.f32 %v2186, %v2187
        %v2189 = vrot.slane %v2188, 1
        %v2190 = vadd.f32 %v2188, %v2189
        %s2191 = vtos %v2190
        %v2192 = vsel %vm2141, %v2165, 0.0
        %v2193 = vsel %vm2141, %v2167, 0.0
        %v2194 = vadd.f32 %v2192, %v2193
        %v2195 = vsel %vm2141, %v2169, 0.0
        %v2196 = vadd.f32 %v2194, %v2195
        %v2197 = vsel %vm2145, %v2171, 0.0
        %v2198 = vadd.f32 %v2196, %v2197
        %2199 = vadd.xlane.f32.xlu0 %v2198
        %v2200 = vpop.xlane.xlu0 %2199
        %v2201 = vrot.slane %v2200, 4
        %v2202 = vadd.f32 %v2200, %v2201
        %v2203 = vrot.slane %v2202, 2
        %v2204 = vadd.f32 %v2202, %v2203
        %v2205 = vrot.slane %v2204, 1
        %v2206 = vadd.f32 %v2204, %v2205
        %s2207 = vtos %v2206
        %v2208 = vstv %s2207
        %v2209 = vrcp.pop %v2208
        %v2210 = vmul.f32 %v2208, %v2209
        %v2211 = vsub.f32 1.0, %v2210
        %v2212 = vmul.f32 %v2209, %v2211
        %v2213 = vadd.f32 %v2209, %v2212
        %vm2214 = vweird.f32 %v2208
        %vm2215 = vweird.f32 %v2209
        %vm2216 = vmor %vm2214, %vm2215
        %v2217 = vsel %vm2216, %v2209, %v2213
        %v2218 = vand.u32 2147483647, %v2208
        %vm2219 = vcmp.eq.f32.partialorder %v2218, 8.507059e+37
        %v2220 = vand.u32 %v2208, 2147483648
        %v2221 = vor.u32 1.1754944e-38, %v2220
        %v2222 = vsel %vm2219, %v2221, %v2217
        %s2223 = vtos %v2222
        %s2224 = smul.f32 %s2191, %s2223
        %vm2225 = vcmp.eq.s32.totalorder %v2136, 0
        %v2226 = vstv %s2224
        %v2227 = vsel %vm2225, %v2226, 0.0
        %vm2228 = vcmask 490752
        %v2229 = vsel %vm2228, %v2137, -inf
        %v2230 = vsel %vm2228, %v2138, -inf
        %v2231 = vsel %vm2228, %v2139, -inf
        %vm2232 = vcmask 486656
        %v2233 = vsel %vm2232, %v2140, -inf
        %v2234 = vmax.f32 %v2229, %v2230
        %v2235 = vmax.f32 %v2231, %v2233
        %v2236 = vmax.f32 %v2234, %v2235
        %2237 = vmax.xlane.f32.xlu0 %v2236
        %v2238 = vpop.xlane.xlu0 %2237
        %v2239 = vrot.slane %v2238, 4
        %v2240 = vmax.f32 %v2238, %v2239
        %v2241 = vrot.slane %v2240, 2
        %v2242 = vmax.f32 %v2240, %v2241
        %v2243 = vrot.slane %v2242, 1
        %v2244 = vmax.f32 %v2242, %v2243
        %s2245 = vtos %v2244
        %v2246 = vstv %s2245
        %v2247 = vsub.f32 %v2137, %v2246
        %v2248 = vsub.f32 %v2138, %v2246
        %v2249 = vsub.f32 %v2139, %v2246
        %v2250 = vsub.f32 %v2140, %v2246
        %v2251 = vmul.f32 %v2247, 1.442695
        %v2252 = vpow.pop %v2251
        %v2253 = vmul.f32 %v2248, 1.442695
        %v2254 = vpow.pop %v2253
        %v2255 = vmul.f32 %v2249, 1.442695
        %v2256 = vpow.pop %v2255
        %v2257 = vmul.f32 %v2250, 1.442695
        %v2258 = vpow.pop %v2257
        %v2259 = vmul.f32 %v2252, %v2127
        %v2260 = vmul.f32 %v2254, %v2129
        %v2261 = vmul.f32 %v2256, %v2131
        %v2262 = vmul.f32 %v2258, %v2133
        %2267 = vrot.lane.b32.xlu0 %v2259, 96
        %v2268 = vpop.permute.xlu0 %2267
        %2269 = vrot.lane.b32.xlu0 %v2260, 96
        %v2270 = vpop.permute.xlu0 %2269
        %2271 = vrot.lane.b32.xlu0 %v2261, 96
        %v2272 = vpop.permute.xlu0 %2271
        %2273 = vrot.lane.b32.xlu0 %v2262, 96
        %v2274 = vpop.permute.xlu0 %2273
        %v2279 = vsel %vm2141, %v2268, 0.0
        %v2280 = vsel %vm2141, %v2270, 0.0
        %v2281 = vadd.f32 %v2279, %v2280
        %v2282 = vsel %vm2141, %v2272, 0.0
        %v2283 = vadd.f32 %v2281, %v2282
        %v2284 = vsel %vm2145, %v2274, 0.0
        %v2285 = vadd.f32 %v2283, %v2284
        %2286 = vadd.xlane.f32.xlu0 %v2285
        %v2287 = vpop.xlane.xlu0 %2286
        %v2288 = vrot.slane %v2287, 4
        %v2289 = vadd.f32 %v2287, %v2288
        %v2290 = vrot.slane %v2289, 2
        %v2291 = vadd.f32 %v2289, %v2290
        %v2292 = vrot.slane %v2291, 1
        %v2293 = vadd.f32 %v2291, %v2292
        %s2294 = vtos %v2293
        %2299 = vrot.lane.b32.xlu0 %v2252, 96
        %v2300 = vpop.permute.xlu0 %2299
        %2301 = vrot.lane.b32.xlu0 %v2254, 96
        %v2302 = vpop.permute.xlu0 %2301
        %2303 = vrot.lane.b32.xlu0 %v2256, 96
        %v2304 = vpop.permute.xlu0 %2303
        %2305 = vrot.lane.b32.xlu0 %v2258, 96
        %v2306 = vpop.permute.xlu0 %2305
        %v2311 = vsel %vm2141, %v2300, 0.0
        %v2312 = vsel %vm2141, %v2302, 0.0
        %v2313 = vadd.f32 %v2311, %v2312
        %v2314 = vsel %vm2141, %v2304, 0.0
        %v2315 = vadd.f32 %v2313, %v2314
        %v2316 = vsel %vm2145, %v2306, 0.0
        %v2317 = vadd.f32 %v2315, %v2316
        %2318 = vadd.xlane.f32.xlu0 %v2317
        %v2319 = vpop.xlane.xlu0 %2318
        %v2320 = vrot.slane %v2319, 4
        %v2321 = vadd.f32 %v2319, %v2320
        %v2322 = vrot.slane %v2321, 2
        %v2323 = vadd.f32 %v2321, %v2322
        %v2324 = vrot.slane %v2323, 1
        %v2325 = vadd.f32 %v2323, %v2324
        %s2326 = vtos %v2325
        %v2327 = vstv %s2326
        %v2328 = vrcp.pop %v2327
        %v2329 = vmul.f32 %v2327, %v2328
        %v2330 = vsub.f32 1.0, %v2329
        %v2331 = vmul.f32 %v2328, %v2330
        %v2332 = vadd.f32 %v2328, %v2331
        %vm2333 = vweird.f32 %v2327
        %vm2334 = vweird.f32 %v2328
        %vm2335 = vmor %vm2333, %vm2334
        %v2336 = vsel %vm2335, %v2328, %v2332
        %v2337 = vand.u32 2147483647, %v2327
        %vm2338 = vcmp.eq.f32.partialorder %v2337, 8.507059e+37
        %v2339 = vand.u32 %v2327, 2147483648
        %v2340 = vor.u32 1.1754944e-38, %v2339
        %v2341 = vsel %vm2338, %v2340, %v2336
        %s2342 = vtos %v2341
        %s2343 = smul.f32 %s2294, %s2342
        %vm2344 = vcmp.eq.s32.totalorder %v2136, 1
        %v2345 = vstv %s2343
        %v2346 = vsel %vm2344, %v2345, %v2227
        %vm2347 = vcmask 753152
        %v2348 = vsel %vm2347, %v2137, -inf
        %v2349 = vsel %vm2347, %v2138, -inf
        %v2350 = vsel %vm2347, %v2139, -inf
        %vm2351 = vcmask 749056
        %v2352 = vsel %vm2351, %v2140, -inf
        %v2353 = vmax.f32 %v2348, %v2349
        %v2354 = vmax.f32 %v2350, %v2352
        %v2355 = vmax.f32 %v2353, %v2354
        %2356 = vmax.xlane.f32.xlu0 %v2355
        %v2357 = vpop.xlane.xlu0 %2356
        %v2358 = vrot.slane %v2357, 4
        %v2359 = vmax.f32 %v2357, %v2358
        %v2360 = vrot.slane %v2359, 2
        %v2361 = vmax.f32 %v2359, %v2360
        %v2362 = vrot.slane %v2361, 1
        %v2363 = vmax.f32 %v2361, %v2362
        %s2364 = vtos %v2363
        %v2365 = vstv %s2364
        %v2366 = vsub.f32 %v2137, %v2365
        %v2367 = vsub.f32 %v2138, %v2365
        %v2368 = vsub.f32 %v2139, %v2365
        %v2369 = vsub.f32 %v2140, %v2365
        %v2370 = vmul.f32 %v2366, 1.442695
        %v2371 = vpow.pop %v2370
        %v2372 = vmul.f32 %v2367, 1.442695
        %v2373 = vpow.pop %v2372
        %v2374 = vmul.f32 %v2368, 1.442695
        %v2375 = vpow.pop %v2374
        %v2376 = vmul.f32 %v2369, 1.442695
        %v2377 = vpow.pop %v2376
        %v2378 = vmul.f32 %v2371, %v2127
        %v2379 = vmul.f32 %v2373, %v2129
        %v2380 = vmul.f32 %v2375, %v2131
        %v2381 = vmul.f32 %v2377, %v2133
        %2386 = vrot.lane.b32.xlu0 %v2378, 64
        %v2387 = vpop.permute.xlu0 %2386
        %2388 = vrot.lane.b32.xlu0 %v2379, 64
        %v2389 = vpop.permute.xlu0 %2388
        %2390 = vrot.lane.b32.xlu0 %v2380, 64
        %v2391 = vpop.permute.xlu0 %2390
        %2392 = vrot.lane.b32.xlu0 %v2381, 64
        %v2393 = vpop.permute.xlu0 %2392
        %v2398 = vsel %vm2141, %v2387, 0.0
        %v2399 = vsel %vm2141, %v2389, 0.0
        %v2400 = vadd.f32 %v2398, %v2399
        %v2401 = vsel %vm2141, %v2391, 0.0
        %v2402 = vadd.f32 %v2400, %v2401
        %v2403 = vsel %vm2145, %v2393, 0.0
        %v2404 = vadd.f32 %v2402, %v2403
        %2405 = vadd.xlane.f32.xlu0 %v2404
        %v2406 = vpop.xlane.xlu0 %2405
        %v2407 = vrot.slane %v2406, 4
        %v2408 = vadd.f32 %v2406, %v2407
        %v2409 = vrot.slane %v2408, 2
        %v2410 = vadd.f32 %v2408, %v2409
        %v2411 = vrot.slane %v2410, 1
        %v2412 = vadd.f32 %v2410, %v2411
        %s2413 = vtos %v2412
        %2418 = vrot.lane.b32.xlu0 %v2371, 64
        %v2419 = vpop.permute.xlu0 %2418
        %2420 = vrot.lane.b32.xlu0 %v2373, 64
        %v2421 = vpop.permute.xlu0 %2420
        %2422 = vrot.lane.b32.xlu0 %v2375, 64
        %v2423 = vpop.permute.xlu0 %2422
        %2424 = vrot.lane.b32.xlu0 %v2377, 64
        %v2425 = vpop.permute.xlu0 %2424
        %v2430 = vsel %vm2141, %v2419, 0.0
        %v2431 = vsel %vm2141, %v2421, 0.0
        %v2432 = vadd.f32 %v2430, %v2431
        %v2433 = vsel %vm2141, %v2423, 0.0
        %v2434 = vadd.f32 %v2432, %v2433
        %v2435 = vsel %vm2145, %v2425, 0.0
        %v2436 = vadd.f32 %v2434, %v2435
        %2437 = vadd.xlane.f32.xlu0 %v2436
        %v2438 = vpop.xlane.xlu0 %2437
        %v2439 = vrot.slane %v2438, 4
        %v2440 = vadd.f32 %v2438, %v2439
        %v2441 = vrot.slane %v2440, 2
        %v2442 = vadd.f32 %v2440, %v2441
        %v2443 = vrot.slane %v2442, 1
        %v2444 = vadd.f32 %v2442, %v2443
        %s2445 = vtos %v2444
        %v2446 = vstv %s2445
        %v2447 = vrcp.pop %v2446
        %v2448 = vmul.f32 %v2446, %v2447
        %v2449 = vsub.f32 1.0, %v2448
        %v2450 = vmul.f32 %v2447, %v2449
        %v2451 = vadd.f32 %v2447, %v2450
        %vm2452 = vweird.f32 %v2446
        %vm2453 = vweird.f32 %v2447
        %vm2454 = vmor %vm2452, %vm2453
        %v2455 = vsel %vm2454, %v2447, %v2451
        %v2456 = vand.u32 2147483647, %v2446
        %vm2457 = vcmp.eq.f32.partialorder %v2456, 8.507059e+37
        %v2458 = vand.u32 %v2446, 2147483648
        %v2459 = vor.u32 1.1754944e-38, %v2458
        %v2460 = vsel %vm2457, %v2459, %v2455
        %s2461 = vtos %v2460
        %s2462 = smul.f32 %s2413, %s2461
        %vm2463 = vcmp.eq.s32.totalorder %v2136, 2
        %v2464 = vstv %s2462
        %v2465 = vsel %vm2463, %v2464, %v2346
        %vm2466 = vcmask 1015552
        %v2467 = vsel %vm2466, %v2137, -inf
        %v2468 = vsel %vm2466, %v2138, -inf
        %v2469 = vsel %vm2466, %v2139, -inf
        %vm2470 = vcmask 1011456
        %v2471 = vsel %vm2470, %v2140, -inf
        %v2472 = vmax.f32 %v2467, %v2468
        %v2473 = vmax.f32 %v2469, %v2471
        %v2474 = vmax.f32 %v2472, %v2473
        %2475 = vmax.xlane.f32.xlu0 %v2474
        %v2476 = vpop.xlane.xlu0 %2475
        %v2477 = vrot.slane %v2476, 4
        %v2478 = vmax.f32 %v2476, %v2477
        %v2479 = vrot.slane %v2478, 2
        %v2480 = vmax.f32 %v2478, %v2479
        %v2481 = vrot.slane %v2480, 1
        %v2482 = vmax.f32 %v2480, %v2481
        %s2483 = vtos %v2482
        %v2484 = vstv %s2483
        %v2485 = vsub.f32 %v2137, %v2484
        %v2486 = vsub.f32 %v2138, %v2484
        %v2487 = vsub.f32 %v2139, %v2484
        %v2488 = vsub.f32 %v2140, %v2484
        %v2489 = vmul.f32 %v2485, 1.442695
        %v2490 = vpow.pop %v2489
        %v2491 = vmul.f32 %v2486, 1.442695
        %v2492 = vpow.pop %v2491
        %v2493 = vmul.f32 %v2487, 1.442695
        %v2494 = vpow.pop %v2493
        %v2495 = vmul.f32 %v2488, 1.442695
        %v2496 = vpow.pop %v2495
        %v2497 = vmul.f32 %v2490, %v2127
        %v2498 = vmul.f32 %v2492, %v2129
        %v2499 = vmul.f32 %v2494, %v2131
        %v2500 = vmul.f32 %v2496, %v2133
        %2505 = vrot.lane.b32.xlu0 %v2497, 32
        %v2506 = vpop.permute.xlu0 %2505
        %2507 = vrot.lane.b32.xlu0 %v2498, 32
        %v2508 = vpop.permute.xlu0 %2507
        %2509 = vrot.lane.b32.xlu0 %v2499, 32
        %v2510 = vpop.permute.xlu0 %2509
        %2511 = vrot.lane.b32.xlu0 %v2500, 32
        %v2512 = vpop.permute.xlu0 %2511
        %v2517 = vsel %vm2141, %v2506, 0.0
        %v2518 = vsel %vm2141, %v2508, 0.0
        %v2519 = vadd.f32 %v2517, %v2518
        %v2520 = vsel %vm2141, %v2510, 0.0
        %v2521 = vadd.f32 %v2519, %v2520
        %v2522 = vsel %vm2145, %v2512, 0.0
        %v2523 = vadd.f32 %v2521, %v2522
        %2524 = vadd.xlane.f32.xlu0 %v2523
        %v2525 = vpop.xlane.xlu0 %2524
        %v2526 = vrot.slane %v2525, 4
        %v2527 = vadd.f32 %v2525, %v2526
        %v2528 = vrot.slane %v2527, 2
        %v2529 = vadd.f32 %v2527, %v2528
        %v2530 = vrot.slane %v2529, 1
        %v2531 = vadd.f32 %v2529, %v2530
        %s2532 = vtos %v2531
        %2537 = vrot.lane.b32.xlu0 %v2490, 32
        %v2538 = vpop.permute.xlu0 %2537
        %2539 = vrot.lane.b32.xlu0 %v2492, 32
        %v2540 = vpop.permute.xlu0 %2539
        %2541 = vrot.lane.b32.xlu0 %v2494, 32
        %v2542 = vpop.permute.xlu0 %2541
        %2543 = vrot.lane.b32.xlu0 %v2496, 32
        %v2544 = vpop.permute.xlu0 %2543
        %v2549 = vsel %vm2141, %v2538, 0.0
        %v2550 = vsel %vm2141, %v2540, 0.0
        %v2551 = vadd.f32 %v2549, %v2550
        %v2552 = vsel %vm2141, %v2542, 0.0
        %v2553 = vadd.f32 %v2551, %v2552
        %v2554 = vsel %vm2145, %v2544, 0.0
        %v2555 = vadd.f32 %v2553, %v2554
        %2556 = vadd.xlane.f32.xlu0 %v2555
        %v2557 = vpop.xlane.xlu0 %2556
        %v2558 = vrot.slane %v2557, 4
        %v2559 = vadd.f32 %v2557, %v2558
        %v2560 = vrot.slane %v2559, 2
        %v2561 = vadd.f32 %v2559, %v2560
        %v2562 = vrot.slane %v2561, 1
        %v2563 = vadd.f32 %v2561, %v2562
        %s2564 = vtos %v2563
        %v2565 = vstv %s2564
        %v2566 = vrcp.pop %v2565
        %v2567 = vmul.f32 %v2565, %v2566
        %v2568 = vsub.f32 1.0, %v2567
        %v2569 = vmul.f32 %v2566, %v2568
        %v2570 = vadd.f32 %v2566, %v2569
        %vm2571 = vweird.f32 %v2565
        %vm2572 = vweird.f32 %v2566
        %vm2573 = vmor %vm2571, %vm2572
        %v2574 = vsel %vm2573, %v2566, %v2570
        %v2575 = vand.u32 2147483647, %v2565
        %vm2576 = vcmp.eq.f32.partialorder %v2575, 8.507059e+37
        %v2577 = vand.u32 %v2565, 2147483648
        %v2578 = vor.u32 1.1754944e-38, %v2577
        %v2579 = vsel %vm2576, %v2578, %v2574
        %s2580 = vtos %v2579
        %s2581 = smul.f32 %s2532, %s2580
        %vm2582 = vcmp.eq.s32.totalorder %v2136, 3
        %v2583 = vstv %s2581
        %v2584 = vsel %vm2582, %v2583, %v2465
        %v2585 = vmul.f32 %v2128, 10.0
        %v2586 = vmul.f32 %v2130, 10.0
        %v2587 = vmul.f32 %v2132, 10.0
        %v2588 = vmul.f32 %v2134, 10.0
        %v2589 = vsel %vm2141, %v2585, -inf
        %v2590 = vsel %vm2141, %v2586, -inf
        %v2591 = vsel %vm2141, %v2587, -inf
        %v2592 = vsel %vm2145, %v2588, -inf
        %v2593 = vmax.f32 %v2589, %v2590
        %v2594 = vmax.f32 %v2591, %v2592
        %v2595 = vmax.f32 %v2593, %v2594
        %2596 = vmax.xlane.f32.xlu0 %v2595
        %v2597 = vpop.xlane.xlu0 %2596
        %v2598 = vrot.slane %v2597, 4
        %v2599 = vmax.f32 %v2597, %v2598
        %v2600 = vrot.slane %v2599, 2
        %v2601 = vmax.f32 %v2599, %v2600
        %v2602 = vrot.slane %v2601, 1
        %v2603 = vmax.f32 %v2601, %v2602
        %s2604 = vtos %v2603
        %v2605 = vstv %s2604
        %v2606 = vsub.f32 %v2585, %v2605
        %v2607 = vsub.f32 %v2586, %v2605
        %v2608 = vsub.f32 %v2587, %v2605
        %v2609 = vsub.f32 %v2588, %v2605
        %v2610 = vmul.f32 %v2606, 1.442695
        %v2611 = vpow.pop %v2610
        %v2612 = vmul.f32 %v2607, 1.442695
        %v2613 = vpow.pop %v2612
        %v2614 = vmul.f32 %v2608, 1.442695
        %v2615 = vpow.pop %v2614
        %v2616 = vmul.f32 %v2609, 1.442695
        %v2617 = vpow.pop %v2616
        %v2618 = vmul.f32 %v2611, %v2128
        %v2619 = vmul.f32 %v2613, %v2130
        %v2620 = vmul.f32 %v2615, %v2132
        %v2621 = vmul.f32 %v2617, %v2134
        %v2622 = vsel %vm2141, %v2618, 0.0
        %v2623 = vsel %vm2141, %v2619, 0.0
        %v2624 = vadd.f32 %v2622, %v2623
        %v2625 = vsel %vm2141, %v2620, 0.0
        %v2626 = vadd.f32 %v2624, %v2625
        %v2627 = vsel %vm2145, %v2621, 0.0
        %v2628 = vadd.f32 %v2626, %v2627
        %2629 = vadd.xlane.f32.xlu0 %v2628
        %v2630 = vpop.xlane.xlu0 %2629
        %v2631 = vrot.slane %v2630, 4
        %v2632 = vadd.f32 %v2630, %v2631
        %v2633 = vrot.slane %v2632, 2
        %v2634 = vadd.f32 %v2632, %v2633
        %v2635 = vrot.slane %v2634, 1
        %v2636 = vadd.f32 %v2634, %v2635
        %s2637 = vtos %v2636
        %v2638 = vsel %vm2141, %v2611, 0.0
        %v2639 = vsel %vm2141, %v2613, 0.0
        %v2640 = vadd.f32 %v2638, %v2639
        %v2641 = vsel %vm2141, %v2615, 0.0
        %v2642 = vadd.f32 %v2640, %v2641
        %v2643 = vsel %vm2145, %v2617, 0.0
        %v2644 = vadd.f32 %v2642, %v2643
        %2645 = vadd.xlane.f32.xlu0 %v2644
        %v2646 = vpop.xlane.xlu0 %2645
        %v2647 = vrot.slane %v2646, 4
        %v2648 = vadd.f32 %v2646, %v2647
        %v2649 = vrot.slane %v2648, 2
        %v2650 = vadd.f32 %v2648, %v2649
        %v2651 = vrot.slane %v2650, 1
        %v2652 = vadd.f32 %v2650, %v2651
        %s2653 = vtos %v2652
        %v2654 = vstv %s2653
        %v2655 = vrcp.pop %v2654
        %v2656 = vmul.f32 %v2654, %v2655
        %v2657 = vsub.f32 1.0, %v2656
        %v2658 = vmul.f32 %v2655, %v2657
        %v2659 = vadd.f32 %v2655, %v2658
        %vm2660 = vweird.f32 %v2654
        %vm2661 = vweird.f32 %v2655
        %vm2662 = vmor %vm2660, %vm2661
        %v2663 = vsel %vm2662, %v2655, %v2659
        %v2664 = vand.u32 2147483647, %v2654
        %vm2665 = vcmp.eq.f32.partialorder %v2664, 8.507059e+37
        %v2666 = vand.u32 %v2654, 2147483648
        %v2667 = vor.u32 1.1754944e-38, %v2666
        %v2668 = vsel %vm2665, %v2667, %v2663
        %s2669 = vtos %v2668
        %s2670 = smul.f32 %s2637, %s2669
        %vm2671 = vcmp.eq.s32.totalorder %v2136, 4
        %v2672 = vstv %s2670
        %v2673 = vsel %vm2671, %v2672, %v2584
        %v2674 = vsel %vm2228, %v2585, -inf
        %v2675 = vsel %vm2228, %v2586, -inf
        %v2676 = vsel %vm2228, %v2587, -inf
        %v2677 = vsel %vm2232, %v2588, -inf
        %v2678 = vmax.f32 %v2674, %v2675
        %v2679 = vmax.f32 %v2676, %v2677
        %v2680 = vmax.f32 %v2678, %v2679
        %2681 = vmax.xlane.f32.xlu0 %v2680
        %v2682 = vpop.xlane.xlu0 %2681
        %v2683 = vrot.slane %v2682, 4
        %v2684 = vmax.f32 %v2682, %v2683
        %v2685 = vrot.slane %v2684, 2
        %v2686 = vmax.f32 %v2684, %v2685
        %v2687 = vrot.slane %v2686, 1
        %v2688 = vmax.f32 %v2686, %v2687
        %s2689 = vtos %v2688
        %v2690 = vstv %s2689
        %v2691 = vsub.f32 %v2585, %v2690
        %v2692 = vsub.f32 %v2586, %v2690
        %v2693 = vsub.f32 %v2587, %v2690
        %v2694 = vsub.f32 %v2588, %v2690
        %v2695 = vmul.f32 %v2691, 1.442695
        %v2696 = vpow.pop %v2695
        %v2697 = vmul.f32 %v2692, 1.442695
        %v2698 = vpow.pop %v2697
        %v2699 = vmul.f32 %v2693, 1.442695
        %v2700 = vpow.pop %v2699
        %v2701 = vmul.f32 %v2694, 1.442695
        %v2702 = vpow.pop %v2701
        %v2703 = vmul.f32 %v2696, %v2128
        %v2704 = vmul.f32 %v2698, %v2130
        %v2705 = vmul.f32 %v2700, %v2132
        %v2706 = vmul.f32 %v2702, %v2134
        %2711 = vrot.lane.b32.xlu0 %v2703, 96
        %v2712 = vpop.permute.xlu0 %2711
        %2713 = vrot.lane.b32.xlu0 %v2704, 96
        %v2714 = vpop.permute.xlu0 %2713
        %2715 = vrot.lane.b32.xlu0 %v2705, 96
        %v2716 = vpop.permute.xlu0 %2715
        %2717 = vrot.lane.b32.xlu0 %v2706, 96
        %v2718 = vpop.permute.xlu0 %2717
        %v2723 = vsel %vm2141, %v2712, 0.0
        %v2724 = vsel %vm2141, %v2714, 0.0
        %v2725 = vadd.f32 %v2723, %v2724
        %v2726 = vsel %vm2141, %v2716, 0.0
        %v2727 = vadd.f32 %v2725, %v2726
        %v2728 = vsel %vm2145, %v2718, 0.0
        %v2729 = vadd.f32 %v2727, %v2728
        %2730 = vadd.xlane.f32.xlu0 %v2729
        %v2731 = vpop.xlane.xlu0 %2730
        %v2732 = vrot.slane %v2731, 4
        %v2733 = vadd.f32 %v2731, %v2732
        %v2734 = vrot.slane %v2733, 2
        %v2735 = vadd.f32 %v2733, %v2734
        %v2736 = vrot.slane %v2735, 1
        %v2737 = vadd.f32 %v2735, %v2736
        %s2738 = vtos %v2737
        %2743 = vrot.lane.b32.xlu0 %v2696, 96
        %v2744 = vpop.permute.xlu0 %2743
        %2745 = vrot.lane.b32.xlu0 %v2698, 96
        %v2746 = vpop.permute.xlu0 %2745
        %2747 = vrot.lane.b32.xlu0 %v2700, 96
        %v2748 = vpop.permute.xlu0 %2747
        %2749 = vrot.lane.b32.xlu0 %v2702, 96
        %v2750 = vpop.permute.xlu0 %2749
        %v2755 = vsel %vm2141, %v2744, 0.0
        %v2756 = vsel %vm2141, %v2746, 0.0
        %v2757 = vadd.f32 %v2755, %v2756
        %v2758 = vsel %vm2141, %v2748, 0.0
        %v2759 = vadd.f32 %v2757, %v2758
        %v2760 = vsel %vm2145, %v2750, 0.0
        %v2761 = vadd.f32 %v2759, %v2760
        %2762 = vadd.xlane.f32.xlu0 %v2761
        %v2763 = vpop.xlane.xlu0 %2762
        %v2764 = vrot.slane %v2763, 4
        %v2765 = vadd.f32 %v2763, %v2764
        %v2766 = vrot.slane %v2765, 2
        %v2767 = vadd.f32 %v2765, %v2766
        %v2768 = vrot.slane %v2767, 1
        %v2769 = vadd.f32 %v2767, %v2768
        %s2770 = vtos %v2769
        %v2771 = vstv %s2770
        %v2772 = vrcp.pop %v2771
        %v2773 = vmul.f32 %v2771, %v2772
        %v2774 = vsub.f32 1.0, %v2773
        %v2775 = vmul.f32 %v2772, %v2774
        %v2776 = vadd.f32 %v2772, %v2775
        %vm2777 = vweird.f32 %v2771
        %vm2778 = vweird.f32 %v2772
        %vm2779 = vmor %vm2777, %vm2778
        %v2780 = vsel %vm2779, %v2772, %v2776
        %v2781 = vand.u32 2147483647, %v2771
        %vm2782 = vcmp.eq.f32.partialorder %v2781, 8.507059e+37
        %v2783 = vand.u32 %v2771, 2147483648
        %v2784 = vor.u32 1.1754944e-38, %v2783
        %v2785 = vsel %vm2782, %v2784, %v2780
        %s2786 = vtos %v2785
        %s2787 = smul.f32 %s2738, %s2786
        %vm2788 = vcmp.eq.s32.totalorder %v2136, 5
        %v2789 = vstv %s2787
        %v2790 = vsel %vm2788, %v2789, %v2673
        %v2791 = vsel %vm2347, %v2585, -inf
        %v2792 = vsel %vm2347, %v2586, -inf
        %v2793 = vsel %vm2347, %v2587, -inf
        %v2794 = vsel %vm2351, %v2588, -inf
        %v2795 = vmax.f32 %v2791, %v2792
        %v2796 = vmax.f32 %v2793, %v2794
        %v2797 = vmax.f32 %v2795, %v2796
        %2798 = vmax.xlane.f32.xlu0 %v2797
        %v2799 = vpop.xlane.xlu0 %2798
        %v2800 = vrot.slane %v2799, 4
        %v2801 = vmax.f32 %v2799, %v2800
        %v2802 = vrot.slane %v2801, 2
        %v2803 = vmax.f32 %v2801, %v2802
        %v2804 = vrot.slane %v2803, 1
        %v2805 = vmax.f32 %v2803, %v2804
        %s2806 = vtos %v2805
        %v2807 = vstv %s2806
        %v2808 = vsub.f32 %v2585, %v2807
        %v2809 = vsub.f32 %v2586, %v2807
        %v2810 = vsub.f32 %v2587, %v2807
        %v2811 = vsub.f32 %v2588, %v2807
        %v2812 = vmul.f32 %v2808, 1.442695
        %v2813 = vpow.pop %v2812
        %v2814 = vmul.f32 %v2809, 1.442695
        %v2815 = vpow.pop %v2814
        %v2816 = vmul.f32 %v2810, 1.442695
        %v2817 = vpow.pop %v2816
        %v2818 = vmul.f32 %v2811, 1.442695
        %v2819 = vpow.pop %v2818
        %v2820 = vmul.f32 %v2813, %v2128
        %v2821 = vmul.f32 %v2815, %v2130
        %v2822 = vmul.f32 %v2817, %v2132
        %v2823 = vmul.f32 %v2819, %v2134
        %2828 = vrot.lane.b32.xlu0 %v2820, 64
        %v2829 = vpop.permute.xlu0 %2828
        %2830 = vrot.lane.b32.xlu0 %v2821, 64
        %v2831 = vpop.permute.xlu0 %2830
        %2832 = vrot.lane.b32.xlu0 %v2822, 64
        %v2833 = vpop.permute.xlu0 %2832
        %2834 = vrot.lane.b32.xlu0 %v2823, 64
        %v2835 = vpop.permute.xlu0 %2834
        %v2840 = vsel %vm2141, %v2829, 0.0
        %v2841 = vsel %vm2141, %v2831, 0.0
        %v2842 = vadd.f32 %v2840, %v2841
        %v2843 = vsel %vm2141, %v2833, 0.0
        %v2844 = vadd.f32 %v2842, %v2843
        %v2845 = vsel %vm2145, %v2835, 0.0
        %v2846 = vadd.f32 %v2844, %v2845
        %2847 = vadd.xlane.f32.xlu0 %v2846
        %v2848 = vpop.xlane.xlu0 %2847
        %v2849 = vrot.slane %v2848, 4
        %v2850 = vadd.f32 %v2848, %v2849
        %v2851 = vrot.slane %v2850, 2
        %v2852 = vadd.f32 %v2850, %v2851
        %v2853 = vrot.slane %v2852, 1
        %v2854 = vadd.f32 %v2852, %v2853
        %s2855 = vtos %v2854
        %2860 = vrot.lane.b32.xlu0 %v2813, 64
        %v2861 = vpop.permute.xlu0 %2860
        %2862 = vrot.lane.b32.xlu0 %v2815, 64
        %v2863 = vpop.permute.xlu0 %2862
        %2864 = vrot.lane.b32.xlu0 %v2817, 64
        %v2865 = vpop.permute.xlu0 %2864
        %2866 = vrot.lane.b32.xlu0 %v2819, 64
        %v2867 = vpop.permute.xlu0 %2866
        %v2872 = vsel %vm2141, %v2861, 0.0
        %v2873 = vsel %vm2141, %v2863, 0.0
        %v2874 = vadd.f32 %v2872, %v2873
        %v2875 = vsel %vm2141, %v2865, 0.0
        %v2876 = vadd.f32 %v2874, %v2875
        %v2877 = vsel %vm2145, %v2867, 0.0
        %v2878 = vadd.f32 %v2876, %v2877
        %2879 = vadd.xlane.f32.xlu0 %v2878
        %v2880 = vpop.xlane.xlu0 %2879
        %v2881 = vrot.slane %v2880, 4
        %v2882 = vadd.f32 %v2880, %v2881
        %v2883 = vrot.slane %v2882, 2
        %v2884 = vadd.f32 %v2882, %v2883
        %v2885 = vrot.slane %v2884, 1
        %v2886 = vadd.f32 %v2884, %v2885
        %s2887 = vtos %v2886
        %v2888 = vstv %s2887
        %v2889 = vrcp.pop %v2888
        %v2890 = vmul.f32 %v2888, %v2889
        %v2891 = vsub.f32 1.0, %v2890
        %v2892 = vmul.f32 %v2889, %v2891
        %v2893 = vadd.f32 %v2889, %v2892
        %vm2894 = vweird.f32 %v2888
        %vm2895 = vweird.f32 %v2889
        %vm2896 = vmor %vm2894, %vm2895
        %v2897 = vsel %vm2896, %v2889, %v2893
        %v2898 = vand.u32 2147483647, %v2888
        %vm2899 = vcmp.eq.f32.partialorder %v2898, 8.507059e+37
        %v2900 = vand.u32 %v2888, 2147483648
        %v2901 = vor.u32 1.1754944e-38, %v2900
        %v2902 = vsel %vm2899, %v2901, %v2897
        %s2903 = vtos %v2902
        %s2904 = smul.f32 %s2855, %s2903
        %vm2905 = vcmp.eq.s32.totalorder %v2136, 6
        %v2906 = vstv %s2904
        %v2907 = vsel %vm2905, %v2906, %v2790
        %v2908 = vsel %vm2466, %v2585, -inf
        %v2909 = vsel %vm2466, %v2586, -inf
        %v2910 = vsel %vm2466, %v2587, -inf
        %v2911 = vsel %vm2470, %v2588, -inf
        %v2912 = vmax.f32 %v2908, %v2909
        %v2913 = vmax.f32 %v2910, %v2911
        %v2914 = vmax.f32 %v2912, %v2913
        %2915 = vmax.xlane.f32.xlu0 %v2914
        %v2916 = vpop.xlane.xlu0 %2915
        %v2917 = vrot.slane %v2916, 4
        %v2918 = vmax.f32 %v2916, %v2917
        %v2919 = vrot.slane %v2918, 2
        %v2920 = vmax.f32 %v2918, %v2919
        %v2921 = vrot.slane %v2920, 1
        %v2922 = vmax.f32 %v2920, %v2921
        %s2923 = vtos %v2922
        %v2924 = vstv %s2923
        %v2925 = vsub.f32 %v2585, %v2924
        %v2926 = vsub.f32 %v2586, %v2924
        %v2927 = vsub.f32 %v2587, %v2924
        %v2928 = vsub.f32 %v2588, %v2924
        %v2929 = vmul.f32 %v2925, 1.442695
        %v2930 = vpow.pop %v2929
        %v2931 = vmul.f32 %v2926, 1.442695
        %v2932 = vpow.pop %v2931
        %v2933 = vmul.f32 %v2927, 1.442695
        %v2934 = vpow.pop %v2933
        %v2935 = vmul.f32 %v2928, 1.442695
        %v2936 = vpow.pop %v2935
        %v2937 = vmul.f32 %v2930, %v2128
        %v2938 = vmul.f32 %v2932, %v2130
        %v2939 = vmul.f32 %v2934, %v2132
        %v2940 = vmul.f32 %v2936, %v2134
        %2945 = vrot.lane.b32.xlu0 %v2937, 32
        %v2946 = vpop.permute.xlu0 %2945
        %2947 = vrot.lane.b32.xlu0 %v2938, 32
        %v2948 = vpop.permute.xlu0 %2947
        %2949 = vrot.lane.b32.xlu0 %v2939, 32
        %v2950 = vpop.permute.xlu0 %2949
        %2951 = vrot.lane.b32.xlu0 %v2940, 32
        %v2952 = vpop.permute.xlu0 %2951
        %v2957 = vsel %vm2141, %v2946, 0.0
        %v2958 = vsel %vm2141, %v2948, 0.0
        %v2959 = vadd.f32 %v2957, %v2958
        %v2960 = vsel %vm2141, %v2950, 0.0
        %v2961 = vadd.f32 %v2959, %v2960
        %v2962 = vsel %vm2145, %v2952, 0.0
        %v2963 = vadd.f32 %v2961, %v2962
        %2964 = vadd.xlane.f32.xlu0 %v2963
        %v2965 = vpop.xlane.xlu0 %2964
        %v2966 = vrot.slane %v2965, 4
        %v2967 = vadd.f32 %v2965, %v2966
        %v2968 = vrot.slane %v2967, 2
        %v2969 = vadd.f32 %v2967, %v2968
        %v2970 = vrot.slane %v2969, 1
        %v2971 = vadd.f32 %v2969, %v2970
        %s2972 = vtos %v2971
        %2977 = vrot.lane.b32.xlu0 %v2930, 32
        %v2978 = vpop.permute.xlu0 %2977
        %2979 = vrot.lane.b32.xlu0 %v2932, 32
        %v2980 = vpop.permute.xlu0 %2979
        %2981 = vrot.lane.b32.xlu0 %v2934, 32
        %v2982 = vpop.permute.xlu0 %2981
        %2983 = vrot.lane.b32.xlu0 %v2936, 32
        %v2984 = vpop.permute.xlu0 %2983
        %v2989 = vsel %vm2141, %v2978, 0.0
        %v2990 = vsel %vm2141, %v2980, 0.0
        %v2991 = vadd.f32 %v2989, %v2990
        %v2992 = vsel %vm2141, %v2982, 0.0
        %v2993 = vadd.f32 %v2991, %v2992
        %v2994 = vsel %vm2145, %v2984, 0.0
        %v2995 = vadd.f32 %v2993, %v2994
        %2996 = vadd.xlane.f32.xlu0 %v2995
        %v2997 = vpop.xlane.xlu0 %2996
        %v2998 = vrot.slane %v2997, 4
        %v2999 = vadd.f32 %v2997, %v2998
        %v3000 = vrot.slane %v2999, 2
        %v3001 = vadd.f32 %v2999, %v3000
        %v3002 = vrot.slane %v3001, 1
        %v3003 = vadd.f32 %v3001, %v3002
        %s3004 = vtos %v3003
        %v3005 = vstv %s3004
        %v3006 = vrcp.pop %v3005
        %v3007 = vmul.f32 %v3005, %v3006
        %v3008 = vsub.f32 1.0, %v3007
        %v3009 = vmul.f32 %v3006, %v3008
        %v3010 = vadd.f32 %v3006, %v3009
        %vm3011 = vweird.f32 %v3005
        %vm3012 = vweird.f32 %v3006
        %vm3013 = vmor %vm3011, %vm3012
        %v3014 = vsel %vm3013, %v3006, %v3010
        %v3015 = vand.u32 2147483647, %v3005
        %vm3016 = vcmp.eq.f32.partialorder %v3015, 8.507059e+37
        %v3017 = vand.u32 %v3005, 2147483648
        %v3018 = vor.u32 1.1754944e-38, %v3017
        %v3019 = vsel %vm3016, %v3018, %v3014
        %s3020 = vtos %v3019
        %s3021 = smul.f32 %s2972, %s3020
        %vm3022 = vcmp.eq.s32.totalorder %v2136, 7
        %v3023 = vstv %s3021
        %v3024 = vsel %vm3022, %v3023, %v2907
        %vm3025 = vcmask 57344
        %3026 = vst.msk [vmem:[%s180] sm:$0x1] %vm3025, %v3024
        %p3027 = scmp.lt.s32.totalorder %s15, 1
        %s3028 = scalar_select %p3027, %s15, 1
        %s3029 = scalar_lea.vmem %s3, %s3028
        // Predicated region
        $region37: #{geneo_forward.1} parent=31 // pred_check
          %p3030 = pneg %p101
        $region38: #{geneo_forward.1} parent=31 // pred_check_branch
          %3032 = sbr.rel (%p3030) target = $region40
        $region39: #{geneo_forward.1} parent=31 // pred_region
          _
        $region40: #{geneo_forward.1} parent=31 // pred_fallthru
          _
      $region32: #{geneo_forward.1} parent=5 // pred_fallthru
        _
      %p3033 = scmp.le.s32.totalorder 2, %s10
      // Predicated region
      $region41: #{geneo_forward.1} parent=5 // pred_check
        %p3034 = pneg %p3033
      $region42: #{geneo_forward.1} parent=5 // pred_check_branch
        %3036 = sbr.rel (%p3034) target = $region44
      $region43: #{geneo_forward.1} parent=5 // pred_region
        %s3037 = ssub.s32 %s10, 2
        // Predicated region
        $region45: #{geneo_forward.1} parent=43 // pred_check
          %p3038 = pneg %p107
        $region46: #{geneo_forward.1} parent=43 // pred_check_branch
          %3040 = sbr.rel (%p3038) target = $region48
        $region47: #{geneo_forward.1} parent=43 // pred_region
          %p3041 = scmp.lt.s32.totalorder %s16, 1
          %s3042 = scalar_select %p3041, %s16, 1
          %s3043 = scalar_lea.vmem %s3, %s3042
        $region48: #{geneo_forward.1} parent=43 // pred_fallthru
          _
      $region44: #{geneo_forward.1} parent=5 // pred_fallthru
        _
    $region6: #{geneo_forward.1} parent=1 // loop_footer
      %s14 = sadd.s32 1, %s10
    $region7: #{geneo_forward.1} parent=1 // loop_footer_branch
      %9 = sbr.rel target = $region3
    $region8: #{geneo_forward.1} parent=1 // loop_exit
      _
    %3044 = vsyncpa [#allocation4], 1
    %s3045 = scalar_lea.sflag [#allocation4], 1
    %3046 = vsyncpa %s3045, 1

</llo_original>
